<compile_context>
chip_gen: v5e
topology: v5e:2x2
jax: 0.10.0
libtpu: 0.0.40
codegen_flags: <defaults>
</compile_context>

<pallas_src>
import math
from functools import partial

import jax
import jax.numpy as jnp
from jax.experimental import pallas as pl
from jax.experimental.pallas import tpu as pltpu

# Set to jnp.bfloat16 on v6e/v7x to feed the MXU its fast 2x256^2 path (the
# accumulation stays f32 via preferred_element_type). Kept f32 by default to
# match the PyTorch module's float32 forward numerics.
MXU_INPUT_DTYPE = jnp.float32

# Tile targets (f32). At the toy test sizes the dims are smaller than the
# targets so a single full-dim block is used; at realistic sizes
# (d_model=512, d_ffn>=512, B*L in the tens of thousands) these keep
# 2 x (tm*tk + tk*tn + tm*tn) * 4B well under v7x's 64 MiB physical VMEM
# while still being MXU-friendly (multiples of 128/256).
MM_TM, MM_TN, MM_TK = 256, 256, 512
LN_BLOCK_ROWS = 512
VMEM_LIMIT_BYTES = 48 * 1024 * 1024


def _tile(dim, target):
    """Use `target` if it evenly divides `dim`, else fall back to the full dim."""
    return target if dim % target == 0 else dim


# --------------------------- exact GELU (in-kernel) --------------------------

_SQRT_HALF = 0.7071067811865476


def _erf_f32(x):
    # Abramowitz & Stegun 7.1.26 rational approximation (max abs err ~1.5e-7,
    # i.e. float32-level accurate), built only from ops guaranteed to lower in
    # Mosaic (exp / where / abs / mul / add / div).
    p = 0.3275911
    a1, a2, a3, a4, a5 = 0.254829592, -0.284496736, 1.421413741, -1.453152027, 1.061405429
    sgn = jnp.where(x >= 0.0, 1.0, -1.0)
    z = jnp.abs(x)
    t = 1.0 / (1.0 + p * z)
    poly = ((((a5 * t + a4) * t + a3) * t + a2) * t + a1) * t
    return sgn * (1.0 - poly * jnp.exp(-z * z))


def _gelu_exact(x):
    # PyTorch F.gelu default (erf formulation).
    return 0.5 * x * (1.0 + _erf_f32(x * _SQRT_HALF))


# ------------------------------- tiled matmul --------------------------------

def _matmul_kernel(*refs, has_bias, activation):
    if has_bias:
        x_ref, w_ref, b_ref, o_ref, acc_ref = refs
    else:
        x_ref, w_ref, o_ref, acc_ref = refs
        b_ref = None

    @pl.when(pl.program_id(2) == 0)
    def _():
        acc_ref[...] = jnp.zeros_like(acc_ref)

    acc_ref[...] += jnp.dot(
        x_ref[...].astype(MXU_INPUT_DTYPE),
        w_ref[...].astype(MXU_INPUT_DTYPE),
        preferred_element_type=jnp.float32,
    )

    @pl.when(pl.program_id(2) == pl.num_programs(2) - 1)
    def _():
        y = acc_ref[...]
        if b_ref is not None:
            y = y + b_ref[...]
        if activation == "gelu":
            y = _gelu_exact(y)
        o_ref[...] = y.astype(o_ref.dtype)


def matmul_pallas(x, w, b=None, activation=None):
    """x: (M, K), w: (K, N), optional bias (N,), optional fused 'gelu' epilogue."""
    M, K = x.shape
    N = w.shape[1]
    tm, tn, tk = _tile(M, MM_TM), _tile(N, MM_TN), _tile(K, MM_TK)
    grid = (M // tm, N // tn, K // tk)

    in_specs = [
        pl.BlockSpec((tm, tk), lambda i, j, k: (i, k)),
        pl.BlockSpec((tk, tn), lambda i, j, k: (k, j)),
    ]
    args = [x, w]
    if b is not None:
        in_specs.append(pl.BlockSpec((1, tn), lambda i, j, k: (0, j)))
        args.append(b.reshape(1, N))

    return pl.pallas_call(
        partial(_matmul_kernel, has_bias=b is not None, activation=activation),
        out_shape=jax.ShapeDtypeStruct((M, N), x.dtype),
        grid=grid,
        in_specs=in_specs,
        out_specs=pl.BlockSpec((tm, tn), lambda i, j, k: (i, j)),
        scratch_shapes=[pltpu.VMEM((tm, tn), jnp.float32)],
        compiler_params=pltpu.CompilerParams(
            dimension_semantics=("parallel", "parallel", "arbitrary"),
            vmem_limit_bytes=VMEM_LIMIT_BYTES,
        ),
    )(*args)


def linear3d(x, w, b=None, activation=None):
    B, L, D = x.shape
    y = matmul_pallas(x.reshape(B * L, D), w, b, activation=activation)
    return y.reshape(B, L, w.shape[1])


# --------------------------- (residual +) LayerNorm ---------------------------

def _ln_kernel(*refs, has_residual):
    if has_residual:
        x_ref, r_ref, g_ref, b_ref, o_ref = refs
        x = x_ref[...].astype(jnp.float32) + r_ref[...].astype(jnp.float32)
    else:
        x_ref, g_ref, b_ref, o_ref = refs
        x = x_ref[...].astype(jnp.float32)
    mu = jnp.mean(x, axis=-1, keepdims=True)
    xc = x - mu
    var = jnp.mean(xc * xc, axis=-1, keepdims=True)
    inv = jax.lax.rsqrt(var + 1e-5)
    o_ref[...] = (xc * inv * g_ref[...] + b_ref[...]).astype(o_ref.dtype)


def layernorm_pallas(x, g, b, residual=None):
    """LayerNorm(x + residual) with the residual add fused into the kernel."""
    B, L, D = x.shape
    M = B * L
    tr = _tile(M, LN_BLOCK_ROWS)

    args = [x.reshape(M, D)]
    in_specs = [pl.BlockSpec((tr, D), lambda i: (i, 0))]
    if residual is not None:
        args.append(residual.reshape(M, D))
        in_specs.append(pl.BlockSpec((tr, D), lambda i: (i, 0)))
    args += [g.reshape(1, D), b.reshape(1, D)]
    in_specs += [pl.BlockSpec((1, D), lambda i: (0, 0)),
                 pl.BlockSpec((1, D), lambda i: (0, 0))]

    out = pl.pallas_call(
        partial(_ln_kernel, has_residual=residual is not None),
        out_shape=jax.ShapeDtypeStruct((M, D), x.dtype),
        grid=(M // tr,),
        in_specs=in_specs,
        out_specs=pl.BlockSpec((tr, D), lambda i: (i, 0)),
        compiler_params=pltpu.CompilerParams(dimension_semantics=("parallel",)),
    )(*args)
    return out.reshape(B, L, D)


# --------------------------------- attention ----------------------------------

def _attention_body(q_all, k_all, v_all, o_ref, *, n_heads, scale, causal):
    """FullAttention: per-head softmax(q k^T / sqrt(E)) v; heads sliced from the
    lane-dense (L, d_model) tiles, output written back head-merged (lane-dense)."""
    Lq, D = q_all.shape
    Lk = k_all.shape[0]
    E = D // n_heads

    if causal:
        row = jax.lax.broadcasted_iota(jnp.int32, (Lq, Lk), 0)
        col = jax.lax.broadcasted_iota(jnp.int32, (Lq, Lk), 1)
        neg = jnp.where(col > row, -jnp.inf, 0.0).astype(jnp.float32)

    outs = []
    for h in range(n_heads):
        sl = slice(h * E, (h + 1) * E)
        q = (q_all[:, sl].astype(jnp.float32) * scale).astype(MXU_INPUT_DTYPE)
        k = k_all[:, sl].astype(MXU_INPUT_DTYPE)
        v = v_all[:, sl].astype(MXU_INPUT_DTYPE)
        # contract last dims directly: no k.T transpose before the MXU
        s = jax.lax.dot_general(q, k, (((1,), (1,)), ((), ())),
                                preferred_element_type=jnp.float32)
        if causal:
            s = s + neg
        m = jnp.max(s, axis=-1, keepdims=True)
        p = jnp.exp(s - m)
        denom = jnp.sum(p, axis=-1, keepdims=True)
        p = p * pl.reciprocal(denom, approx=True)
        outs.append(jnp.dot(p.astype(MXU_INPUT_DTYPE), v,
                            preferred_element_type=jnp.float32))
    o_ref[...] = jnp.concatenate(outs, axis=-1).astype(o_ref.dtype)


def _self_attn_kernel(qkv_ref, o_ref, *, n_heads, scale, causal, d_model):
    q_all = qkv_ref[:, 0:d_model]
    k_all = qkv_ref[:, d_model:2 * d_model]
    v_all = qkv_ref[:, 2 * d_model:3 * d_model]
    _attention_body(q_all, k_all, v_all, o_ref,
                    n_heads=n_heads, scale=scale, causal=causal)


def _cross_attn_kernel(q_ref, kv_ref, o_ref, *, n_heads, scale, d_model):
    q_all = q_ref[...]
    k_all = kv_ref[:, 0:d_model]
    v_all = kv_ref[:, d_model:2 * d_model]
    _attention_body(q_all, k_all, v_all, o_ref,
                    n_heads=n_heads, scale=scale, causal=False)


def self_attention_pallas(qkv, n_heads, causal):
    """qkv: (B, L, 3*d_model) from the fused QKV projection."""
    B, L, D3 = qkv.shape
    D = D3 // 3
    scale = 1.0 / math.sqrt(D // n_heads)
    return pl.pallas_call(
        partial(_self_attn_kernel, n_heads=n_heads, scale=scale,
                causal=causal, d_model=D),
        out_shape=jax.ShapeDtypeStruct((B, L, D), qkv.dtype),
        grid=(B,),
        in_specs=[pl.BlockSpec((None, L, D3), lambda b: (b, 0, 0))],
        out_specs=pl.BlockSpec((None, L, D), lambda b: (b, 0, 0)),
        compiler_params=pltpu.CompilerParams(dimension_semantics=("parallel",)),
    )(qkv)


def cross_attention_pallas(q, kv, n_heads):
    """q: (B, Lq, d_model); kv: (B, Lk, 2*d_model) from the fused K|V projection."""
    B, Lq, D = q.shape
    Lk = kv.shape[1]
    scale = 1.0 / math.sqrt(D // n_heads)
    return pl.pallas_call(
        partial(_cross_attn_kernel, n_heads=n_heads, scale=scale, d_model=D),
        out_shape=jax.ShapeDtypeStruct((B, Lq, D), q.dtype),
        grid=(B,),
        in_specs=[pl.BlockSpec((None, Lq, D), lambda b: (b, 0, 0)),
                  pl.BlockSpec((None, Lk, 2 * D), lambda b: (b, 0, 0))],
        out_specs=pl.BlockSpec((None, Lq, D), lambda b: (b, 0, 0)),
        compiler_params=pltpu.CompilerParams(dimension_semantics=("parallel",)),
    )(q, kv)


# ------------------------------- model pieces ---------------------------------

def sinusoid_table(n, d):
    pos = jnp.arange(n, dtype=jnp.float32)[:, None]
    div = jnp.exp(jnp.arange(0, d, 2, dtype=jnp.float32) * -(math.log(10000.0) / d))
    tab = jnp.zeros((n, d), jnp.float32)
    tab = tab.at[:, 0::2].set(jnp.sin(pos * div))
    tab = tab.at[:, 1::2].set(jnp.cos(pos * div))
    return tab


def data_embedding(x, x_mark, emb):
    """TokenEmbedding (circular Conv1d k=3, no bias) as im2col + (no-bias) matmul,
    plus positional and fixed temporal embeddings."""
    B, L, C = x.shape
    d_model = emb["w_token"].shape[1]
    # circular pad by 1 on each side along time, then im2col (window of 3)
    x_pad = jnp.concatenate([x[:, -1:], x, x[:, :1]], axis=1)                       # (B, L+2, C)
    win = jnp.stack([x_pad[:, 0:L], x_pad[:, 1:L + 1], x_pad[:, 2:L + 2]], axis=2)  # (B, L, 3, C)
    tok = matmul_pallas(win.reshape(B * L, 3 * C), emb["w_token"]).reshape(B, L, d_model)
    pe = sinusoid_table(L, d_model)                                                 # positional embedding
    mark = x_mark.astype(jnp.int32)
    # TODO(synk): temporal-embedding lookups stay as XLA gathers (jnp.take); no Pallas gather.
    # TemporalEmbedding(embed='fixed', freq='h'): month=col0, day=col1, weekday=col2, hour=col3
    temp = (jnp.take(emb["month_tab"], mark[:, :, 0], axis=0)
            + jnp.take(emb["day_tab"], mark[:, :, 1], axis=0)
            + jnp.take(emb["weekday_tab"], mark[:, :, 2], axis=0)
            + jnp.take(emb["hour_tab"], mark[:, :, 3], axis=0))
    return tok + pe[None] + temp


def _self_attn_block(x, p, n_heads, causal):
    qkv = linear3d(x, p["w_qkv"], p["b_qkv"])          # fused Q|K|V projection
    a = self_attention_pallas(qkv, n_heads, causal)
    return linear3d(a, p["wo"], p["bo"])


def _cross_attn_block(x, mem, p, n_heads):
    q = linear3d(x, p["wq"], p["bq"])
    kv = linear3d(mem, p["w_kv"], p["b_kv"])           # fused K|V projection
    a = cross_attention_pallas(q, kv, n_heads)
    return linear3d(a, p["wo"], p["bo"])


def encoder_layer_fwd(x, p, n_heads):
    x = layernorm_pallas(x, p["ln1_g"], p["ln1_b"],
                         residual=_self_attn_block(x, p["self"], n_heads, False))
    y = linear3d(x, p["w1"], p["b1"], activation="gelu")   # bias+GELU fused epilogue
    y = linear3d(y, p["w2"], p["b2"])
    return layernorm_pallas(x, p["ln2_g"], p["ln2_b"], residual=y)


def decoder_layer_fwd(x, mem, p, n_heads):
    x = layernorm_pallas(x, p["ln1_g"], p["ln1_b"],
                         residual=_self_attn_block(x, p["self"], n_heads, True))
    x = layernorm_pallas(x, p["ln2_g"], p["ln2_b"],
                         residual=_cross_attn_block(x, mem, p["cross"], n_heads))
    y = linear3d(x, p["w1"], p["b1"], activation="gelu")
    y = linear3d(y, p["w2"], p["b2"])
    return layernorm_pallas(x, p["ln3_g"], p["ln3_b"], residual=y)


def transformer_forward(params, x_enc, x_mark_enc, x_dec, x_mark_dec, *, n_heads, pred_len):
    enc = data_embedding(x_enc, x_mark_enc, params["enc_emb"])
    for lp in params["enc_layers"]:
        enc = encoder_layer_fwd(enc, lp, n_heads)
    enc = layernorm_pallas(enc, params["enc_norm_g"], params["enc_norm_b"])

    dec = data_embedding(x_dec, x_mark_dec, params["dec_emb"])
    for lp in params["dec_layers"]:
        dec = decoder_layer_fwd(dec, enc, lp, n_heads)
    dec = layernorm_pallas(dec, params["dec_norm_g"], params["dec_norm_b"])

    out = linear3d(dec, params["proj_w"], params["proj_b"])
    return out[:, -pred_len:, :]


# ------------------------------ parameter init --------------------------------

def init_params(key, enc_in, dec_in, c_out, d_model, n_heads, d_ffn, e_layers, d_layers):
    keys = iter(jax.random.split(key, 1024))

    def lin(i, o):
        w = jax.random.normal(next(keys), (i, o), jnp.float32) * 0.02
        return w, jnp.zeros((o,), jnp.float32)

    def self_attn_params():
        # fused QKV == torch q/k/v Linear weights concatenated along the output axis
        w_qkv, b_qkv = lin(d_model, 3 * d_model)
        wo, bo = lin(d_model, d_model)
        return dict(w_qkv=w_qkv, b_qkv=b_qkv, wo=wo, bo=bo)

    def cross_attn_params():
        wq, bq = lin(d_model, d_model)
        w_kv, b_kv = lin(d_model, 2 * d_model)   # fused K|V
        wo, bo = lin(d_model, d_model)
        return dict(wq=wq, bq=bq, w_kv=w_kv, b_kv=b_kv, wo=wo, bo=bo)

    def emb_params(c_in):
        w_token = jax.random.normal(next(keys), (3 * c_in, d_model), jnp.float32) * 0.02
        return dict(w_token=w_token,
                    month_tab=sinusoid_table(13, d_model),
                    day_tab=sinusoid_table(32, d_model),
                    weekday_tab=sinusoid_table(7, d_model),
                    hour_tab=sinusoid_table(24, d_model))

    def enc_layer():
        w1, b1 = lin(d_model, d_ffn)
        w2, b2 = lin(d_ffn, d_model)
        return dict(self=self_attn_params(), w1=w1, b1=b1, w2=w2, b2=b2,
                    ln1_g=jnp.ones((d_model,)), ln1_b=jnp.zeros((d_model,)),
                    ln2_g=jnp.ones((d_model,)), ln2_b=jnp.zeros((d_model,)))

    def dec_layer():
        w1, b1 = lin(d_model, d_ffn)
        w2, b2 = lin(d_ffn, d_model)
        return dict(self=self_attn_params(), cross=cross_attn_params(),
                    w1=w1, b1=b1, w2=w2, b2=b2,
                    ln1_g=jnp.ones((d_model,)), ln1_b=jnp.zeros((d_model,)),
                    ln2_g=jnp.ones((d_model,)), ln2_b=jnp.zeros((d_model,)),
                    ln3_g=jnp.ones((d_model,)), ln3_b=jnp.zeros((d_model,)))

    proj_w, proj_b = lin(d_model, c_out)
    return dict(
        enc_emb=emb_params(enc_in),
        dec_emb=emb_params(dec_in),
        enc_layers=[enc_layer() for _ in range(e_layers)],
        dec_layers=[dec_layer() for _ in range(d_layers)],
        enc_norm_g=jnp.ones((d_model,)), enc_norm_b=jnp.zeros((d_model,)),
        dec_norm_g=jnp.ones((d_model,)), dec_norm_b=jnp.zeros((d_model,)),
        proj_w=proj_w, proj_b=proj_b,
    )


# ----------------------------------- main --------------------------------------

if __name__ == "__main__":
    # small config (module defaults scaled down; d_model/d_ffn kept lane-aligned to 128)
    B = 2
    enc_in = dec_in = c_out = 4
    seq_len, label_len, pred_len = 16, 8, 8
    d_model, n_heads, d_ffn = 128, 8, 128
    e_layers, d_layers = 2, 1
    dec_len = label_len + pred_len

    key = jax.random.PRNGKey(0)
    k_p, k1, k2, k3, k4 = jax.random.split(key, 5)

    params = init_params(k_p, enc_in, dec_in, c_out, d_model, n_heads, d_ffn,
                         e_layers, d_layers)

    x_enc = jax.random.normal(k1, (B, seq_len, enc_in), jnp.float32)
    x_dec = jax.random.normal(k2, (B, dec_len, dec_in), jnp.float32)
    # datetime marks: [month(0..12), day(0..31), weekday(0..6), hour(0..23)]
    ranges = jnp.array([13, 32, 7, 24], jnp.int32)
    x_mark_enc = (jax.random.randint(k3, (B, seq_len, 4), 0, 1000) % ranges).astype(jnp.float32)
    x_mark_dec = (jax.random.randint(k4, (B, dec_len, 4), 0, 1000) % ranges).astype(jnp.float32)

    fwd = jax.jit(partial(transformer_forward, n_heads=n_heads, pred_len=pred_len))
    out = fwd(params, x_enc, x_mark_enc, x_dec, x_mark_dec)
    out = jax.block_until_ready(out)
    assert out.shape == (B, pred_len, c_out), out.shape
    assert bool(jnp.all(jnp.isfinite(out)))
    print("KERNEL_OK")
</pallas_src>

<mosaic_0001>
module attributes {stable_mosaic.version = 11 : i64} {
  func.func @_matmul_kernel(%arg0: i32, %arg1: i32, %arg2: i32, %arg3: memref<32x12xf32, #tpu.memory_space<vmem>>, %arg4: memref<12x128xf32, #tpu.memory_space<vmem>>, %arg5: memref<32x128xf32, #tpu.memory_space<vmem>>, %arg6: memref<32x128xf32, #tpu.memory_space<vmem>>) attributes {dimension_semantics = [#tpu.dimension_semantics<parallel>, #tpu.dimension_semantics<parallel>, #tpu.dimension_semantics<arbitrary>], iteration_bounds = array<i64: 1, 1, 1>, scalar_prefetch = 0 : i64, scratch_operands = 1 : i64, tpu.core_type = #tpu.core_type<tc>, window_params = [{transform_indices = @transform_0, window_bounds = array<i64: 32, 12>}, {transform_indices = @transform_1, window_bounds = array<i64: 12, 128>}, {transform_indices = @transform_2, window_bounds = array<i64: 32, 128>}]} {
    %c0_i32 = arith.constant 0 : i32
    %0 = arith.cmpi eq, %arg2, %c0_i32 : i32
    %1 = arith.extui %0 : i1 to i32
    %c0_i32_0 = arith.constant 0 : i32
    %2 = arith.cmpi ne, %1, %c0_i32_0 : i32
    scf.if %2 {
      %cst_10 = arith.constant 0.000000e+00 : f32
      %12 = vector.broadcast %cst_10 : f32 to vector<32x128xf32>
      %c0_11 = arith.constant 0 : index
      %c0_12 = arith.constant 0 : index
      %13 = vector.load %arg6[%c0_11, %c0_12] : memref<32x128xf32, #tpu.memory_space<vmem>>, vector<32x128xf32>
      tpu.vector_store %arg6[%c0_11, %c0_12], %12 {strides = array<i32>} : memref<32x128xf32, #tpu.memory_space<vmem>>, vector<32x128xf32>,
    } else {
    }
    %c0 = arith.constant 0 : index
    %c0_1 = arith.constant 0 : index
    %3 = vector.load %arg6[%c0, %c0_1] : memref<32x128xf32, #tpu.memory_space<vmem>>, vector<32x128xf32>
    %c0_2 = arith.constant 0 : index
    %c0_3 = arith.constant 0 : index
    %4 = vector.load %arg3[%c0_2, %c0_3] : memref<32x12xf32, #tpu.memory_space<vmem>>, vector<32x12xf32>
    %c0_4 = arith.constant 0 : index
    %c0_5 = arith.constant 0 : index
    %5 = vector.load %arg4[%c0_4, %c0_5] : memref<12x128xf32, #tpu.memory_space<vmem>>, vector<12x128xf32>
    %cst = arith.constant dense<0.000000e+00> : vector<32x128xf32>
    %6 = tpu.matmul %4, %5, %cst {dimension_numbers = #tpu.dot_dimension_numbers<[1], [0], [0], [1], [0, 0, 1, 1], [], []>} : vector<32x12xf32>, vector<12x128xf32>, vector<32x128xf32> -> vector<32x128xf32>
    %7 = arith.addf %3, %6 : vector<32x128xf32>
    %c0_6 = arith.constant 0 : index
    %c0_7 = arith.constant 0 : index
    %8 = vector.load %arg6[%c0_6, %c0_7] : memref<32x128xf32, #tpu.memory_space<vmem>>, vector<32x128xf32>
    tpu.vector_store %arg6[%c0_6, %c0_7], %7 {strides = array<i32>} : memref<32x128xf32, #tpu.memory_space<vmem>>, vector<32x128xf32>,
    %c0_i32_8 = arith.constant 0 : i32
    %9 = arith.cmpi eq, %arg2, %c0_i32_8 : i32
    %10 = arith.extui %9 : i1 to i32
    %c0_i32_9 = arith.constant 0 : i32
    %11 = arith.cmpi ne, %10, %c0_i32_9 : i32
    scf.if %11 {
      %c0_10 = arith.constant 0 : index
      %c0_11 = arith.constant 0 : index
      %12 = vector.load %arg6[%c0_10, %c0_11] : memref<32x128xf32, #tpu.memory_space<vmem>>, vector<32x128xf32>
      %c0_12 = arith.constant 0 : index
      %c0_13 = arith.constant 0 : index
      %13 = vector.load %arg5[%c0_12, %c0_13] : memref<32x128xf32, #tpu.memory_space<vmem>>, vector<32x128xf32>
      tpu.vector_store %arg5[%c0_12, %c0_13], %12 {strides = array<i32>} : memref<32x128xf32, #tpu.memory_space<vmem>>, vector<32x128xf32>,
    } else {
    }
    return
  }
  func.func @transform_0(%arg0: i32, %arg1: i32, %arg2: i32) -> (i32, i32) {
    %c0_i32 = arith.constant 0 : i32
    return %arg0, %arg2 : i32, i32
  }
  func.func @transform_1(%arg0: i32, %arg1: i32, %arg2: i32) -> (i32, i32) {
    %c0_i32 = arith.constant 0 : i32
    return %arg2, %arg1 : i32, i32
  }
  func.func @transform_2(%arg0: i32, %arg1: i32, %arg2: i32) -> (i32, i32) {
    %c0_i32 = arith.constant 0 : i32
    return %arg0, %arg1 : i32, i32
  }
}

module attributes {stable_mosaic.version = 11 : i64} {
  func.func @_matmul_kernel(%arg0: i32, %arg1: i32, %arg2: i32, %arg3: memref<32x128xf32, #tpu.memory_space<vmem>>, %arg4: memref<128x384xf32, #tpu.memory_space<vmem>>, %arg5: memref<1x384xf32, #tpu.memory_space<vmem>>, %arg6: memref<32x384xf32, #tpu.memory_space<vmem>>, %arg7: memref<32x384xf32, #tpu.memory_space<vmem>>) attributes {dimension_semantics = [#tpu.dimension_semantics<parallel>, #tpu.dimension_semantics<parallel>, #tpu.dimension_semantics<arbitrary>], iteration_bounds = array<i64: 1, 1, 1>, scalar_prefetch = 0 : i64, scratch_operands = 1 : i64, tpu.core_type = #tpu.core_type<tc>, window_params = [{transform_indices = @transform_0, window_bounds = array<i64: 32, 128>}, {transform_indices = @transform_1, window_bounds = array<i64: 128, 384>}, {transform_indices = @transform_2, window_bounds = array<i64: 1, 384>}, {transform_indices = @transform_3, window_bounds = array<i64: 32, 384>}]} {
    %c0_i32 = arith.constant 0 : i32
    %0 = arith.cmpi eq, %arg2, %c0_i32 : i32
    %1 = arith.extui %0 : i1 to i32
    %c0_i32_0 = arith.constant 0 : i32
    %2 = arith.cmpi ne, %1, %c0_i32_0 : i32
    scf.if %2 {
      %cst_10 = arith.constant 0.000000e+00 : f32
      %12 = vector.broadcast %cst_10 : f32 to vector<32x384xf32>
      %c0_11 = arith.constant 0 : index
      %c0_12 = arith.constant 0 : index
      %13 = vector.load %arg7[%c0_11, %c0_12] : memref<32x384xf32, #tpu.memory_space<vmem>>, vector<32x384xf32>
      tpu.vector_store %arg7[%c0_11, %c0_12], %12 {strides = array<i32>} : memref<32x384xf32, #tpu.memory_space<vmem>>, vector<32x384xf32>,
    } else {
    }
    %c0 = arith.constant 0 : index
    %c0_1 = arith.constant 0 : index
    %3 = vector.load %arg7[%c0, %c0_1] : memref<32x384xf32, #tpu.memory_space<vmem>>, vector<32x384xf32>
    %c0_2 = arith.constant 0 : index
    %c0_3 = arith.constant 0 : index
    %4 = vector.load %arg3[%c0_2, %c0_3] : memref<32x128xf32, #tpu.memory_space<vmem>>, vector<32x128xf32>
    %c0_4 = arith.constant 0 : index
    %c0_5 = arith.constant 0 : index
    %5 = vector.load %arg4[%c0_4, %c0_5] : memref<128x384xf32, #tpu.memory_space<vmem>>, vector<128x384xf32>
    %cst = arith.constant dense<0.000000e+00> : vector<32x384xf32>
    %6 = tpu.matmul %4, %5, %cst {dimension_numbers = #tpu.dot_dimension_numbers<[1], [0], [0], [1], [0, 0, 1, 1], [], []>} : vector<32x128xf32>, vector<128x384xf32>, vector<32x384xf32> -> vector<32x384xf32>
    %7 = arith.addf %3, %6 : vector<32x384xf32>
    %c0_6 = arith.constant 0 : index
    %c0_7 = arith.constant 0 : index
    %8 = vector.load %arg7[%c0_6, %c0_7] : memref<32x384xf32, #tpu.memory_space<vmem>>, vector<32x384xf32>
    tpu.vector_store %arg7[%c0_6, %c0_7], %7 {strides = array<i32>} : memref<32x384xf32, #tpu.memory_space<vmem>>, vector<32x384xf32>,
    %c0_i32_8 = arith.constant 0 : i32
    %9 = arith.cmpi eq, %arg2, %c0_i32_8 : i32
    %10 = arith.extui %9 : i1 to i32
    %c0_i32_9 = arith.constant 0 : i32
    %11 = arith.cmpi ne, %10, %c0_i32_9 : i32
    scf.if %11 {
      %c0_10 = arith.constant 0 : index
      %c0_11 = arith.constant 0 : index
      %12 = vector.load %arg7[%c0_10, %c0_11] : memref<32x384xf32, #tpu.memory_space<vmem>>, vector<32x384xf32>
      %c0_12 = arith.constant 0 : index
      %c0_13 = arith.constant 0 : index
      %13 = vector.load %arg5[%c0_12, %c0_13] : memref<1x384xf32, #tpu.memory_space<vmem>>, vector<1x384xf32>
      %14 = vector.broadcast %13 : vector<1x384xf32> to vector<32x384xf32>
      %15 = arith.addf %12, %14 : vector<32x384xf32>
      %c0_14 = arith.constant 0 : index
      %c0_15 = arith.constant 0 : index
      %16 = vector.load %arg6[%c0_14, %c0_15] : memref<32x384xf32, #tpu.memory_space<vmem>>, vector<32x384xf32>
      tpu.vector_store %arg6[%c0_14, %c0_15], %15 {strides = array<i32>} : memref<32x384xf32, #tpu.memory_space<vmem>>, vector<32x384xf32>,
    } else {
    }
    return
  }
  func.func @transform_0(%arg0: i32, %arg1: i32, %arg2: i32) -> (i32, i32) {
    %c0_i32 = arith.constant 0 : i32
    return %arg0, %arg2 : i32, i32
  }
  func.func @transform_1(%arg0: i32, %arg1: i32, %arg2: i32) -> (i32, i32) {
    %c0_i32 = arith.constant 0 : i32
    return %arg2, %arg1 : i32, i32
  }
  func.func @transform_2(%arg0: i32, %arg1: i32, %arg2: i32) -> (i32, i32) {
    %c0_i32 = arith.constant 0 : i32
    %c0_i32_0 = arith.constant 0 : i32
    return %c0_i32, %arg1 : i32, i32
  }
  func.func @transform_3(%arg0: i32, %arg1: i32, %arg2: i32) -> (i32, i32) {
    %c0_i32 = arith.constant 0 : i32
    return %arg0, %arg1 : i32, i32
  }
}

module attributes {stable_mosaic.version = 11 : i64} {
  func.func @_self_attn_kernel(%arg0: i32, %arg1: memref<1x16x384xf32, #tpu.memory_space<vmem>>, %arg2: memref<1x16x128xf32, #tpu.memory_space<vmem>>) attributes {dimension_semantics = [#tpu.dimension_semantics<parallel>], iteration_bounds = array<i64: 2>, scalar_prefetch = 0 : i64, scratch_operands = 0 : i64, tpu.core_type = #tpu.core_type<tc>, window_params = [{transform_indices = @transform_0, window_bounds = array<i64: 1, 16, 384>}, {transform_indices = @transform_1, window_bounds = array<i64: 1, 16, 128>}]} {
    %c0 = arith.constant 0 : index
    %c0_0 = arith.constant 0 : index
    %c0_1 = arith.constant 0 : index
    %0 = vector.load %arg1[%c0, %c0_0, %c0_1] : memref<1x16x384xf32, #tpu.memory_space<vmem>>, vector<1x16x128xf32>
    %1 = vector.shape_cast %0 : vector<1x16x128xf32> to vector<16x128xf32>
    %c0_2 = arith.constant 0 : index
    %c0_3 = arith.constant 0 : index
    %c128 = arith.constant 128 : index
    %2 = vector.load %arg1[%c0_2, %c0_3, %c128] : memref<1x16x384xf32, #tpu.memory_space<vmem>>, vector<1x16x128xf32>
    %3 = vector.shape_cast %2 : vector<1x16x128xf32> to vector<16x128xf32>
    %c0_4 = arith.constant 0 : index
    %c0_5 = arith.constant 0 : index
    %c256 = arith.constant 256 : index
    %4 = vector.load %arg1[%c0_4, %c0_5, %c256] : memref<1x16x384xf32, #tpu.memory_space<vmem>>, vector<1x16x128xf32>
    %5 = vector.shape_cast %4 : vector<1x16x128xf32> to vector<16x128xf32>
    %6 = tpu.iota {dimensions = array<i32: 0>} : vector<16x16xi32>
    %7 = tpu.iota {dimensions = array<i32: 1>} : vector<16x16xi32>
    %8 = arith.cmpi sgt, %7, %6 : vector<16x16xi32>
    %cst = arith.constant 0xFF800000 : f32
    %cst_6 = arith.constant 0.000000e+00 : f32
    %9 = vector.broadcast %cst : f32 to vector<16x16xf32>
    %10 = vector.broadcast %cst_6 : f32 to vector<16x16xf32>
    %11 = arith.select %8, %9, %10 : vector<16x16xi1>, vector<16x16xf32>
    %12 = vector.extract_strided_slice %1 {offsets = [0, 0], sizes = [16, 16], strides = [1, 1]} : vector<16x128xf32> to vector<16x16xf32>
    %cst_7 = arith.constant 2.500000e-01 : f32
    %13 = vector.broadcast %cst_7 : f32 to vector<16x16xf32>
    %14 = arith.mulf %12, %13 : vector<16x16xf32>
    %15 = vector.extract_strided_slice %3 {offsets = [0, 0], sizes = [16, 16], strides = [1, 1]} : vector<16x128xf32> to vector<16x16xf32>
    %16 = vector.extract_strided_slice %5 {offsets = [0, 0], sizes = [16, 16], strides = [1, 1]} : vector<16x128xf32> to vector<16x16xf32>
    %cst_8 = arith.constant dense<0.000000e+00> : vector<16x16xf32>
    %17 = tpu.matmul %14, %15, %cst_8 {dimension_numbers = #tpu.dot_dimension_numbers<[1], [1], [0], [0], [0, 0, 1, 0], [], []>} : vector<16x16xf32>, vector<16x16xf32>, vector<16x16xf32> -> vector<16x16xf32>
    %18 = arith.addf %17, %11 : vector<16x16xf32>
    %cst_9 = arith.constant dense<0xFF800000> : vector<16xf32>
    %19 = vector.multi_reduction <maximumf>, %18, %cst_9 [1] : vector<16x16xf32> to vector<16xf32>
    %20 = vector.shape_cast %19 : vector<16xf32> to vector<16x1xf32>
    %21 = vector.broadcast %20 : vector<16x1xf32> to vector<16x16xf32>
    %22 = arith.subf %18, %21 : vector<16x16xf32>
    %23 = math.exp %22 : vector<16x16xf32>
    %cst_10 = arith.constant dense<0.000000e+00> : vector<16xf32>
    %24 = vector.multi_reduction <add>, %23, %cst_10 [1] : vector<16x16xf32> to vector<16xf32>
    %25 = vector.shape_cast %24 : vector<16xf32> to vector<16x1xf32>
    %26 = tpu.reciprocal %25 {approx = true} : vector<16x1xf32> -> vector<16x1xf32>
    %27 = vector.broadcast %26 : vector<16x1xf32> to vector<16x16xf32>
    %28 = arith.mulf %23, %27 : vector<16x16xf32>
    %cst_11 = arith.constant dense<0.000000e+00> : vector<16x16xf32>
    %29 = tpu.matmul %28, %16, %cst_11 {dimension_numbers = #tpu.dot_dimension_numbers<[1], [0], [0], [1], [0, 0, 1, 1], [], []>} : vector<16x16xf32>, vector<16x16xf32>, vector<16x16xf32> -> vector<16x16xf32>
    %30 = vector.extract_strided_slice %1 {offsets = [0, 16], sizes = [16, 16], strides = [1, 1]} : vector<16x128xf32> to vector<16x16xf32>
    %cst_12 = arith.constant 2.500000e-01 : f32
    %31 = vector.broadcast %cst_12 : f32 to vector<16x16xf32>
    %32 = arith.mulf %30, %31 : vector<16x16xf32>
    %33 = vector.extract_strided_slice %3 {offsets = [0, 16], sizes = [16, 16], strides = [1, 1]} : vector<16x128xf32> to vector<16x16xf32>
    %34 = vector.extract_strided_slice %5 {offsets = [0, 16], sizes = [16, 16], strides = [1, 1]} : vector<16x128xf32> to vector<16x16xf32>
    %cst_13 = arith.constant dense<0.000000e+00> : vector<16x16xf32>
    %35 = tpu.matmul %32, %33, %cst_13 {dimension_numbers = #tpu.dot_dimension_numbers<[1], [1], [0], [0], [0, 0, 1, 0], [], []>} : vector<16x16xf32>, vector<16x16xf32>, vector<16x16xf32> -> vector<16x16xf32>
    %36 = arith.addf %35, %11 : vector<16x16xf32>
    %cst_14 = arith.constant dense<0xFF800000> : vector<16xf32>
    %37 = vector.multi_reduction <maximumf>, %36, %cst_14 [1] : vector<16x16xf32> to vector<16xf32>
    %38 = vector.shape_cast %37 : vector<16xf32> to vector<16x1xf32>
    %39 = vector.broadcast %38 : vector<16x1xf32> to vector<16x16xf32>
    %40 = arith.subf %36, %39 : vector<16x16xf32>
    %41 = math.exp %40 : vector<16x16xf32>
    %cst_15 = arith.constant dense<0.000000e+00> : vector<16xf32>
    %42 = vector.multi_reduction <add>, %41, %cst_15 [1] : vector<16x16xf32> to vector<16xf32>
    %43 = vector.shape_cast %42 : vector<16xf32> to vector<16x1xf32>
    %44 = tpu.reciprocal %43 {approx = true} : vector<16x1xf32> -> vector<16x1xf32>
    %45 = vector.broadcast %44 : vector<16x1xf32> to vector<16x16xf32>
    %46 = arith.mulf %41, %45 : vector<16x16xf32>
    %cst_16 = arith.constant dense<0.000000e+00> : vector<16x16xf32>
    %47 = tpu.matmul %46, %34, %cst_16 {dimension_numbers = #tpu.dot_dimension_numbers<[1], [0], [0], [1], [0, 0, 1, 1], [], []>} : vector<16x16xf32>, vector<16x16xf32>, vector<16x16xf32> -> vector<16x16xf32>
    %48 = vector.extract_strided_slice %1 {offsets = [0, 32], sizes = [16, 16], strides = [1, 1]} : vector<16x128xf32> to vector<16x16xf32>
    %cst_17 = arith.constant 2.500000e-01 : f32
    %49 = vector.broadcast %cst_17 : f32 to vector<16x16xf32>
    %50 = arith.mulf %48, %49 : vector<16x16xf32>
    %51 = vector.extract_strided_slice %3 {offsets = [0, 32], sizes = [16, 16], strides = [1, 1]} : vector<16x128xf32> to vector<16x16xf32>
    %52 = vector.extract_strided_slice %5 {offsets = [0, 32], sizes = [16, 16], strides = [1, 1]} : vector<16x128xf32> to vector<16x16xf32>
    %cst_18 = arith.constant dense<0.000000e+00> : vector<16x16xf32>
    %53 = tpu.matmul %50, %51, %cst_18 {dimension_numbers = #tpu.dot_dimension_numbers<[1], [1], [0], [0], [0, 0, 1, 0], [], []>} : vector<16x16xf32>, vector<16x16xf32>, vector<16x16xf32> -> vector<16x16xf32>
    %54 = arith.addf %53, %11 : vector<16x16xf32>
    %cst_19 = arith.constant dense<0xFF800000> : vector<16xf32>
    %55 = vector.multi_reduction <maximumf>, %54, %cst_19 [1] : vector<16x16xf32> to vector<16xf32>
    %56 = vector.shape_cast %55 : vector<16xf32> to vector<16x1xf32>
    %57 = vector.broadcast %56 : vector<16x1xf32> to vector<16x16xf32>
    %58 = arith.subf %54, %57 : vector<16x16xf32>
    %59 = math.exp %58 : vector<16x16xf32>
    %cst_20 = arith.constant dense<0.000000e+00> : vector<16xf32>
    %60 = vector.multi_reduction <add>, %59, %cst_20 [1] : vector<16x16xf32> to vector<16xf32>
    %61 = vector.shape_cast %60 : vector<16xf32> to vector<16x1xf32>
    %62 = tpu.reciprocal %61 {approx = true} : vector<16x1xf32> -> vector<16x1xf32>
    %63 = vector.broadcast %62 : vector<16x1xf32> to vector<16x16xf32>
    %64 = arith.mulf %59, %63 : vector<16x16xf32>
    %cst_21 = arith.constant dense<0.000000e+00> : vector<16x16xf32>
    %65 = tpu.matmul %64, %52, %cst_21 {dimension_numbers = #tpu.dot_dimension_numbers<[1], [0], [0], [1], [0, 0, 1, 1], [], []>} : vector<16x16xf32>, vector<16x16xf32>, vector<16x16xf32> -> vector<16x16xf32>
    %66 = vector.extract_strided_slice %1 {offsets = [0, 48], sizes = [16, 16], strides = [1, 1]} : vector<16x128xf32> to vector<16x16xf32>
    %cst_22 = arith.constant 2.500000e-01 : f32
    %67 = vector.broadcast %cst_22 : f32 to vector<16x16xf32>
    %68 = arith.mulf %66, %67 : vector<16x16xf32>
    %69 = vector.extract_strided_slice %3 {offsets = [0, 48], sizes = [16, 16], strides = [1, 1]} : vector<16x128xf32> to vector<16x16xf32>
    %70 = vector.extract_strided_slice %5 {offsets = [0, 48], sizes = [16, 16], strides = [1, 1]} : vector<16x128xf32> to vector<16x16xf32>
    %cst_23 = arith.constant dense<0.000000e+00> : vector<16x16xf32>
    %71 = tpu.matmul %68, %69, %cst_23 {dimension_numbers = #tpu.dot_dimension_numbers<[1], [1], [0], [0], [0, 0, 1, 0], [], []>} : vector<16x16xf32>, vector<16x16xf32>, vector<16x16xf32> -> vector<16x16xf32>
    %72 = arith.addf %71, %11 : vector<16x16xf32>
    %cst_24 = arith.constant dense<0xFF800000> : vector<16xf32>
    %73 = vector.multi_reduction <maximumf>, %72, %cst_24 [1] : vector<16x16xf32> to vector<16xf32>
    %74 = vector.shape_cast %73 : vector<16xf32> to vector<16x1xf32>
    %75 = vector.broadcast %74 : vector<16x1xf32> to vector<16x16xf32>
    %76 = arith.subf %72, %75 : vector<16x16xf32>
    %77 = math.exp %76 : vector<16x16xf32>
    %cst_25 = arith.constant dense<0.000000e+00> : vector<16xf32>
    %78 = vector.multi_reduction <add>, %77, %cst_25 [1] : vector<16x16xf32> to vector<16xf32>
    %79 = vector.shape_cast %78 : vector<16xf32> to vector<16x1xf32>
    %80 = tpu.reciprocal %79 {approx = true} : vector<16x1xf32> -> vector<16x1xf32>
    %81 = vector.broadcast %80 : vector<16x1xf32> to vector<16x16xf32>
    %82 = arith.mulf %77, %81 : vector<16x16xf32>
    %cst_26 = arith.constant dense<0.000000e+00> : vector<16x16xf32>
    %83 = tpu.matmul %82, %70, %cst_26 {dimension_numbers = #tpu.dot_dimension_numbers<[1], [0], [0], [1], [0, 0, 1, 1], [], []>} : vector<16x16xf32>, vector<16x16xf32>, vector<16x16xf32> -> vector<16x16xf32>
    %84 = vector.extract_strided_slice %1 {offsets = [0, 64], sizes = [16, 16], strides = [1, 1]} : vector<16x128xf32> to vector<16x16xf32>
    %cst_27 = arith.constant 2.500000e-01 : f32
    %85 = vector.broadcast %cst_27 : f32 to vector<16x16xf32>
    %86 = arith.mulf %84, %85 : vector<16x16xf32>
    %87 = vector.extract_strided_slice %3 {offsets = [0, 64], sizes = [16, 16], strides = [1, 1]} : vector<16x128xf32> to vector<16x16xf32>
    %88 = vector.extract_strided_slice %5 {offsets = [0, 64], sizes = [16, 16], strides = [1, 1]} : vector<16x128xf32> to vector<16x16xf32>
    %cst_28 = arith.constant dense<0.000000e+00> : vector<16x16xf32>
    %89 = tpu.matmul %86, %87, %cst_28 {dimension_numbers = #tpu.dot_dimension_numbers<[1], [1], [0], [0], [0, 0, 1, 0], [], []>} : vector<16x16xf32>, vector<16x16xf32>, vector<16x16xf32> -> vector<16x16xf32>
    %90 = arith.addf %89, %11 : vector<16x16xf32>
    %cst_29 = arith.constant dense<0xFF800000> : vector<16xf32>
    %91 = vector.multi_reduction <maximumf>, %90, %cst_29 [1] : vector<16x16xf32> to vector<16xf32>
    %92 = vector.shape_cast %91 : vector<16xf32> to vector<16x1xf32>
    %93 = vector.broadcast %92 : vector<16x1xf32> to vector<16x16xf32>
    %94 = arith.subf %90, %93 : vector<16x16xf32>
    %95 = math.exp %94 : vector<16x16xf32>
    %cst_30 = arith.constant dense<0.000000e+00> : vector<16xf32>
    %96 = vector.multi_reduction <add>, %95, %cst_30 [1] : vector<16x16xf32> to vector<16xf32>
    %97 = vector.shape_cast %96 : vector<16xf32> to vector<16x1xf32>
    %98 = tpu.reciprocal %97 {approx = true} : vector<16x1xf32> -> vector<16x1xf32>
    %99 = vector.broadcast %98 : vector<16x1xf32> to vector<16x16xf32>
    %100 = arith.mulf %95, %99 : vector<16x16xf32>
    %cst_31 = arith.constant dense<0.000000e+00> : vector<16x16xf32>
    %101 = tpu.matmul %100, %88, %cst_31 {dimension_numbers = #tpu.dot_dimension_numbers<[1], [0], [0], [1], [0, 0, 1, 1], [], []>} : vector<16x16xf32>, vector<16x16xf32>, vector<16x16xf32> -> vector<16x16xf32>
    %102 = vector.extract_strided_slice %1 {offsets = [0, 80], sizes = [16, 16], strides = [1, 1]} : vector<16x128xf32> to vector<16x16xf32>
    %cst_32 = arith.constant 2.500000e-01 : f32
    %103 = vector.broadcast %cst_32 : f32 to vector<16x16xf32>
    %104 = arith.mulf %102, %103 : vector<16x16xf32>
    %105 = vector.extract_strided_slice %3 {offsets = [0, 80], sizes = [16, 16], strides = [1, 1]} : vector<16x128xf32> to vector<16x16xf32>
    %106 = vector.extract_strided_slice %5 {offsets = [0, 80], sizes = [16, 16], strides = [1, 1]} : vector<16x128xf32> to vector<16x16xf32>
    %cst_33 = arith.constant dense<0.000000e+00> : vector<16x16xf32>
    %107 = tpu.matmul %104, %105, %cst_33 {dimension_numbers = #tpu.dot_dimension_numbers<[1], [1], [0], [0], [0, 0, 1, 0], [], []>} : vector<16x16xf32>, vector<16x16xf32>, vector<16x16xf32> -> vector<16x16xf32>
    %108 = arith.addf %107, %11 : vector<16x16xf32>
    %cst_34 = arith.constant dense<0xFF800000> : vector<16xf32>
    %109 = vector.multi_reduction <maximumf>, %108, %cst_34 [1] : vector<16x16xf32> to vector<16xf32>
    %110 = vector.shape_cast %109 : vector<16xf32> to vector<16x1xf32>
    %111 = vector.broadcast %110 : vector<16x1xf32> to vector<16x16xf32>
    %112 = arith.subf %108, %111 : vector<16x16xf32>
    %113 = math.exp %112 : vector<16x16xf32>
    %cst_35 = arith.constant dense<0.000000e+00> : vector<16xf32>
    %114 = vector.multi_reduction <add>, %113, %cst_35 [1] : vector<16x16xf32> to vector<16xf32>
    %115 = vector.shape_cast %114 : vector<16xf32> to vector<16x1xf32>
    %116 = tpu.reciprocal %115 {approx = true} : vector<16x1xf32> -> vector<16x1xf32>
    %117 = vector.broadcast %116 : vector<16x1xf32> to vector<16x16xf32>
    %118 = arith.mulf %113, %117 : vector<16x16xf32>
    %cst_36 = arith.constant dense<0.000000e+00> : vector<16x16xf32>
    %119 = tpu.matmul %118, %106, %cst_36 {dimension_numbers = #tpu.dot_dimension_numbers<[1], [0], [0], [1], [0, 0, 1, 1], [], []>} : vector<16x16xf32>, vector<16x16xf32>, vector<16x16xf32> -> vector<16x16xf32>
    %120 = vector.extract_strided_slice %1 {offsets = [0, 96], sizes = [16, 16], strides = [1, 1]} : vector<16x128xf32> to vector<16x16xf32>
    %cst_37 = arith.constant 2.500000e-01 : f32
    %121 = vector.broadcast %cst_37 : f32 to vector<16x16xf32>
    %122 = arith.mulf %120, %121 : vector<16x16xf32>
    %123 = vector.extract_strided_slice %3 {offsets = [0, 96], sizes = [16, 16], strides = [1, 1]} : vector<16x128xf32> to vector<16x16xf32>
    %124 = vector.extract_strided_slice %5 {offsets = [0, 96], sizes = [16, 16], strides = [1, 1]} : vector<16x128xf32> to vector<16x16xf32>
    %cst_38 = arith.constant dense<0.000000e+00> : vector<16x16xf32>
    %125 = tpu.matmul %122, %123, %cst_38 {dimension_numbers = #tpu.dot_dimension_numbers<[1], [1], [0], [0], [0, 0, 1, 0], [], []>} : vector<16x16xf32>, vector<16x16xf32>, vector<16x16xf32> -> vector<16x16xf32>
    %126 = arith.addf %125, %11 : vector<16x16xf32>
    %cst_39 = arith.constant dense<0xFF800000> : vector<16xf32>
    %127 = vector.multi_reduction <maximumf>, %126, %cst_39 [1] : vector<16x16xf32> to vector<16xf32>
    %128 = vector.shape_cast %127 : vector<16xf32> to vector<16x1xf32>
    %129 = vector.broadcast %128 : vector<16x1xf32> to vector<16x16xf32>
    %130 = arith.subf %126, %129 : vector<16x16xf32>
    %131 = math.exp %130 : vector<16x16xf32>
    %cst_40 = arith.constant dense<0.000000e+00> : vector<16xf32>
    %132 = vector.multi_reduction <add>, %131, %cst_40 [1] : vector<16x16xf32> to vector<16xf32>
    %133 = vector.shape_cast %132 : vector<16xf32> to vector<16x1xf32>
    %134 = tpu.reciprocal %133 {approx = true} : vector<16x1xf32> -> vector<16x1xf32>
    %135 = vector.broadcast %134 : vector<16x1xf32> to vector<16x16xf32>
    %136 = arith.mulf %131, %135 : vector<16x16xf32>
    %cst_41 = arith.constant dense<0.000000e+00> : vector<16x16xf32>
    %137 = tpu.matmul %136, %124, %cst_41 {dimension_numbers = #tpu.dot_dimension_numbers<[1], [0], [0], [1], [0, 0, 1, 1], [], []>} : vector<16x16xf32>, vector<16x16xf32>, vector<16x16xf32> -> vector<16x16xf32>
    %138 = vector.extract_strided_slice %1 {offsets = [0, 112], sizes = [16, 16], strides = [1, 1]} : vector<16x128xf32> to vector<16x16xf32>
    %cst_42 = arith.constant 2.500000e-01 : f32
    %139 = vector.broadcast %cst_42 : f32 to vector<16x16xf32>
    %140 = arith.mulf %138, %139 : vector<16x16xf32>
    %141 = vector.extract_strided_slice %3 {offsets = [0, 112], sizes = [16, 16], strides = [1, 1]} : vector<16x128xf32> to vector<16x16xf32>
    %142 = vector.extract_strided_slice %5 {offsets = [0, 112], sizes = [16, 16], strides = [1, 1]} : vector<16x128xf32> to vector<16x16xf32>
    %cst_43 = arith.constant dense<0.000000e+00> : vector<16x16xf32>
    %143 = tpu.matmul %140, %141, %cst_43 {dimension_numbers = #tpu.dot_dimension_numbers<[1], [1], [0], [0], [0, 0, 1, 0], [], []>} : vector<16x16xf32>, vector<16x16xf32>, vector<16x16xf32> -> vector<16x16xf32>
    %144 = arith.addf %143, %11 : vector<16x16xf32>
    %cst_44 = arith.constant dense<0xFF800000> : vector<16xf32>
    %145 = vector.multi_reduction <maximumf>, %144, %cst_44 [1] : vector<16x16xf32> to vector<16xf32>
    %146 = vector.shape_cast %145 : vector<16xf32> to vector<16x1xf32>
    %147 = vector.broadcast %146 : vector<16x1xf32> to vector<16x16xf32>
    %148 = arith.subf %144, %147 : vector<16x16xf32>
    %149 = math.exp %148 : vector<16x16xf32>
    %cst_45 = arith.constant dense<0.000000e+00> : vector<16xf32>
    %150 = vector.multi_reduction <add>, %149, %cst_45 [1] : vector<16x16xf32> to vector<16xf32>
    %151 = vector.shape_cast %150 : vector<16xf32> to vector<16x1xf32>
    %152 = tpu.reciprocal %151 {approx = true} : vector<16x1xf32> -> vector<16x1xf32>
    %153 = vector.broadcast %152 : vector<16x1xf32> to vector<16x16xf32>
    %154 = arith.mulf %149, %153 : vector<16x16xf32>
    %cst_46 = arith.constant dense<0.000000e+00> : vector<16x16xf32>
    %155 = tpu.matmul %154, %142, %cst_46 {dimension_numbers = #tpu.dot_dimension_numbers<[1], [0], [0], [1], [0, 0, 1, 1], [], []>} : vector<16x16xf32>, vector<16x16xf32>, vector<16x16xf32> -> vector<16x16xf32>
    %156 = tpu.concatenate %29, %47, %65, %83, %101, %119, %137, %155 in 1 : vector<16x16xf32>, vector<16x16xf32>, vector<16x16xf32>, vector<16x16xf32>, vector<16x16xf32>, vector<16x16xf32>, vector<16x16xf32>, vector<16x16xf32> -> vector<16x128xf32>
    %c0_47 = arith.constant 0 : index
    %c0_48 = arith.constant 0 : index
    %c0_49 = arith.constant 0 : index
    %157 = vector.load %arg2[%c0_47, %c0_48, %c0_49] : memref<1x16x128xf32, #tpu.memory_space<vmem>>, vector<1x16x128xf32>
    %158 = vector.shape_cast %157 : vector<1x16x128xf32> to vector<16x128xf32>
    %159 = vector.shape_cast %156 : vector<16x128xf32> to vector<1x16x128xf32>
    tpu.vector_store %arg2[%c0_47, %c0_48, %c0_49], %159 {strides = array<i32>} : memref<1x16x128xf32, #tpu.memory_space<vmem>>, vector<1x16x128xf32>,
    return
  }
  func.func @transform_0(%arg0: i32) -> (i32, i32, i32) {
    %c0_i32 = arith.constant 0 : i32
    %c0_i32_0 = arith.constant 0 : i32
    %c0_i32_1 = arith.constant 0 : i32
    return %arg0, %c0_i32, %c0_i32_0 : i32, i32, i32
  }
  func.func @transform_1(%arg0: i32) -> (i32, i32, i32) {
    %c0_i32 = arith.constant 0 : i32
    %c0_i32_0 = arith.constant 0 : i32
    %c0_i32_1 = arith.constant 0 : i32
    return %arg0, %c0_i32, %c0_i32_0 : i32, i32, i32
  }
}

module attributes {stable_mosaic.version = 11 : i64} {
  func.func @_matmul_kernel(%arg0: i32, %arg1: i32, %arg2: i32, %arg3: memref<32x128xf32, #tpu.memory_space<vmem>>, %arg4: memref<128x128xf32, #tpu.memory_space<vmem>>, %arg5: memref<1x128xf32, #tpu.memory_space<vmem>>, %arg6: memref<32x128xf32, #tpu.memory_space<vmem>>, %arg7: memref<32x128xf32, #tpu.memory_space<vmem>>) attributes {dimension_semantics = [#tpu.dimension_semantics<parallel>, #tpu.dimension_semantics<parallel>, #tpu.dimension_semantics<arbitrary>], iteration_bounds = array<i64: 1, 1, 1>, scalar_prefetch = 0 : i64, scratch_operands = 1 : i64, tpu.core_type = #tpu.core_type<tc>, window_params = [{transform_indices = @transform_0, window_bounds = array<i64: 32, 128>}, {transform_indices = @transform_1, window_bounds = array<i64: 128, 128>}, {transform_indices = @transform_2, window_bounds = array<i64: 1, 128>}, {transform_indices = @transform_3, window_bounds = array<i64: 32, 128>}]} {
    %c0_i32 = arith.constant 0 : i32
    %0 = arith.cmpi eq, %arg2, %c0_i32 : i32
    %1 = arith.extui %0 : i1 to i32
    %c0_i32_0 = arith.constant 0 : i32
    %2 = arith.cmpi ne, %1, %c0_i32_0 : i32
    scf.if %2 {
      %cst_10 = arith.constant 0.000000e+00 : f32
      %12 = vector.broadcast %cst_10 : f32 to vector<32x128xf32>
      %c0_11 = arith.constant 0 : index
      %c0_12 = arith.constant 0 : index
      %13 = vector.load %arg7[%c0_11, %c0_12] : memref<32x128xf32, #tpu.memory_space<vmem>>, vector<32x128xf32>
      tpu.vector_store %arg7[%c0_11, %c0_12], %12 {strides = array<i32>} : memref<32x128xf32, #tpu.memory_space<vmem>>, vector<32x128xf32>,
    } else {
    }
    %c0 = arith.constant 0 : index
    %c0_1 = arith.constant 0 : index
    %3 = vector.load %arg7[%c0, %c0_1] : memref<32x128xf32, #tpu.memory_space<vmem>>, vector<32x128xf32>
    %c0_2 = arith.constant 0 : index
    %c0_3 = arith.constant 0 : index
    %4 = vector.load %arg3[%c0_2, %c0_3] : memref<32x128xf32, #tpu.memory_space<vmem>>, vector<32x128xf32>
    %c0_4 = arith.constant 0 : index
    %c0_5 = arith.constant 0 : index
    %5 = vector.load %arg4[%c0_4, %c0_5] : memref<128x128xf32, #tpu.memory_space<vmem>>, vector<128x128xf32>
    %cst = arith.constant dense<0.000000e+00> : vector<32x128xf32>
    %6 = tpu.matmul %4, %5, %cst {dimension_numbers = #tpu.dot_dimension_numbers<[1], [0], [0], [1], [0, 0, 1, 1], [], []>} : vector<32x128xf32>, vector<128x128xf32>, vector<32x128xf32> -> vector<32x128xf32>
    %7 = arith.addf %3, %6 : vector<32x128xf32>
    %c0_6 = arith.constant 0 : index
    %c0_7 = arith.constant 0 : index
    %8 = vector.load %arg7[%c0_6, %c0_7] : memref<32x128xf32, #tpu.memory_space<vmem>>, vector<32x128xf32>
    tpu.vector_store %arg7[%c0_6, %c0_7], %7 {strides = array<i32>} : memref<32x128xf32, #tpu.memory_space<vmem>>, vector<32x128xf32>,
    %c0_i32_8 = arith.constant 0 : i32
    %9 = arith.cmpi eq, %arg2, %c0_i32_8 : i32
    %10 = arith.extui %9 : i1 to i32
    %c0_i32_9 = arith.constant 0 : i32
    %11 = arith.cmpi ne, %10, %c0_i32_9 : i32
    scf.if %11 {
      %c0_10 = arith.constant 0 : index
      %c0_11 = arith.constant 0 : index
      %12 = vector.load %arg7[%c0_10, %c0_11] : memref<32x128xf32, #tpu.memory_space<vmem>>, vector<32x128xf32>
      %c0_12 = arith.constant 0 : index
      %c0_13 = arith.constant 0 : index
      %13 = vector.load %arg5[%c0_12, %c0_13] : memref<1x128xf32, #tpu.memory_space<vmem>>, vector<1x128xf32>
      %14 = vector.broadcast %13 : vector<1x128xf32> to vector<32x128xf32>
      %15 = arith.addf %12, %14 : vector<32x128xf32>
      %c0_14 = arith.constant 0 : index
      %c0_15 = arith.constant 0 : index
      %16 = vector.load %arg6[%c0_14, %c0_15] : memref<32x128xf32, #tpu.memory_space<vmem>>, vector<32x128xf32>
      tpu.vector_store %arg6[%c0_14, %c0_15], %15 {strides = array<i32>} : memref<32x128xf32, #tpu.memory_space<vmem>>, vector<32x128xf32>,
    } else {
    }
    return
  }
  func.func @transform_0(%arg0: i32, %arg1: i32, %arg2: i32) -> (i32, i32) {
    %c0_i32 = arith.constant 0 : i32
    return %arg0, %arg2 : i32, i32
  }
  func.func @transform_1(%arg0: i32, %arg1: i32, %arg2: i32) -> (i32, i32) {
    %c0_i32 = arith.constant 0 : i32
    return %arg2, %arg1 : i32, i32
  }
  func.func @transform_2(%arg0: i32, %arg1: i32, %arg2: i32) -> (i32, i32) {
    %c0_i32 = arith.constant 0 : i32
    %c0_i32_0 = arith.constant 0 : i32
    return %c0_i32, %arg1 : i32, i32
  }
  func.func @transform_3(%arg0: i32, %arg1: i32, %arg2: i32) -> (i32, i32) {
    %c0_i32 = arith.constant 0 : i32
    return %arg0, %arg1 : i32, i32
  }
}

module attributes {stable_mosaic.version = 11 : i64} {
  func.func @_ln_kernel(%arg0: i32, %arg1: memref<32x128xf32, #tpu.memory_space<vmem>>, %arg2: memref<32x128xf32, #tpu.memory_space<vmem>>, %arg3: memref<1x128xf32, #tpu.memory_space<vmem>>, %arg4: memref<1x128xf32, #tpu.memory_space<vmem>>, %arg5: memref<32x128xf32, #tpu.memory_space<vmem>>) attributes {dimension_semantics = [#tpu.dimension_semantics<parallel>], iteration_bounds = array<i64: 1>, scalar_prefetch = 0 : i64, scratch_operands = 0 : i64, tpu.core_type = #tpu.core_type<tc>, window_params = [{transform_indices = @transform_0, window_bounds = array<i64: 32, 128>}, {transform_indices = @transform_1, window_bounds = array<i64: 32, 128>}, {pipeline_mode = #tpu.pipeline_mode<synchronous>, transform_indices = @transform_2, window_bounds = array<i64: 1, 128>}, {pipeline_mode = #tpu.pipeline_mode<synchronous>, transform_indices = @transform_3, window_bounds = array<i64: 1, 128>}, {transform_indices = @transform_4, window_bounds = array<i64: 32, 128>}]} {
    %c0 = arith.constant 0 : index
    %c0_0 = arith.constant 0 : index
    %0 = vector.load %arg1[%c0, %c0_0] : memref<32x128xf32, #tpu.memory_space<vmem>>, vector<32x128xf32>
    %c0_1 = arith.constant 0 : index
    %c0_2 = arith.constant 0 : index
    %1 = vector.load %arg2[%c0_1, %c0_2] : memref<32x128xf32, #tpu.memory_space<vmem>>, vector<32x128xf32>
    %2 = arith.addf %0, %1 : vector<32x128xf32>
    %cst = arith.constant dense<0.000000e+00> : vector<32xf32>
    %3 = vector.multi_reduction <add>, %2, %cst [1] : vector<32x128xf32> to vector<32xf32>
    %4 = vector.shape_cast %3 : vector<32xf32> to vector<32x1xf32>
    %cst_3 = arith.constant 1.280000e+02 : f32
    %5 = vector.broadcast %cst_3 : f32 to vector<32x1xf32>
    %6 = arith.divf %4, %5 : vector<32x1xf32>
    %7 = vector.broadcast %6 : vector<32x1xf32> to vector<32x128xf32>
    %8 = arith.subf %2, %7 : vector<32x128xf32>
    %9 = arith.mulf %8, %8 : vector<32x128xf32>
    %cst_4 = arith.constant dense<0.000000e+00> : vector<32xf32>
    %10 = vector.multi_reduction <add>, %9, %cst_4 [1] : vector<32x128xf32> to vector<32xf32>
    %11 = vector.shape_cast %10 : vector<32xf32> to vector<32x1xf32>
    %cst_5 = arith.constant 1.280000e+02 : f32
    %12 = vector.broadcast %cst_5 : f32 to vector<32x1xf32>
    %13 = arith.divf %11, %12 : vector<32x1xf32>
    %cst_6 = arith.constant 9.99999974E-6 : f32
    %14 = vector.broadcast %cst_6 : f32 to vector<32x1xf32>
    %15 = arith.addf %13, %14 : vector<32x1xf32>
    %16 = math.rsqrt %15 : vector<32x1xf32>
    %17 = vector.broadcast %16 : vector<32x1xf32> to vector<32x128xf32>
    %18 = arith.mulf %8, %17 : vector<32x128xf32>
    %c0_7 = arith.constant 0 : index
    %c0_8 = arith.constant 0 : index
    %19 = vector.load %arg3[%c0_7, %c0_8] : memref<1x128xf32, #tpu.memory_space<vmem>>, vector<1x128xf32>
    %20 = vector.broadcast %19 : vector<1x128xf32> to vector<32x128xf32>
    %21 = arith.mulf %18, %20 : vector<32x128xf32>
    %c0_9 = arith.constant 0 : index
    %c0_10 = arith.constant 0 : index
    %22 = vector.load %arg4[%c0_9, %c0_10] : memref<1x128xf32, #tpu.memory_space<vmem>>, vector<1x128xf32>
    %23 = vector.broadcast %22 : vector<1x128xf32> to vector<32x128xf32>
    %24 = arith.addf %21, %23 : vector<32x128xf32>
    %c0_11 = arith.constant 0 : index
    %c0_12 = arith.constant 0 : index
    %25 = vector.load %arg5[%c0_11, %c0_12] : memref<32x128xf32, #tpu.memory_space<vmem>>, vector<32x128xf32>
    tpu.vector_store %arg5[%c0_11, %c0_12], %24 {strides = array<i32>} : memref<32x128xf32, #tpu.memory_space<vmem>>, vector<32x128xf32>,
    return
  }
  func.func @transform_0(%arg0: i32) -> (i32, i32) {
    %c0_i32 = arith.constant 0 : i32
    %c0_i32_0 = arith.constant 0 : i32
    return %arg0, %c0_i32 : i32, i32
  }
  func.func @transform_1(%arg0: i32) -> (i32, i32) {
    %c0_i32 = arith.constant 0 : i32
    %c0_i32_0 = arith.constant 0 : i32
    return %arg0, %c0_i32 : i32, i32
  }
  func.func @transform_2(%arg0: i32) -> (i32, i32) {
    %c0_i32 = arith.constant 0 : i32
    %c0_i32_0 = arith.constant 0 : i32
    %c0_i32_1 = arith.constant 0 : i32
    return %c0_i32, %c0_i32_0 : i32, i32
  }
  func.func @transform_3(%arg0: i32) -> (i32, i32) {
    %c0_i32 = arith.constant 0 : i32
    %c0_i32_0 = arith.constant 0 : i32
    %c0_i32_1 = arith.constant 0 : i32
    return %c0_i32, %c0_i32_0 : i32, i32
  }
  func.func @transform_4(%arg0: i32) -> (i32, i32) {
    %c0_i32 = arith.constant 0 : i32
    %c0_i32_0 = arith.constant 0 : i32
    return %arg0, %c0_i32 : i32, i32
  }
}

module attributes {stable_mosaic.version = 11 : i64} {
  func.func @_self_attn_kernel(%arg0: i32, %arg1: memref<1x16x384xf32, #tpu.memory_space<vmem>>, %arg2: memref<1x16x128xf32, #tpu.memory_space<vmem>>) attributes {dimension_semantics = [#tpu.dimension_semantics<parallel>], iteration_bounds = array<i64: 2>, scalar_prefetch = 0 : i64, scratch_operands = 0 : i64, tpu.core_type = #tpu.core_type<tc>, window_params = [{transform_indices = @transform_0, window_bounds = array<i64: 1, 16, 384>}, {transform_indices = @transform_1, window_bounds = array<i64: 1, 16, 128>}]} {
    %c0 = arith.constant 0 : index
    %c0_0 = arith.constant 0 : index
    %c0_1 = arith.constant 0 : index
    %0 = vector.load %arg1[%c0, %c0_0, %c0_1] : memref<1x16x384xf32, #tpu.memory_space<vmem>>, vector<1x16x128xf32>
    %1 = vector.shape_cast %0 : vector<1x16x128xf32> to vector<16x128xf32>
    %c0_2 = arith.constant 0 : index
    %c0_3 = arith.constant 0 : index
    %c128 = arith.constant 128 : index
    %2 = vector.load %arg1[%c0_2, %c0_3, %c128] : memref<1x16x384xf32, #tpu.memory_space<vmem>>, vector<1x16x128xf32>
    %3 = vector.shape_cast %2 : vector<1x16x128xf32> to vector<16x128xf32>
    %c0_4 = arith.constant 0 : index
    %c0_5 = arith.constant 0 : index
    %c256 = arith.constant 256 : index
    %4 = vector.load %arg1[%c0_4, %c0_5, %c256] : memref<1x16x384xf32, #tpu.memory_space<vmem>>, vector<1x16x128xf32>
    %5 = vector.shape_cast %4 : vector<1x16x128xf32> to vector<16x128xf32>
    %6 = vector.extract_strided_slice %1 {offsets = [0, 0], sizes = [16, 16], strides = [1, 1]} : vector<16x128xf32> to vector<16x16xf32>
    %cst = arith.constant 2.500000e-01 : f32
    %7 = vector.broadcast %cst : f32 to vector<16x16xf32>
    %8 = arith.mulf %6, %7 : vector<16x16xf32>
    %9 = vector.extract_strided_slice %3 {offsets = [0, 0], sizes = [16, 16], strides = [1, 1]} : vector<16x128xf32> to vector<16x16xf32>
    %10 = vector.extract_strided_slice %5 {offsets = [0, 0], sizes = [16, 16], strides = [1, 1]} : vector<16x128xf32> to vector<16x16xf32>
    %cst_6 = arith.constant dense<0.000000e+00> : vector<16x16xf32>
    %11 = tpu.matmul %8, %9, %cst_6 {dimension_numbers = #tpu.dot_dimension_numbers<[1], [1], [0], [0], [0, 0, 1, 0], [], []>} : vector<16x16xf32>, vector<16x16xf32>, vector<16x16xf32> -> vector<16x16xf32>
    %cst_7 = arith.constant dense<0xFF800000> : vector<16xf32>
    %12 = vector.multi_reduction <maximumf>, %11, %cst_7 [1] : vector<16x16xf32> to vector<16xf32>
    %13 = vector.shape_cast %12 : vector<16xf32> to vector<16x1xf32>
    %14 = vector.broadcast %13 : vector<16x1xf32> to vector<16x16xf32>
    %15 = arith.subf %11, %14 : vector<16x16xf32>
    %16 = math.exp %15 : vector<16x16xf32>
    %cst_8 = arith.constant dense<0.000000e+00> : vector<16xf32>
    %17 = vector.multi_reduction <add>, %16, %cst_8 [1] : vector<16x16xf32> to vector<16xf32>
    %18 = vector.shape_cast %17 : vector<16xf32> to vector<16x1xf32>
    %19 = tpu.reciprocal %18 {approx = true} : vector<16x1xf32> -> vector<16x1xf32>
    %20 = vector.broadcast %19 : vector<16x1xf32> to vector<16x16xf32>
    %21 = arith.mulf %16, %20 : vector<16x16xf32>
    %cst_9 = arith.constant dense<0.000000e+00> : vector<16x16xf32>
    %22 = tpu.matmul %21, %10, %cst_9 {dimension_numbers = #tpu.dot_dimension_numbers<[1], [0], [0], [1], [0, 0, 1, 1], [], []>} : vector<16x16xf32>, vector<16x16xf32>, vector<16x16xf32> -> vector<16x16xf32>
    %23 = vector.extract_strided_slice %1 {offsets = [0, 16], sizes = [16, 16], strides = [1, 1]} : vector<16x128xf32> to vector<16x16xf32>
    %cst_10 = arith.constant 2.500000e-01 : f32
    %24 = vector.broadcast %cst_10 : f32 to vector<16x16xf32>
    %25 = arith.mulf %23, %24 : vector<16x16xf32>
    %26 = vector.extract_strided_slice %3 {offsets = [0, 16], sizes = [16, 16], strides = [1, 1]} : vector<16x128xf32> to vector<16x16xf32>
    %27 = vector.extract_strided_slice %5 {offsets = [0, 16], sizes = [16, 16], strides = [1, 1]} : vector<16x128xf32> to vector<16x16xf32>
    %cst_11 = arith.constant dense<0.000000e+00> : vector<16x16xf32>
    %28 = tpu.matmul %25, %26, %cst_11 {dimension_numbers = #tpu.dot_dimension_numbers<[1], [1], [0], [0], [0, 0, 1, 0], [], []>} : vector<16x16xf32>, vector<16x16xf32>, vector<16x16xf32> -> vector<16x16xf32>
    %cst_12 = arith.constant dense<0xFF800000> : vector<16xf32>
    %29 = vector.multi_reduction <maximumf>, %28, %cst_12 [1] : vector<16x16xf32> to vector<16xf32>
    %30 = vector.shape_cast %29 : vector<16xf32> to vector<16x1xf32>
    %31 = vector.broadcast %30 : vector<16x1xf32> to vector<16x16xf32>
    %32 = arith.subf %28, %31 : vector<16x16xf32>
    %33 = math.exp %32 : vector<16x16xf32>
    %cst_13 = arith.constant dense<0.000000e+00> : vector<16xf32>
    %34 = vector.multi_reduction <add>, %33, %cst_13 [1] : vector<16x16xf32> to vector<16xf32>
    %35 = vector.shape_cast %34 : vector<16xf32> to vector<16x1xf32>
    %36 = tpu.reciprocal %35 {approx = true} : vector<16x1xf32> -> vector<16x1xf32>
    %37 = vector.broadcast %36 : vector<16x1xf32> to vector<16x16xf32>
    %38 = arith.mulf %33, %37 : vector<16x16xf32>
    %cst_14 = arith.constant dense<0.000000e+00> : vector<16x16xf32>
    %39 = tpu.matmul %38, %27, %cst_14 {dimension_numbers = #tpu.dot_dimension_numbers<[1], [0], [0], [1], [0, 0, 1, 1], [], []>} : vector<16x16xf32>, vector<16x16xf32>, vector<16x16xf32> -> vector<16x16xf32>
    %40 = vector.extract_strided_slice %1 {offsets = [0, 32], sizes = [16, 16], strides = [1, 1]} : vector<16x128xf32> to vector<16x16xf32>
    %cst_15 = arith.constant 2.500000e-01 : f32
    %41 = vector.broadcast %cst_15 : f32 to vector<16x16xf32>
    %42 = arith.mulf %40, %41 : vector<16x16xf32>
    %43 = vector.extract_strided_slice %3 {offsets = [0, 32], sizes = [16, 16], strides = [1, 1]} : vector<16x128xf32> to vector<16x16xf32>
    %44 = vector.extract_strided_slice %5 {offsets = [0, 32], sizes = [16, 16], strides = [1, 1]} : vector<16x128xf32> to vector<16x16xf32>
    %cst_16 = arith.constant dense<0.000000e+00> : vector<16x16xf32>
    %45 = tpu.matmul %42, %43, %cst_16 {dimension_numbers = #tpu.dot_dimension_numbers<[1], [1], [0], [0], [0, 0, 1, 0], [], []>} : vector<16x16xf32>, vector<16x16xf32>, vector<16x16xf32> -> vector<16x16xf32>
    %cst_17 = arith.constant dense<0xFF800000> : vector<16xf32>
    %46 = vector.multi_reduction <maximumf>, %45, %cst_17 [1] : vector<16x16xf32> to vector<16xf32>
    %47 = vector.shape_cast %46 : vector<16xf32> to vector<16x1xf32>
    %48 = vector.broadcast %47 : vector<16x1xf32> to vector<16x16xf32>
    %49 = arith.subf %45, %48 : vector<16x16xf32>
    %50 = math.exp %49 : vector<16x16xf32>
    %cst_18 = arith.constant dense<0.000000e+00> : vector<16xf32>
    %51 = vector.multi_reduction <add>, %50, %cst_18 [1] : vector<16x16xf32> to vector<16xf32>
    %52 = vector.shape_cast %51 : vector<16xf32> to vector<16x1xf32>
    %53 = tpu.reciprocal %52 {approx = true} : vector<16x1xf32> -> vector<16x1xf32>
    %54 = vector.broadcast %53 : vector<16x1xf32> to vector<16x16xf32>
    %55 = arith.mulf %50, %54 : vector<16x16xf32>
    %cst_19 = arith.constant dense<0.000000e+00> : vector<16x16xf32>
    %56 = tpu.matmul %55, %44, %cst_19 {dimension_numbers = #tpu.dot_dimension_numbers<[1], [0], [0], [1], [0, 0, 1, 1], [], []>} : vector<16x16xf32>, vector<16x16xf32>, vector<16x16xf32> -> vector<16x16xf32>
    %57 = vector.extract_strided_slice %1 {offsets = [0, 48], sizes = [16, 16], strides = [1, 1]} : vector<16x128xf32> to vector<16x16xf32>
    %cst_20 = arith.constant 2.500000e-01 : f32
    %58 = vector.broadcast %cst_20 : f32 to vector<16x16xf32>
    %59 = arith.mulf %57, %58 : vector<16x16xf32>
    %60 = vector.extract_strided_slice %3 {offsets = [0, 48], sizes = [16, 16], strides = [1, 1]} : vector<16x128xf32> to vector<16x16xf32>
    %61 = vector.extract_strided_slice %5 {offsets = [0, 48], sizes = [16, 16], strides = [1, 1]} : vector<16x128xf32> to vector<16x16xf32>
    %cst_21 = arith.constant dense<0.000000e+00> : vector<16x16xf32>
    %62 = tpu.matmul %59, %60, %cst_21 {dimension_numbers = #tpu.dot_dimension_numbers<[1], [1], [0], [0], [0, 0, 1, 0], [], []>} : vector<16x16xf32>, vector<16x16xf32>, vector<16x16xf32> -> vector<16x16xf32>
    %cst_22 = arith.constant dense<0xFF800000> : vector<16xf32>
    %63 = vector.multi_reduction <maximumf>, %62, %cst_22 [1] : vector<16x16xf32> to vector<16xf32>
    %64 = vector.shape_cast %63 : vector<16xf32> to vector<16x1xf32>
    %65 = vector.broadcast %64 : vector<16x1xf32> to vector<16x16xf32>
    %66 = arith.subf %62, %65 : vector<16x16xf32>
    %67 = math.exp %66 : vector<16x16xf32>
    %cst_23 = arith.constant dense<0.000000e+00> : vector<16xf32>
    %68 = vector.multi_reduction <add>, %67, %cst_23 [1] : vector<16x16xf32> to vector<16xf32>
    %69 = vector.shape_cast %68 : vector<16xf32> to vector<16x1xf32>
    %70 = tpu.reciprocal %69 {approx = true} : vector<16x1xf32> -> vector<16x1xf32>
    %71 = vector.broadcast %70 : vector<16x1xf32> to vector<16x16xf32>
    %72 = arith.mulf %67, %71 : vector<16x16xf32>
    %cst_24 = arith.constant dense<0.000000e+00> : vector<16x16xf32>
    %73 = tpu.matmul %72, %61, %cst_24 {dimension_numbers = #tpu.dot_dimension_numbers<[1], [0], [0], [1], [0, 0, 1, 1], [], []>} : vector<16x16xf32>, vector<16x16xf32>, vector<16x16xf32> -> vector<16x16xf32>
    %74 = vector.extract_strided_slice %1 {offsets = [0, 64], sizes = [16, 16], strides = [1, 1]} : vector<16x128xf32> to vector<16x16xf32>
    %cst_25 = arith.constant 2.500000e-01 : f32
    %75 = vector.broadcast %cst_25 : f32 to vector<16x16xf32>
    %76 = arith.mulf %74, %75 : vector<16x16xf32>
    %77 = vector.extract_strided_slice %3 {offsets = [0, 64], sizes = [16, 16], strides = [1, 1]} : vector<16x128xf32> to vector<16x16xf32>
    %78 = vector.extract_strided_slice %5 {offsets = [0, 64], sizes = [16, 16], strides = [1, 1]} : vector<16x128xf32> to vector<16x16xf32>
    %cst_26 = arith.constant dense<0.000000e+00> : vector<16x16xf32>
    %79 = tpu.matmul %76, %77, %cst_26 {dimension_numbers = #tpu.dot_dimension_numbers<[1], [1], [0], [0], [0, 0, 1, 0], [], []>} : vector<16x16xf32>, vector<16x16xf32>, vector<16x16xf32> -> vector<16x16xf32>
    %cst_27 = arith.constant dense<0xFF800000> : vector<16xf32>
    %80 = vector.multi_reduction <maximumf>, %79, %cst_27 [1] : vector<16x16xf32> to vector<16xf32>
    %81 = vector.shape_cast %80 : vector<16xf32> to vector<16x1xf32>
    %82 = vector.broadcast %81 : vector<16x1xf32> to vector<16x16xf32>
    %83 = arith.subf %79, %82 : vector<16x16xf32>
    %84 = math.exp %83 : vector<16x16xf32>
    %cst_28 = arith.constant dense<0.000000e+00> : vector<16xf32>
    %85 = vector.multi_reduction <add>, %84, %cst_28 [1] : vector<16x16xf32> to vector<16xf32>
    %86 = vector.shape_cast %85 : vector<16xf32> to vector<16x1xf32>
    %87 = tpu.reciprocal %86 {approx = true} : vector<16x1xf32> -> vector<16x1xf32>
    %88 = vector.broadcast %87 : vector<16x1xf32> to vector<16x16xf32>
    %89 = arith.mulf %84, %88 : vector<16x16xf32>
    %cst_29 = arith.constant dense<0.000000e+00> : vector<16x16xf32>
    %90 = tpu.matmul %89, %78, %cst_29 {dimension_numbers = #tpu.dot_dimension_numbers<[1], [0], [0], [1], [0, 0, 1, 1], [], []>} : vector<16x16xf32>, vector<16x16xf32>, vector<16x16xf32> -> vector<16x16xf32>
    %91 = vector.extract_strided_slice %1 {offsets = [0, 80], sizes = [16, 16], strides = [1, 1]} : vector<16x128xf32> to vector<16x16xf32>
    %cst_30 = arith.constant 2.500000e-01 : f32
    %92 = vector.broadcast %cst_30 : f32 to vector<16x16xf32>
    %93 = arith.mulf %91, %92 : vector<16x16xf32>
    %94 = vector.extract_strided_slice %3 {offsets = [0, 80], sizes = [16, 16], strides = [1, 1]} : vector<16x128xf32> to vector<16x16xf32>
    %95 = vector.extract_strided_slice %5 {offsets = [0, 80], sizes = [16, 16], strides = [1, 1]} : vector<16x128xf32> to vector<16x16xf32>
    %cst_31 = arith.constant dense<0.000000e+00> : vector<16x16xf32>
    %96 = tpu.matmul %93, %94, %cst_31 {dimension_numbers = #tpu.dot_dimension_numbers<[1], [1], [0], [0], [0, 0, 1, 0], [], []>} : vector<16x16xf32>, vector<16x16xf32>, vector<16x16xf32> -> vector<16x16xf32>
    %cst_32 = arith.constant dense<0xFF800000> : vector<16xf32>
    %97 = vector.multi_reduction <maximumf>, %96, %cst_32 [1] : vector<16x16xf32> to vector<16xf32>
    %98 = vector.shape_cast %97 : vector<16xf32> to vector<16x1xf32>
    %99 = vector.broadcast %98 : vector<16x1xf32> to vector<16x16xf32>
    %100 = arith.subf %96, %99 : vector<16x16xf32>
    %101 = math.exp %100 : vector<16x16xf32>
    %cst_33 = arith.constant dense<0.000000e+00> : vector<16xf32>
    %102 = vector.multi_reduction <add>, %101, %cst_33 [1] : vector<16x16xf32> to vector<16xf32>
    %103 = vector.shape_cast %102 : vector<16xf32> to vector<16x1xf32>
    %104 = tpu.reciprocal %103 {approx = true} : vector<16x1xf32> -> vector<16x1xf32>
    %105 = vector.broadcast %104 : vector<16x1xf32> to vector<16x16xf32>
    %106 = arith.mulf %101, %105 : vector<16x16xf32>
    %cst_34 = arith.constant dense<0.000000e+00> : vector<16x16xf32>
    %107 = tpu.matmul %106, %95, %cst_34 {dimension_numbers = #tpu.dot_dimension_numbers<[1], [0], [0], [1], [0, 0, 1, 1], [], []>} : vector<16x16xf32>, vector<16x16xf32>, vector<16x16xf32> -> vector<16x16xf32>
    %108 = vector.extract_strided_slice %1 {offsets = [0, 96], sizes = [16, 16], strides = [1, 1]} : vector<16x128xf32> to vector<16x16xf32>
    %cst_35 = arith.constant 2.500000e-01 : f32
    %109 = vector.broadcast %cst_35 : f32 to vector<16x16xf32>
    %110 = arith.mulf %108, %109 : vector<16x16xf32>
    %111 = vector.extract_strided_slice %3 {offsets = [0, 96], sizes = [16, 16], strides = [1, 1]} : vector<16x128xf32> to vector<16x16xf32>
    %112 = vector.extract_strided_slice %5 {offsets = [0, 96], sizes = [16, 16], strides = [1, 1]} : vector<16x128xf32> to vector<16x16xf32>
    %cst_36 = arith.constant dense<0.000000e+00> : vector<16x16xf32>
    %113 = tpu.matmul %110, %111, %cst_36 {dimension_numbers = #tpu.dot_dimension_numbers<[1], [1], [0], [0], [0, 0, 1, 0], [], []>} : vector<16x16xf32>, vector<16x16xf32>, vector<16x16xf32> -> vector<16x16xf32>
    %cst_37 = arith.constant dense<0xFF800000> : vector<16xf32>
    %114 = vector.multi_reduction <maximumf>, %113, %cst_37 [1] : vector<16x16xf32> to vector<16xf32>
    %115 = vector.shape_cast %114 : vector<16xf32> to vector<16x1xf32>
    %116 = vector.broadcast %115 : vector<16x1xf32> to vector<16x16xf32>
    %117 = arith.subf %113, %116 : vector<16x16xf32>
    %118 = math.exp %117 : vector<16x16xf32>
    %cst_38 = arith.constant dense<0.000000e+00> : vector<16xf32>
    %119 = vector.multi_reduction <add>, %118, %cst_38 [1] : vector<16x16xf32> to vector<16xf32>
    %120 = vector.shape_cast %119 : vector<16xf32> to vector<16x1xf32>
    %121 = tpu.reciprocal %120 {approx = true} : vector<16x1xf32> -> vector<16x1xf32>
    %122 = vector.broadcast %121 : vector<16x1xf32> to vector<16x16xf32>
    %123 = arith.mulf %118, %122 : vector<16x16xf32>
    %cst_39 = arith.constant dense<0.000000e+00> : vector<16x16xf32>
    %124 = tpu.matmul %123, %112, %cst_39 {dimension_numbers = #tpu.dot_dimension_numbers<[1], [0], [0], [1], [0, 0, 1, 1], [], []>} : vector<16x16xf32>, vector<16x16xf32>, vector<16x16xf32> -> vector<16x16xf32>
    %125 = vector.extract_strided_slice %1 {offsets = [0, 112], sizes = [16, 16], strides = [1, 1]} : vector<16x128xf32> to vector<16x16xf32>
    %cst_40 = arith.constant 2.500000e-01 : f32
    %126 = vector.broadcast %cst_40 : f32 to vector<16x16xf32>
    %127 = arith.mulf %125, %126 : vector<16x16xf32>
    %128 = vector.extract_strided_slice %3 {offsets = [0, 112], sizes = [16, 16], strides = [1, 1]} : vector<16x128xf32> to vector<16x16xf32>
    %129 = vector.extract_strided_slice %5 {offsets = [0, 112], sizes = [16, 16], strides = [1, 1]} : vector<16x128xf32> to vector<16x16xf32>
    %cst_41 = arith.constant dense<0.000000e+00> : vector<16x16xf32>
    %130 = tpu.matmul %127, %128, %cst_41 {dimension_numbers = #tpu.dot_dimension_numbers<[1], [1], [0], [0], [0, 0, 1, 0], [], []>} : vector<16x16xf32>, vector<16x16xf32>, vector<16x16xf32> -> vector<16x16xf32>
    %cst_42 = arith.constant dense<0xFF800000> : vector<16xf32>
    %131 = vector.multi_reduction <maximumf>, %130, %cst_42 [1] : vector<16x16xf32> to vector<16xf32>
    %132 = vector.shape_cast %131 : vector<16xf32> to vector<16x1xf32>
    %133 = vector.broadcast %132 : vector<16x1xf32> to vector<16x16xf32>
    %134 = arith.subf %130, %133 : vector<16x16xf32>
    %135 = math.exp %134 : vector<16x16xf32>
    %cst_43 = arith.constant dense<0.000000e+00> : vector<16xf32>
    %136 = vector.multi_reduction <add>, %135, %cst_43 [1] : vector<16x16xf32> to vector<16xf32>
    %137 = vector.shape_cast %136 : vector<16xf32> to vector<16x1xf32>
    %138 = tpu.reciprocal %137 {approx = true} : vector<16x1xf32> -> vector<16x1xf32>
    %139 = vector.broadcast %138 : vector<16x1xf32> to vector<16x16xf32>
    %140 = arith.mulf %135, %139 : vector<16x16xf32>
    %cst_44 = arith.constant dense<0.000000e+00> : vector<16x16xf32>
    %141 = tpu.matmul %140, %129, %cst_44 {dimension_numbers = #tpu.dot_dimension_numbers<[1], [0], [0], [1], [0, 0, 1, 1], [], []>} : vector<16x16xf32>, vector<16x16xf32>, vector<16x16xf32> -> vector<16x16xf32>
    %142 = tpu.concatenate %22, %39, %56, %73, %90, %107, %124, %141 in 1 : vector<16x16xf32>, vector<16x16xf32>, vector<16x16xf32>, vector<16x16xf32>, vector<16x16xf32>, vector<16x16xf32>, vector<16x16xf32>, vector<16x16xf32> -> vector<16x128xf32>
    %c0_45 = arith.constant 0 : index
    %c0_46 = arith.constant 0 : index
    %c0_47 = arith.constant 0 : index
    %143 = vector.load %arg2[%c0_45, %c0_46, %c0_47] : memref<1x16x128xf32, #tpu.memory_space<vmem>>, vector<1x16x128xf32>
    %144 = vector.shape_cast %143 : vector<1x16x128xf32> to vector<16x128xf32>
    %145 = vector.shape_cast %142 : vector<16x128xf32> to vector<1x16x128xf32>
    tpu.vector_store %arg2[%c0_45, %c0_46, %c0_47], %145 {strides = array<i32>} : memref<1x16x128xf32, #tpu.memory_space<vmem>>, vector<1x16x128xf32>,
    return
  }
  func.func @transform_0(%arg0: i32) -> (i32, i32, i32) {
    %c0_i32 = arith.constant 0 : i32
    %c0_i32_0 = arith.constant 0 : i32
    %c0_i32_1 = arith.constant 0 : i32
    return %arg0, %c0_i32, %c0_i32_0 : i32, i32, i32
  }
  func.func @transform_1(%arg0: i32) -> (i32, i32, i32) {
    %c0_i32 = arith.constant 0 : i32
    %c0_i32_0 = arith.constant 0 : i32
    %c0_i32_1 = arith.constant 0 : i32
    return %arg0, %c0_i32, %c0_i32_0 : i32, i32, i32
  }
}

module attributes {stable_mosaic.version = 11 : i64} {
  func.func @_matmul_kernel(%arg0: i32, %arg1: i32, %arg2: i32, %arg3: memref<32x128xf32, #tpu.memory_space<vmem>>, %arg4: memref<128x128xf32, #tpu.memory_space<vmem>>, %arg5: memref<1x128xf32, #tpu.memory_space<vmem>>, %arg6: memref<32x128xf32, #tpu.memory_space<vmem>>, %arg7: memref<32x128xf32, #tpu.memory_space<vmem>>) attributes {dimension_semantics = [#tpu.dimension_semantics<parallel>, #tpu.dimension_semantics<parallel>, #tpu.dimension_semantics<arbitrary>], iteration_bounds = array<i64: 1, 1, 1>, scalar_prefetch = 0 : i64, scratch_operands = 1 : i64, tpu.core_type = #tpu.core_type<tc>, window_params = [{transform_indices = @transform_0, window_bounds = array<i64: 32, 128>}, {transform_indices = @transform_1, window_bounds = array<i64: 128, 128>}, {transform_indices = @transform_2, window_bounds = array<i64: 1, 128>}, {transform_indices = @transform_3, window_bounds = array<i64: 32, 128>}]} {
    %c0_i32 = arith.constant 0 : i32
    %0 = arith.cmpi eq, %arg2, %c0_i32 : i32
    %1 = arith.extui %0 : i1 to i32
    %c0_i32_0 = arith.constant 0 : i32
    %2 = arith.cmpi ne, %1, %c0_i32_0 : i32
    scf.if %2 {
      %cst_10 = arith.constant 0.000000e+00 : f32
      %12 = vector.broadcast %cst_10 : f32 to vector<32x128xf32>
      %c0_11 = arith.constant 0 : index
      %c0_12 = arith.constant 0 : index
      %13 = vector.load %arg7[%c0_11, %c0_12] : memref<32x128xf32, #tpu.memory_space<vmem>>, vector<32x128xf32>
      tpu.vector_store %arg7[%c0_11, %c0_12], %12 {strides = array<i32>} : memref<32x128xf32, #tpu.memory_space<vmem>>, vector<32x128xf32>,
    } else {
    }
    %c0 = arith.constant 0 : index
    %c0_1 = arith.constant 0 : index
    %3 = vector.load %arg7[%c0, %c0_1] : memref<32x128xf32, #tpu.memory_space<vmem>>, vector<32x128xf32>
    %c0_2 = arith.constant 0 : index
    %c0_3 = arith.constant 0 : index
    %4 = vector.load %arg3[%c0_2, %c0_3] : memref<32x128xf32, #tpu.memory_space<vmem>>, vector<32x128xf32>
    %c0_4 = arith.constant 0 : index
    %c0_5 = arith.constant 0 : index
    %5 = vector.load %arg4[%c0_4, %c0_5] : memref<128x128xf32, #tpu.memory_space<vmem>>, vector<128x128xf32>
    %cst = arith.constant dense<0.000000e+00> : vector<32x128xf32>
    %6 = tpu.matmul %4, %5, %cst {dimension_numbers = #tpu.dot_dimension_numbers<[1], [0], [0], [1], [0, 0, 1, 1], [], []>} : vector<32x128xf32>, vector<128x128xf32>, vector<32x128xf32> -> vector<32x128xf32>
    %7 = arith.addf %3, %6 : vector<32x128xf32>
    %c0_6 = arith.constant 0 : index
    %c0_7 = arith.constant 0 : index
    %8 = vector.load %arg7[%c0_6, %c0_7] : memref<32x128xf32, #tpu.memory_space<vmem>>, vector<32x128xf32>
    tpu.vector_store %arg7[%c0_6, %c0_7], %7 {strides = array<i32>} : memref<32x128xf32, #tpu.memory_space<vmem>>, vector<32x128xf32>,
    %c0_i32_8 = arith.constant 0 : i32
    %9 = arith.cmpi eq, %arg2, %c0_i32_8 : i32
    %10 = arith.extui %9 : i1 to i32
    %c0_i32_9 = arith.constant 0 : i32
    %11 = arith.cmpi ne, %10, %c0_i32_9 : i32
    scf.if %11 {
      %c0_10 = arith.constant 0 : index
      %c0_11 = arith.constant 0 : index
      %12 = vector.load %arg7[%c0_10, %c0_11] : memref<32x128xf32, #tpu.memory_space<vmem>>, vector<32x128xf32>
      %c0_12 = arith.constant 0 : index
      %c0_13 = arith.constant 0 : index
      %13 = vector.load %arg5[%c0_12, %c0_13] : memref<1x128xf32, #tpu.memory_space<vmem>>, vector<1x128xf32>
      %14 = vector.broadcast %13 : vector<1x128xf32> to vector<32x128xf32>
      %15 = arith.addf %12, %14 : vector<32x128xf32>
      %cst_14 = arith.constant 5.000000e-01 : f32
      %16 = vector.broadcast %cst_14 : f32 to vector<32x128xf32>
      %17 = arith.mulf %16, %15 : vector<32x128xf32>
      %cst_15 = arith.constant 0.707106769 : f32
      %18 = vector.broadcast %cst_15 : f32 to vector<32x128xf32>
      %19 = arith.mulf %15, %18 : vector<32x128xf32>
      %cst_16 = arith.constant 0.000000e+00 : f32
      %20 = vector.broadcast %cst_16 : f32 to vector<32x128xf32>
      %21 = arith.cmpf oge, %19, %20 : vector<32x128xf32>
      %cst_17 = arith.constant 1.000000e+00 : f32
      %cst_18 = arith.constant -1.000000e+00 : f32
      %22 = vector.broadcast %cst_17 : f32 to vector<32x128xf32>
      %23 = vector.broadcast %cst_18 : f32 to vector<32x128xf32>
      %24 = arith.select %21, %22, %23 : vector<32x128xi1>, vector<32x128xf32>
      %25 = math.absf %19 : vector<32x128xf32>
      %cst_19 = arith.constant 0.327591091 : f32
      %26 = vector.broadcast %cst_19 : f32 to vector<32x128xf32>
      %27 = arith.mulf %26, %25 : vector<32x128xf32>
      %cst_20 = arith.constant 1.000000e+00 : f32
      %28 = vector.broadcast %cst_20 : f32 to vector<32x128xf32>
      %29 = arith.addf %28, %27 : vector<32x128xf32>
      %cst_21 = arith.constant 1.000000e+00 : f32
      %30 = vector.broadcast %cst_21 : f32 to vector<32x128xf32>
      %31 = arith.divf %30, %29 : vector<32x128xf32>
      %cst_22 = arith.constant 1.06140542 : f32
      %32 = vector.broadcast %cst_22 : f32 to vector<32x128xf32>
      %33 = arith.mulf %32, %31 : vector<32x128xf32>
      %cst_23 = arith.constant -1.45315206 : f32
      %34 = vector.broadcast %cst_23 : f32 to vector<32x128xf32>
      %35 = arith.addf %33, %34 : vector<32x128xf32>
      %36 = arith.mulf %35, %31 : vector<32x128xf32>
      %cst_24 = arith.constant 1.42141378 : f32
      %37 = vector.broadcast %cst_24 : f32 to vector<32x128xf32>
      %38 = arith.addf %36, %37 : vector<32x128xf32>
      %39 = arith.mulf %38, %31 : vector<32x128xf32>
      %cst_25 = arith.constant -0.284496725 : f32
      %40 = vector.broadcast %cst_25 : f32 to vector<32x128xf32>
      %41 = arith.addf %39, %40 : vector<32x128xf32>
      %42 = arith.mulf %41, %31 : vector<32x128xf32>
      %cst_26 = arith.constant 0.254829586 : f32
      %43 = vector.broadcast %cst_26 : f32 to vector<32x128xf32>
      %44 = arith.addf %42, %43 : vector<32x128xf32>
      %45 = arith.mulf %44, %31 : vector<32x128xf32>
      %cst_27 = arith.constant 0.000000e+00 : f32
      %46 = vector.broadcast %cst_27 : f32 to vector<32x128xf32>
      %47 = arith.subf %46, %25 : vector<32x128xf32>
      %48 = arith.mulf %47, %25 : vector<32x128xf32>
      %49 = math.exp %48 : vector<32x128xf32>
      %50 = arith.mulf %45, %49 : vector<32x128xf32>
      %cst_28 = arith.constant 1.000000e+00 : f32
      %51 = vector.broadcast %cst_28 : f32 to vector<32x128xf32>
      %52 = arith.subf %51, %50 : vector<32x128xf32>
      %53 = arith.mulf %24, %52 : vector<32x128xf32>
      %cst_29 = arith.constant 1.000000e+00 : f32
      %54 = vector.broadcast %cst_29 : f32 to vector<32x128xf32>
      %55 = arith.addf %54, %53 : vector<32x128xf32>
      %56 = arith.mulf %17, %55 : vector<32x128xf32>
      %c0_30 = arith.constant 0 : index
      %c0_31 = arith.constant 0 : index
      %57 = vector.load %arg6[%c0_30, %c0_31] : memref<32x128xf32, #tpu.memory_space<vmem>>, vector<32x128xf32>
      tpu.vector_store %arg6[%c0_30, %c0_31], %56 {strides = array<i32>} : memref<32x128xf32, #tpu.memory_space<vmem>>, vector<32x128xf32>,
    } else {
    }
    return
  }
  func.func @transform_0(%arg0: i32, %arg1: i32, %arg2: i32) -> (i32, i32) {
    %c0_i32 = arith.constant 0 : i32
    return %arg0, %arg2 : i32, i32
  }
  func.func @transform_1(%arg0: i32, %arg1: i32, %arg2: i32) -> (i32, i32) {
    %c0_i32 = arith.constant 0 : i32
    return %arg2, %arg1 : i32, i32
  }
  func.func @transform_2(%arg0: i32, %arg1: i32, %arg2: i32) -> (i32, i32) {
    %c0_i32 = arith.constant 0 : i32
    %c0_i32_0 = arith.constant 0 : i32
    return %c0_i32, %arg1 : i32, i32
  }
  func.func @transform_3(%arg0: i32, %arg1: i32, %arg2: i32) -> (i32, i32) {
    %c0_i32 = arith.constant 0 : i32
    return %arg0, %arg1 : i32, i32
  }
}

module attributes {stable_mosaic.version = 11 : i64} {
  func.func @_ln_kernel(%arg0: i32, %arg1: memref<32x128xf32, #tpu.memory_space<vmem>>, %arg2: memref<1x128xf32, #tpu.memory_space<vmem>>, %arg3: memref<1x128xf32, #tpu.memory_space<vmem>>, %arg4: memref<32x128xf32, #tpu.memory_space<vmem>>) attributes {dimension_semantics = [#tpu.dimension_semantics<parallel>], iteration_bounds = array<i64: 1>, scalar_prefetch = 0 : i64, scratch_operands = 0 : i64, tpu.core_type = #tpu.core_type<tc>, window_params = [{transform_indices = @transform_0, window_bounds = array<i64: 32, 128>}, {pipeline_mode = #tpu.pipeline_mode<synchronous>, transform_indices = @transform_1, window_bounds = array<i64: 1, 128>}, {pipeline_mode = #tpu.pipeline_mode<synchronous>, transform_indices = @transform_2, window_bounds = array<i64: 1, 128>}, {transform_indices = @transform_3, window_bounds = array<i64: 32, 128>}]} {
    %c0 = arith.constant 0 : index
    %c0_0 = arith.constant 0 : index
    %0 = vector.load %arg1[%c0, %c0_0] : memref<32x128xf32, #tpu.memory_space<vmem>>, vector<32x128xf32>
    %cst = arith.constant dense<0.000000e+00> : vector<32xf32>
    %1 = vector.multi_reduction <add>, %0, %cst [1] : vector<32x128xf32> to vector<32xf32>
    %2 = vector.shape_cast %1 : vector<32xf32> to vector<32x1xf32>
    %cst_1 = arith.constant 1.280000e+02 : f32
    %3 = vector.broadcast %cst_1 : f32 to vector<32x1xf32>
    %4 = arith.divf %2, %3 : vector<32x1xf32>
    %5 = vector.broadcast %4 : vector<32x1xf32> to vector<32x128xf32>
    %6 = arith.subf %0, %5 : vector<32x128xf32>
    %7 = arith.mulf %6, %6 : vector<32x128xf32>
    %cst_2 = arith.constant dense<0.000000e+00> : vector<32xf32>
    %8 = vector.multi_reduction <add>, %7, %cst_2 [1] : vector<32x128xf32> to vector<32xf32>
    %9 = vector.shape_cast %8 : vector<32xf32> to vector<32x1xf32>
    %cst_3 = arith.constant 1.280000e+02 : f32
    %10 = vector.broadcast %cst_3 : f32 to vector<32x1xf32>
    %11 = arith.divf %9, %10 : vector<32x1xf32>
    %cst_4 = arith.constant 9.99999974E-6 : f32
    %12 = vector.broadcast %cst_4 : f32 to vector<32x1xf32>
    %13 = arith.addf %11, %12 : vector<32x1xf32>
    %14 = math.rsqrt %13 : vector<32x1xf32>
    %15 = vector.broadcast %14 : vector<32x1xf32> to vector<32x128xf32>
    %16 = arith.mulf %6, %15 : vector<32x128xf32>
    %c0_5 = arith.constant 0 : index
    %c0_6 = arith.constant 0 : index
    %17 = vector.load %arg2[%c0_5, %c0_6] : memref<1x128xf32, #tpu.memory_space<vmem>>, vector<1x128xf32>
    %18 = vector.broadcast %17 : vector<1x128xf32> to vector<32x128xf32>
    %19 = arith.mulf %16, %18 : vector<32x128xf32>
    %c0_7 = arith.constant 0 : index
    %c0_8 = arith.constant 0 : index
    %20 = vector.load %arg3[%c0_7, %c0_8] : memref<1x128xf32, #tpu.memory_space<vmem>>, vector<1x128xf32>
    %21 = vector.broadcast %20 : vector<1x128xf32> to vector<32x128xf32>
    %22 = arith.addf %19, %21 : vector<32x128xf32>
    %c0_9 = arith.constant 0 : index
    %c0_10 = arith.constant 0 : index
    %23 = vector.load %arg4[%c0_9, %c0_10] : memref<32x128xf32, #tpu.memory_space<vmem>>, vector<32x128xf32>
    tpu.vector_store %arg4[%c0_9, %c0_10], %22 {strides = array<i32>} : memref<32x128xf32, #tpu.memory_space<vmem>>, vector<32x128xf32>,
    return
  }
  func.func @transform_0(%arg0: i32) -> (i32, i32) {
    %c0_i32 = arith.constant 0 : i32
    %c0_i32_0 = arith.constant 0 : i32
    return %arg0, %c0_i32 : i32, i32
  }
  func.func @transform_1(%arg0: i32) -> (i32, i32) {
    %c0_i32 = arith.constant 0 : i32
    %c0_i32_0 = arith.constant 0 : i32
    %c0_i32_1 = arith.constant 0 : i32
    return %c0_i32, %c0_i32_0 : i32, i32
  }
  func.func @transform_2(%arg0: i32) -> (i32, i32) {
    %c0_i32 = arith.constant 0 : i32
    %c0_i32_0 = arith.constant 0 : i32
    %c0_i32_1 = arith.constant 0 : i32
    return %c0_i32, %c0_i32_0 : i32, i32
  }
  func.func @transform_3(%arg0: i32) -> (i32, i32) {
    %c0_i32 = arith.constant 0 : i32
    %c0_i32_0 = arith.constant 0 : i32
    return %arg0, %c0_i32 : i32, i32
  }
}

module attributes {stable_mosaic.version = 11 : i64} {
  func.func @_matmul_kernel(%arg0: i32, %arg1: i32, %arg2: i32, %arg3: memref<32x128xf32, #tpu.memory_space<vmem>>, %arg4: memref<128x256xf32, #tpu.memory_space<vmem>>, %arg5: memref<1x256xf32, #tpu.memory_space<vmem>>, %arg6: memref<32x256xf32, #tpu.memory_space<vmem>>, %arg7: memref<32x256xf32, #tpu.memory_space<vmem>>) attributes {dimension_semantics = [#tpu.dimension_semantics<parallel>, #tpu.dimension_semantics<parallel>, #tpu.dimension_semantics<arbitrary>], iteration_bounds = array<i64: 1, 1, 1>, scalar_prefetch = 0 : i64, scratch_operands = 1 : i64, tpu.core_type = #tpu.core_type<tc>, window_params = [{transform_indices = @transform_0, window_bounds = array<i64: 32, 128>}, {transform_indices = @transform_1, window_bounds = array<i64: 128, 256>}, {transform_indices = @transform_2, window_bounds = array<i64: 1, 256>}, {transform_indices = @transform_3, window_bounds = array<i64: 32, 256>}]} {
    %c0_i32 = arith.constant 0 : i32
    %0 = arith.cmpi eq, %arg2, %c0_i32 : i32
    %1 = arith.extui %0 : i1 to i32
    %c0_i32_0 = arith.constant 0 : i32
    %2 = arith.cmpi ne, %1, %c0_i32_0 : i32
    scf.if %2 {
      %cst_10 = arith.constant 0.000000e+00 : f32
      %12 = vector.broadcast %cst_10 : f32 to vector<32x256xf32>
      %c0_11 = arith.constant 0 : index
      %c0_12 = arith.constant 0 : index
      %13 = vector.load %arg7[%c0_11, %c0_12] : memref<32x256xf32, #tpu.memory_space<vmem>>, vector<32x256xf32>
      tpu.vector_store %arg7[%c0_11, %c0_12], %12 {strides = array<i32>} : memref<32x256xf32, #tpu.memory_space<vmem>>, vector<32x256xf32>,
    } else {
    }
    %c0 = arith.constant 0 : index
    %c0_1 = arith.constant 0 : index
    %3 = vector.load %arg7[%c0, %c0_1] : memref<32x256xf32, #tpu.memory_space<vmem>>, vector<32x256xf32>
    %c0_2 = arith.constant 0 : index
    %c0_3 = arith.constant 0 : index
    %4 = vector.load %arg3[%c0_2, %c0_3] : memref<32x128xf32, #tpu.memory_space<vmem>>, vector<32x128xf32>
    %c0_4 = arith.constant 0 : index
    %c0_5 = arith.constant 0 : index
    %5 = vector.load %arg4[%c0_4, %c0_5] : memref<128x256xf32, #tpu.memory_space<vmem>>, vector<128x256xf32>
    %cst = arith.constant dense<0.000000e+00> : vector<32x256xf32>
    %6 = tpu.matmul %4, %5, %cst {dimension_numbers = #tpu.dot_dimension_numbers<[1], [0], [0], [1], [0, 0, 1, 1], [], []>} : vector<32x128xf32>, vector<128x256xf32>, vector<32x256xf32> -> vector<32x256xf32>
    %7 = arith.addf %3, %6 : vector<32x256xf32>
    %c0_6 = arith.constant 0 : index
    %c0_7 = arith.constant 0 : index
    %8 = vector.load %arg7[%c0_6, %c0_7] : memref<32x256xf32, #tpu.memory_space<vmem>>, vector<32x256xf32>
    tpu.vector_store %arg7[%c0_6, %c0_7], %7 {strides = array<i32>} : memref<32x256xf32, #tpu.memory_space<vmem>>, vector<32x256xf32>,
    %c0_i32_8 = arith.constant 0 : i32
    %9 = arith.cmpi eq, %arg2, %c0_i32_8 : i32
    %10 = arith.extui %9 : i1 to i32
    %c0_i32_9 = arith.constant 0 : i32
    %11 = arith.cmpi ne, %10, %c0_i32_9 : i32
    scf.if %11 {
      %c0_10 = arith.constant 0 : index
      %c0_11 = arith.constant 0 : index
      %12 = vector.load %arg7[%c0_10, %c0_11] : memref<32x256xf32, #tpu.memory_space<vmem>>, vector<32x256xf32>
      %c0_12 = arith.constant 0 : index
      %c0_13 = arith.constant 0 : index
      %13 = vector.load %arg5[%c0_12, %c0_13] : memref<1x256xf32, #tpu.memory_space<vmem>>, vector<1x256xf32>
      %14 = vector.broadcast %13 : vector<1x256xf32> to vector<32x256xf32>
      %15 = arith.addf %12, %14 : vector<32x256xf32>
      %c0_14 = arith.constant 0 : index
      %c0_15 = arith.constant 0 : index
      %16 = vector.load %arg6[%c0_14, %c0_15] : memref<32x256xf32, #tpu.memory_space<vmem>>, vector<32x256xf32>
      tpu.vector_store %arg6[%c0_14, %c0_15], %15 {strides = array<i32>} : memref<32x256xf32, #tpu.memory_space<vmem>>, vector<32x256xf32>,
    } else {
    }
    return
  }
  func.func @transform_0(%arg0: i32, %arg1: i32, %arg2: i32) -> (i32, i32) {
    %c0_i32 = arith.constant 0 : i32
    return %arg0, %arg2 : i32, i32
  }
  func.func @transform_1(%arg0: i32, %arg1: i32, %arg2: i32) -> (i32, i32) {
    %c0_i32 = arith.constant 0 : i32
    return %arg2, %arg1 : i32, i32
  }
  func.func @transform_2(%arg0: i32, %arg1: i32, %arg2: i32) -> (i32, i32) {
    %c0_i32 = arith.constant 0 : i32
    %c0_i32_0 = arith.constant 0 : i32
    return %c0_i32, %arg1 : i32, i32
  }
  func.func @transform_3(%arg0: i32, %arg1: i32, %arg2: i32) -> (i32, i32) {
    %c0_i32 = arith.constant 0 : i32
    return %arg0, %arg1 : i32, i32
  }
}

module attributes {stable_mosaic.version = 11 : i64} {
  func.func @_cross_attn_kernel(%arg0: i32, %arg1: memref<1x16x128xf32, #tpu.memory_space<vmem>>, %arg2: memref<1x16x256xf32, #tpu.memory_space<vmem>>, %arg3: memref<1x16x128xf32, #tpu.memory_space<vmem>>) attributes {dimension_semantics = [#tpu.dimension_semantics<parallel>], iteration_bounds = array<i64: 2>, scalar_prefetch = 0 : i64, scratch_operands = 0 : i64, tpu.core_type = #tpu.core_type<tc>, window_params = [{transform_indices = @transform_0, window_bounds = array<i64: 1, 16, 128>}, {transform_indices = @transform_1, window_bounds = array<i64: 1, 16, 256>}, {transform_indices = @transform_2, window_bounds = array<i64: 1, 16, 128>}]} {
    %c0 = arith.constant 0 : index
    %c0_0 = arith.constant 0 : index
    %c0_1 = arith.constant 0 : index
    %0 = vector.load %arg1[%c0, %c0_0, %c0_1] : memref<1x16x128xf32, #tpu.memory_space<vmem>>, vector<1x16x128xf32>
    %1 = vector.shape_cast %0 : vector<1x16x128xf32> to vector<16x128xf32>
    %c0_2 = arith.constant 0 : index
    %c0_3 = arith.constant 0 : index
    %c0_4 = arith.constant 0 : index
    %2 = vector.load %arg2[%c0_2, %c0_3, %c0_4] : memref<1x16x256xf32, #tpu.memory_space<vmem>>, vector<1x16x128xf32>
    %3 = vector.shape_cast %2 : vector<1x16x128xf32> to vector<16x128xf32>
    %c0_5 = arith.constant 0 : index
    %c0_6 = arith.constant 0 : index
    %c128 = arith.constant 128 : index
    %4 = vector.load %arg2[%c0_5, %c0_6, %c128] : memref<1x16x256xf32, #tpu.memory_space<vmem>>, vector<1x16x128xf32>
    %5 = vector.shape_cast %4 : vector<1x16x128xf32> to vector<16x128xf32>
    %6 = vector.extract_strided_slice %1 {offsets = [0, 0], sizes = [16, 16], strides = [1, 1]} : vector<16x128xf32> to vector<16x16xf32>
    %cst = arith.constant 2.500000e-01 : f32
    %7 = vector.broadcast %cst : f32 to vector<16x16xf32>
    %8 = arith.mulf %6, %7 : vector<16x16xf32>
    %9 = vector.extract_strided_slice %3 {offsets = [0, 0], sizes = [16, 16], strides = [1, 1]} : vector<16x128xf32> to vector<16x16xf32>
    %10 = vector.extract_strided_slice %5 {offsets = [0, 0], sizes = [16, 16], strides = [1, 1]} : vector<16x128xf32> to vector<16x16xf32>
    %cst_7 = arith.constant dense<0.000000e+00> : vector<16x16xf32>
    %11 = tpu.matmul %8, %9, %cst_7 {dimension_numbers = #tpu.dot_dimension_numbers<[1], [1], [0], [0], [0, 0, 1, 0], [], []>} : vector<16x16xf32>, vector<16x16xf32>, vector<16x16xf32> -> vector<16x16xf32>
    %cst_8 = arith.constant dense<0xFF800000> : vector<16xf32>
    %12 = vector.multi_reduction <maximumf>, %11, %cst_8 [1] : vector<16x16xf32> to vector<16xf32>
    %13 = vector.shape_cast %12 : vector<16xf32> to vector<16x1xf32>
    %14 = vector.broadcast %13 : vector<16x1xf32> to vector<16x16xf32>
    %15 = arith.subf %11, %14 : vector<16x16xf32>
    %16 = math.exp %15 : vector<16x16xf32>
    %cst_9 = arith.constant dense<0.000000e+00> : vector<16xf32>
    %17 = vector.multi_reduction <add>, %16, %cst_9 [1] : vector<16x16xf32> to vector<16xf32>
    %18 = vector.shape_cast %17 : vector<16xf32> to vector<16x1xf32>
    %19 = tpu.reciprocal %18 {approx = true} : vector<16x1xf32> -> vector<16x1xf32>
    %20 = vector.broadcast %19 : vector<16x1xf32> to vector<16x16xf32>
    %21 = arith.mulf %16, %20 : vector<16x16xf32>
    %cst_10 = arith.constant dense<0.000000e+00> : vector<16x16xf32>
    %22 = tpu.matmul %21, %10, %cst_10 {dimension_numbers = #tpu.dot_dimension_numbers<[1], [0], [0], [1], [0, 0, 1, 1], [], []>} : vector<16x16xf32>, vector<16x16xf32>, vector<16x16xf32> -> vector<16x16xf32>
    %23 = vector.extract_strided_slice %1 {offsets = [0, 16], sizes = [16, 16], strides = [1, 1]} : vector<16x128xf32> to vector<16x16xf32>
    %cst_11 = arith.constant 2.500000e-01 : f32
    %24 = vector.broadcast %cst_11 : f32 to vector<16x16xf32>
    %25 = arith.mulf %23, %24 : vector<16x16xf32>
    %26 = vector.extract_strided_slice %3 {offsets = [0, 16], sizes = [16, 16], strides = [1, 1]} : vector<16x128xf32> to vector<16x16xf32>
    %27 = vector.extract_strided_slice %5 {offsets = [0, 16], sizes = [16, 16], strides = [1, 1]} : vector<16x128xf32> to vector<16x16xf32>
    %cst_12 = arith.constant dense<0.000000e+00> : vector<16x16xf32>
    %28 = tpu.matmul %25, %26, %cst_12 {dimension_numbers = #tpu.dot_dimension_numbers<[1], [1], [0], [0], [0, 0, 1, 0], [], []>} : vector<16x16xf32>, vector<16x16xf32>, vector<16x16xf32> -> vector<16x16xf32>
    %cst_13 = arith.constant dense<0xFF800000> : vector<16xf32>
    %29 = vector.multi_reduction <maximumf>, %28, %cst_13 [1] : vector<16x16xf32> to vector<16xf32>
    %30 = vector.shape_cast %29 : vector<16xf32> to vector<16x1xf32>
    %31 = vector.broadcast %30 : vector<16x1xf32> to vector<16x16xf32>
    %32 = arith.subf %28, %31 : vector<16x16xf32>
    %33 = math.exp %32 : vector<16x16xf32>
    %cst_14 = arith.constant dense<0.000000e+00> : vector<16xf32>
    %34 = vector.multi_reduction <add>, %33, %cst_14 [1] : vector<16x16xf32> to vector<16xf32>
    %35 = vector.shape_cast %34 : vector<16xf32> to vector<16x1xf32>
    %36 = tpu.reciprocal %35 {approx = true} : vector<16x1xf32> -> vector<16x1xf32>
    %37 = vector.broadcast %36 : vector<16x1xf32> to vector<16x16xf32>
    %38 = arith.mulf %33, %37 : vector<16x16xf32>
    %cst_15 = arith.constant dense<0.000000e+00> : vector<16x16xf32>
    %39 = tpu.matmul %38, %27, %cst_15 {dimension_numbers = #tpu.dot_dimension_numbers<[1], [0], [0], [1], [0, 0, 1, 1], [], []>} : vector<16x16xf32>, vector<16x16xf32>, vector<16x16xf32> -> vector<16x16xf32>
    %40 = vector.extract_strided_slice %1 {offsets = [0, 32], sizes = [16, 16], strides = [1, 1]} : vector<16x128xf32> to vector<16x16xf32>
    %cst_16 = arith.constant 2.500000e-01 : f32
    %41 = vector.broadcast %cst_16 : f32 to vector<16x16xf32>
    %42 = arith.mulf %40, %41 : vector<16x16xf32>
    %43 = vector.extract_strided_slice %3 {offsets = [0, 32], sizes = [16, 16], strides = [1, 1]} : vector<16x128xf32> to vector<16x16xf32>
    %44 = vector.extract_strided_slice %5 {offsets = [0, 32], sizes = [16, 16], strides = [1, 1]} : vector<16x128xf32> to vector<16x16xf32>
    %cst_17 = arith.constant dense<0.000000e+00> : vector<16x16xf32>
    %45 = tpu.matmul %42, %43, %cst_17 {dimension_numbers = #tpu.dot_dimension_numbers<[1], [1], [0], [0], [0, 0, 1, 0], [], []>} : vector<16x16xf32>, vector<16x16xf32>, vector<16x16xf32> -> vector<16x16xf32>
    %cst_18 = arith.constant dense<0xFF800000> : vector<16xf32>
    %46 = vector.multi_reduction <maximumf>, %45, %cst_18 [1] : vector<16x16xf32> to vector<16xf32>
    %47 = vector.shape_cast %46 : vector<16xf32> to vector<16x1xf32>
    %48 = vector.broadcast %47 : vector<16x1xf32> to vector<16x16xf32>
    %49 = arith.subf %45, %48 : vector<16x16xf32>
    %50 = math.exp %49 : vector<16x16xf32>
    %cst_19 = arith.constant dense<0.000000e+00> : vector<16xf32>
    %51 = vector.multi_reduction <add>, %50, %cst_19 [1] : vector<16x16xf32> to vector<16xf32>
    %52 = vector.shape_cast %51 : vector<16xf32> to vector<16x1xf32>
    %53 = tpu.reciprocal %52 {approx = true} : vector<16x1xf32> -> vector<16x1xf32>
    %54 = vector.broadcast %53 : vector<16x1xf32> to vector<16x16xf32>
    %55 = arith.mulf %50, %54 : vector<16x16xf32>
    %cst_20 = arith.constant dense<0.000000e+00> : vector<16x16xf32>
    %56 = tpu.matmul %55, %44, %cst_20 {dimension_numbers = #tpu.dot_dimension_numbers<[1], [0], [0], [1], [0, 0, 1, 1], [], []>} : vector<16x16xf32>, vector<16x16xf32>, vector<16x16xf32> -> vector<16x16xf32>
    %57 = vector.extract_strided_slice %1 {offsets = [0, 48], sizes = [16, 16], strides = [1, 1]} : vector<16x128xf32> to vector<16x16xf32>
    %cst_21 = arith.constant 2.500000e-01 : f32
    %58 = vector.broadcast %cst_21 : f32 to vector<16x16xf32>
    %59 = arith.mulf %57, %58 : vector<16x16xf32>
    %60 = vector.extract_strided_slice %3 {offsets = [0, 48], sizes = [16, 16], strides = [1, 1]} : vector<16x128xf32> to vector<16x16xf32>
    %61 = vector.extract_strided_slice %5 {offsets = [0, 48], sizes = [16, 16], strides = [1, 1]} : vector<16x128xf32> to vector<16x16xf32>
    %cst_22 = arith.constant dense<0.000000e+00> : vector<16x16xf32>
    %62 = tpu.matmul %59, %60, %cst_22 {dimension_numbers = #tpu.dot_dimension_numbers<[1], [1], [0], [0], [0, 0, 1, 0], [], []>} : vector<16x16xf32>, vector<16x16xf32>, vector<16x16xf32> -> vector<16x16xf32>
    %cst_23 = arith.constant dense<0xFF800000> : vector<16xf32>
    %63 = vector.multi_reduction <maximumf>, %62, %cst_23 [1] : vector<16x16xf32> to vector<16xf32>
    %64 = vector.shape_cast %63 : vector<16xf32> to vector<16x1xf32>
    %65 = vector.broadcast %64 : vector<16x1xf32> to vector<16x16xf32>
    %66 = arith.subf %62, %65 : vector<16x16xf32>
    %67 = math.exp %66 : vector<16x16xf32>
    %cst_24 = arith.constant dense<0.000000e+00> : vector<16xf32>
    %68 = vector.multi_reduction <add>, %67, %cst_24 [1] : vector<16x16xf32> to vector<16xf32>
    %69 = vector.shape_cast %68 : vector<16xf32> to vector<16x1xf32>
    %70 = tpu.reciprocal %69 {approx = true} : vector<16x1xf32> -> vector<16x1xf32>
    %71 = vector.broadcast %70 : vector<16x1xf32> to vector<16x16xf32>
    %72 = arith.mulf %67, %71 : vector<16x16xf32>
    %cst_25 = arith.constant dense<0.000000e+00> : vector<16x16xf32>
    %73 = tpu.matmul %72, %61, %cst_25 {dimension_numbers = #tpu.dot_dimension_numbers<[1], [0], [0], [1], [0, 0, 1, 1], [], []>} : vector<16x16xf32>, vector<16x16xf32>, vector<16x16xf32> -> vector<16x16xf32>
    %74 = vector.extract_strided_slice %1 {offsets = [0, 64], sizes = [16, 16], strides = [1, 1]} : vector<16x128xf32> to vector<16x16xf32>
    %cst_26 = arith.constant 2.500000e-01 : f32
    %75 = vector.broadcast %cst_26 : f32 to vector<16x16xf32>
    %76 = arith.mulf %74, %75 : vector<16x16xf32>
    %77 = vector.extract_strided_slice %3 {offsets = [0, 64], sizes = [16, 16], strides = [1, 1]} : vector<16x128xf32> to vector<16x16xf32>
    %78 = vector.extract_strided_slice %5 {offsets = [0, 64], sizes = [16, 16], strides = [1, 1]} : vector<16x128xf32> to vector<16x16xf32>
    %cst_27 = arith.constant dense<0.000000e+00> : vector<16x16xf32>
    %79 = tpu.matmul %76, %77, %cst_27 {dimension_numbers = #tpu.dot_dimension_numbers<[1], [1], [0], [0], [0, 0, 1, 0], [], []>} : vector<16x16xf32>, vector<16x16xf32>, vector<16x16xf32> -> vector<16x16xf32>
    %cst_28 = arith.constant dense<0xFF800000> : vector<16xf32>
    %80 = vector.multi_reduction <maximumf>, %79, %cst_28 [1] : vector<16x16xf32> to vector<16xf32>
    %81 = vector.shape_cast %80 : vector<16xf32> to vector<16x1xf32>
    %82 = vector.broadcast %81 : vector<16x1xf32> to vector<16x16xf32>
    %83 = arith.subf %79, %82 : vector<16x16xf32>
    %84 = math.exp %83 : vector<16x16xf32>
    %cst_29 = arith.constant dense<0.000000e+00> : vector<16xf32>
    %85 = vector.multi_reduction <add>, %84, %cst_29 [1] : vector<16x16xf32> to vector<16xf32>
    %86 = vector.shape_cast %85 : vector<16xf32> to vector<16x1xf32>
    %87 = tpu.reciprocal %86 {approx = true} : vector<16x1xf32> -> vector<16x1xf32>
    %88 = vector.broadcast %87 : vector<16x1xf32> to vector<16x16xf32>
    %89 = arith.mulf %84, %88 : vector<16x16xf32>
    %cst_30 = arith.constant dense<0.000000e+00> : vector<16x16xf32>
    %90 = tpu.matmul %89, %78, %cst_30 {dimension_numbers = #tpu.dot_dimension_numbers<[1], [0], [0], [1], [0, 0, 1, 1], [], []>} : vector<16x16xf32>, vector<16x16xf32>, vector<16x16xf32> -> vector<16x16xf32>
    %91 = vector.extract_strided_slice %1 {offsets = [0, 80], sizes = [16, 16], strides = [1, 1]} : vector<16x128xf32> to vector<16x16xf32>
    %cst_31 = arith.constant 2.500000e-01 : f32
    %92 = vector.broadcast %cst_31 : f32 to vector<16x16xf32>
    %93 = arith.mulf %91, %92 : vector<16x16xf32>
    %94 = vector.extract_strided_slice %3 {offsets = [0, 80], sizes = [16, 16], strides = [1, 1]} : vector<16x128xf32> to vector<16x16xf32>
    %95 = vector.extract_strided_slice %5 {offsets = [0, 80], sizes = [16, 16], strides = [1, 1]} : vector<16x128xf32> to vector<16x16xf32>
    %cst_32 = arith.constant dense<0.000000e+00> : vector<16x16xf32>
    %96 = tpu.matmul %93, %94, %cst_32 {dimension_numbers = #tpu.dot_dimension_numbers<[1], [1], [0], [0], [0, 0, 1, 0], [], []>} : vector<16x16xf32>, vector<16x16xf32>, vector<16x16xf32> -> vector<16x16xf32>
    %cst_33 = arith.constant dense<0xFF800000> : vector<16xf32>
    %97 = vector.multi_reduction <maximumf>, %96, %cst_33 [1] : vector<16x16xf32> to vector<16xf32>
    %98 = vector.shape_cast %97 : vector<16xf32> to vector<16x1xf32>
    %99 = vector.broadcast %98 : vector<16x1xf32> to vector<16x16xf32>
    %100 = arith.subf %96, %99 : vector<16x16xf32>
    %101 = math.exp %100 : vector<16x16xf32>
    %cst_34 = arith.constant dense<0.000000e+00> : vector<16xf32>
    %102 = vector.multi_reduction <add>, %101, %cst_34 [1] : vector<16x16xf32> to vector<16xf32>
    %103 = vector.shape_cast %102 : vector<16xf32> to vector<16x1xf32>
    %104 = tpu.reciprocal %103 {approx = true} : vector<16x1xf32> -> vector<16x1xf32>
    %105 = vector.broadcast %104 : vector<16x1xf32> to vector<16x16xf32>
    %106 = arith.mulf %101, %105 : vector<16x16xf32>
    %cst_35 = arith.constant dense<0.000000e+00> : vector<16x16xf32>
    %107 = tpu.matmul %106, %95, %cst_35 {dimension_numbers = #tpu.dot_dimension_numbers<[1], [0], [0], [1], [0, 0, 1, 1], [], []>} : vector<16x16xf32>, vector<16x16xf32>, vector<16x16xf32> -> vector<16x16xf32>
    %108 = vector.extract_strided_slice %1 {offsets = [0, 96], sizes = [16, 16], strides = [1, 1]} : vector<16x128xf32> to vector<16x16xf32>
    %cst_36 = arith.constant 2.500000e-01 : f32
    %109 = vector.broadcast %cst_36 : f32 to vector<16x16xf32>
    %110 = arith.mulf %108, %109 : vector<16x16xf32>
    %111 = vector.extract_strided_slice %3 {offsets = [0, 96], sizes = [16, 16], strides = [1, 1]} : vector<16x128xf32> to vector<16x16xf32>
    %112 = vector.extract_strided_slice %5 {offsets = [0, 96], sizes = [16, 16], strides = [1, 1]} : vector<16x128xf32> to vector<16x16xf32>
    %cst_37 = arith.constant dense<0.000000e+00> : vector<16x16xf32>
    %113 = tpu.matmul %110, %111, %cst_37 {dimension_numbers = #tpu.dot_dimension_numbers<[1], [1], [0], [0], [0, 0, 1, 0], [], []>} : vector<16x16xf32>, vector<16x16xf32>, vector<16x16xf32> -> vector<16x16xf32>
    %cst_38 = arith.constant dense<0xFF800000> : vector<16xf32>
    %114 = vector.multi_reduction <maximumf>, %113, %cst_38 [1] : vector<16x16xf32> to vector<16xf32>
    %115 = vector.shape_cast %114 : vector<16xf32> to vector<16x1xf32>
    %116 = vector.broadcast %115 : vector<16x1xf32> to vector<16x16xf32>
    %117 = arith.subf %113, %116 : vector<16x16xf32>
    %118 = math.exp %117 : vector<16x16xf32>
    %cst_39 = arith.constant dense<0.000000e+00> : vector<16xf32>
    %119 = vector.multi_reduction <add>, %118, %cst_39 [1] : vector<16x16xf32> to vector<16xf32>
    %120 = vector.shape_cast %119 : vector<16xf32> to vector<16x1xf32>
    %121 = tpu.reciprocal %120 {approx = true} : vector<16x1xf32> -> vector<16x1xf32>
    %122 = vector.broadcast %121 : vector<16x1xf32> to vector<16x16xf32>
    %123 = arith.mulf %118, %122 : vector<16x16xf32>
    %cst_40 = arith.constant dense<0.000000e+00> : vector<16x16xf32>
    %124 = tpu.matmul %123, %112, %cst_40 {dimension_numbers = #tpu.dot_dimension_numbers<[1], [0], [0], [1], [0, 0, 1, 1], [], []>} : vector<16x16xf32>, vector<16x16xf32>, vector<16x16xf32> -> vector<16x16xf32>
    %125 = vector.extract_strided_slice %1 {offsets = [0, 112], sizes = [16, 16], strides = [1, 1]} : vector<16x128xf32> to vector<16x16xf32>
    %cst_41 = arith.constant 2.500000e-01 : f32
    %126 = vector.broadcast %cst_41 : f32 to vector<16x16xf32>
    %127 = arith.mulf %125, %126 : vector<16x16xf32>
    %128 = vector.extract_strided_slice %3 {offsets = [0, 112], sizes = [16, 16], strides = [1, 1]} : vector<16x128xf32> to vector<16x16xf32>
    %129 = vector.extract_strided_slice %5 {offsets = [0, 112], sizes = [16, 16], strides = [1, 1]} : vector<16x128xf32> to vector<16x16xf32>
    %cst_42 = arith.constant dense<0.000000e+00> : vector<16x16xf32>
    %130 = tpu.matmul %127, %128, %cst_42 {dimension_numbers = #tpu.dot_dimension_numbers<[1], [1], [0], [0], [0, 0, 1, 0], [], []>} : vector<16x16xf32>, vector<16x16xf32>, vector<16x16xf32> -> vector<16x16xf32>
    %cst_43 = arith.constant dense<0xFF800000> : vector<16xf32>
    %131 = vector.multi_reduction <maximumf>, %130, %cst_43 [1] : vector<16x16xf32> to vector<16xf32>
    %132 = vector.shape_cast %131 : vector<16xf32> to vector<16x1xf32>
    %133 = vector.broadcast %132 : vector<16x1xf32> to vector<16x16xf32>
    %134 = arith.subf %130, %133 : vector<16x16xf32>
    %135 = math.exp %134 : vector<16x16xf32>
    %cst_44 = arith.constant dense<0.000000e+00> : vector<16xf32>
    %136 = vector.multi_reduction <add>, %135, %cst_44 [1] : vector<16x16xf32> to vector<16xf32>
    %137 = vector.shape_cast %136 : vector<16xf32> to vector<16x1xf32>
    %138 = tpu.reciprocal %137 {approx = true} : vector<16x1xf32> -> vector<16x1xf32>
    %139 = vector.broadcast %138 : vector<16x1xf32> to vector<16x16xf32>
    %140 = arith.mulf %135, %139 : vector<16x16xf32>
    %cst_45 = arith.constant dense<0.000000e+00> : vector<16x16xf32>
    %141 = tpu.matmul %140, %129, %cst_45 {dimension_numbers = #tpu.dot_dimension_numbers<[1], [0], [0], [1], [0, 0, 1, 1], [], []>} : vector<16x16xf32>, vector<16x16xf32>, vector<16x16xf32> -> vector<16x16xf32>
    %142 = tpu.concatenate %22, %39, %56, %73, %90, %107, %124, %141 in 1 : vector<16x16xf32>, vector<16x16xf32>, vector<16x16xf32>, vector<16x16xf32>, vector<16x16xf32>, vector<16x16xf32>, vector<16x16xf32>, vector<16x16xf32> -> vector<16x128xf32>
    %c0_46 = arith.constant 0 : index
    %c0_47 = arith.constant 0 : index
    %c0_48 = arith.constant 0 : index
    %143 = vector.load %arg3[%c0_46, %c0_47, %c0_48] : memref<1x16x128xf32, #tpu.memory_space<vmem>>, vector<1x16x128xf32>
    %144 = vector.shape_cast %143 : vector<1x16x128xf32> to vector<16x128xf32>
    %145 = vector.shape_cast %142 : vector<16x128xf32> to vector<1x16x128xf32>
    tpu.vector_store %arg3[%c0_46, %c0_47, %c0_48], %145 {strides = array<i32>} : memref<1x16x128xf32, #tpu.memory_space<vmem>>, vector<1x16x128xf32>,
    return
  }
  func.func @transform_0(%arg0: i32) -> (i32, i32, i32) {
    %c0_i32 = arith.constant 0 : i32
    %c0_i32_0 = arith.constant 0 : i32
    %c0_i32_1 = arith.constant 0 : i32
    return %arg0, %c0_i32, %c0_i32_0 : i32, i32, i32
  }
  func.func @transform_1(%arg0: i32) -> (i32, i32, i32) {
    %c0_i32 = arith.constant 0 : i32
    %c0_i32_0 = arith.constant 0 : i32
    %c0_i32_1 = arith.constant 0 : i32
    return %arg0, %c0_i32, %c0_i32_0 : i32, i32, i32
  }
  func.func @transform_2(%arg0: i32) -> (i32, i32, i32) {
    %c0_i32 = arith.constant 0 : i32
    %c0_i32_0 = arith.constant 0 : i32
    %c0_i32_1 = arith.constant 0 : i32
    return %arg0, %c0_i32, %c0_i32_0 : i32, i32, i32
  }
}

module attributes {stable_mosaic.version = 11 : i64} {
  func.func @_matmul_kernel(%arg0: i32, %arg1: i32, %arg2: i32, %arg3: memref<32x128xf32, #tpu.memory_space<vmem>>, %arg4: memref<128x4xf32, #tpu.memory_space<vmem>>, %arg5: memref<1x4xf32, #tpu.memory_space<vmem>>, %arg6: memref<32x4xf32, #tpu.memory_space<vmem>>, %arg7: memref<32x4xf32, #tpu.memory_space<vmem>>) attributes {dimension_semantics = [#tpu.dimension_semantics<parallel>, #tpu.dimension_semantics<parallel>, #tpu.dimension_semantics<arbitrary>], iteration_bounds = array<i64: 1, 1, 1>, scalar_prefetch = 0 : i64, scratch_operands = 1 : i64, tpu.core_type = #tpu.core_type<tc>, window_params = [{transform_indices = @transform_0, window_bounds = array<i64: 32, 128>}, {transform_indices = @transform_1, window_bounds = array<i64: 128, 4>}, {transform_indices = @transform_2, window_bounds = array<i64: 1, 4>}, {transform_indices = @transform_3, window_bounds = array<i64: 32, 4>}]} {
    %c0_i32 = arith.constant 0 : i32
    %0 = arith.cmpi eq, %arg2, %c0_i32 : i32
    %1 = arith.extui %0 : i1 to i32
    %c0_i32_0 = arith.constant 0 : i32
    %2 = arith.cmpi ne, %1, %c0_i32_0 : i32
    scf.if %2 {
      %cst_10 = arith.constant 0.000000e+00 : f32
      %12 = vector.broadcast %cst_10 : f32 to vector<32x4xf32>
      %c0_11 = arith.constant 0 : index
      %c0_12 = arith.constant 0 : index
      %13 = vector.load %arg7[%c0_11, %c0_12] : memref<32x4xf32, #tpu.memory_space<vmem>>, vector<32x4xf32>
      tpu.vector_store %arg7[%c0_11, %c0_12], %12 {strides = array<i32>} : memref<32x4xf32, #tpu.memory_space<vmem>>, vector<32x4xf32>,
    } else {
    }
    %c0 = arith.constant 0 : index
    %c0_1 = arith.constant 0 : index
    %3 = vector.load %arg7[%c0, %c0_1] : memref<32x4xf32, #tpu.memory_space<vmem>>, vector<32x4xf32>
    %c0_2 = arith.constant 0 : index
    %c0_3 = arith.constant 0 : index
    %4 = vector.load %arg3[%c0_2, %c0_3] : memref<32x128xf32, #tpu.memory_space<vmem>>, vector<32x128xf32>
    %c0_4 = arith.constant 0 : index
    %c0_5 = arith.constant 0 : index
    %5 = vector.load %arg4[%c0_4, %c0_5] : memref<128x4xf32, #tpu.memory_space<vmem>>, vector<128x4xf32>
    %cst = arith.constant dense<0.000000e+00> : vector<32x4xf32>
    %6 = tpu.matmul %4, %5, %cst {dimension_numbers = #tpu.dot_dimension_numbers<[1], [0], [0], [1], [0, 0, 1, 1], [], []>} : vector<32x128xf32>, vector<128x4xf32>, vector<32x4xf32> -> vector<32x4xf32>
    %7 = arith.addf %3, %6 : vector<32x4xf32>
    %c0_6 = arith.constant 0 : index
    %c0_7 = arith.constant 0 : index
    %8 = vector.load %arg7[%c0_6, %c0_7] : memref<32x4xf32, #tpu.memory_space<vmem>>, vector<32x4xf32>
    tpu.vector_store %arg7[%c0_6, %c0_7], %7 {strides = array<i32>} : memref<32x4xf32, #tpu.memory_space<vmem>>, vector<32x4xf32>,
    %c0_i32_8 = arith.constant 0 : i32
    %9 = arith.cmpi eq, %arg2, %c0_i32_8 : i32
    %10 = arith.extui %9 : i1 to i32
    %c0_i32_9 = arith.constant 0 : i32
    %11 = arith.cmpi ne, %10, %c0_i32_9 : i32
    scf.if %11 {
      %c0_10 = arith.constant 0 : index
      %c0_11 = arith.constant 0 : index
      %12 = vector.load %arg7[%c0_10, %c0_11] : memref<32x4xf32, #tpu.memory_space<vmem>>, vector<32x4xf32>
      %c0_12 = arith.constant 0 : index
      %c0_13 = arith.constant 0 : index
      %13 = vector.load %arg5[%c0_12, %c0_13] : memref<1x4xf32, #tpu.memory_space<vmem>>, vector<1x4xf32>
      %14 = vector.broadcast %13 : vector<1x4xf32> to vector<32x4xf32>
      %15 = arith.addf %12, %14 : vector<32x4xf32>
      %c0_14 = arith.constant 0 : index
      %c0_15 = arith.constant 0 : index
      %16 = vector.load %arg6[%c0_14, %c0_15] : memref<32x4xf32, #tpu.memory_space<vmem>>, vector<32x4xf32>
      tpu.vector_store %arg6[%c0_14, %c0_15], %15 {strides = array<i32>} : memref<32x4xf32, #tpu.memory_space<vmem>>, vector<32x4xf32>,
    } else {
    }
    return
  }
  func.func @transform_0(%arg0: i32, %arg1: i32, %arg2: i32) -> (i32, i32) {
    %c0_i32 = arith.constant 0 : i32
    return %arg0, %arg2 : i32, i32
  }
  func.func @transform_1(%arg0: i32, %arg1: i32, %arg2: i32) -> (i32, i32) {
    %c0_i32 = arith.constant 0 : i32
    return %arg2, %arg1 : i32, i32
  }
  func.func @transform_2(%arg0: i32, %arg1: i32, %arg2: i32) -> (i32, i32) {
    %c0_i32 = arith.constant 0 : i32
    %c0_i32_0 = arith.constant 0 : i32
    return %c0_i32, %arg1 : i32, i32
  }
  func.func @transform_3(%arg0: i32, %arg1: i32, %arg2: i32) -> (i32, i32) {
    %c0_i32 = arith.constant 0 : i32
    return %arg0, %arg1 : i32, i32
  }
}

</mosaic_0001>

<llo_original>
// kernel: transformer_forward.31
$region0: #{transformer_forward.31}
  #allocation0 [shape = 'u32[]', space=smem, size = 0x4, offset = 0x4, fixed_abs, tag = 'smem constant byte address 0x4 - core index']
  #allocation1 [shape = 'u32[72,128]{1,0:T(1,128)}', space=vmem, size = 0x9000, scoped, tag = 'internal scratch']
  #allocation2 [shape = 'f32[32,128]{1,0:T(8,128)}', space=vmem, size = 0x4000, scoped, tag = 'scratch operand']
  %s0 = inlined_call_operand.vmem [shape: f32[32,12], index: 0, kind: input, shape index: {}]
  %s1 = inlined_call_operand.vmem [shape: f32[12,128], index: 1, kind: input, shape index: {}]
  %s2 = inlined_call_operand.vmem [shape: f32[32,128], index: 2, kind: output, shape index: {}]
  %s3 = sld [smem:[#allocation0]]
  $region26: #{transformer_forward.31} parent=0
    _
  %s5 = ssub.s32 1, %s3
  %s6 = scalar_select 0, %s5, %s3
  // Predicated region
  $region2: #{transformer_forward.31} parent=0 // pred_check
    _
  $region3: #{transformer_forward.31} parent=0 // pred_check_branch
    %8 = sbr.rel (0) target = $region5
  $region4: #{transformer_forward.31} parent=0 // pred_region
    _
  $region5: #{transformer_forward.31} parent=0 // pred_fallthru
    _
  // Predicated region
  $region6: #{transformer_forward.31} parent=0 // pred_check
    _
  $region7: #{transformer_forward.31} parent=0 // pred_check_branch
    %10 = sbr.rel (0) target = $region9
  $region8: #{transformer_forward.31} parent=0 // pred_region
    _
  $region9: #{transformer_forward.31} parent=0 // pred_fallthru
    _
  %p11 = scmp.eq.s32.totalorder 0, 0
  // Predicated region
  $region10: #{transformer_forward.31} parent=0 // pred_check
    %p12 = pneg %p11
  $region11: #{transformer_forward.31} parent=0 // pred_check_branch
    %14 = sbr.rel (%p12) target = $region13
  $region12: #{transformer_forward.31} parent=0 // pred_region
    %15 = vst [vmem:[#allocation2] sm:$0xff] 0.0
    %16 = vst [vmem:[#allocation2 + $0x8] sm:$0xff] 0.0
    %17 = vst [vmem:[#allocation2 + $0x10] sm:$0xff] 0.0
    %18 = vst [vmem:[#allocation2 + $0x18] sm:$0xff] 0.0
  $region13: #{transformer_forward.31} parent=0 // pred_fallthru
    _
  %v19 = vld [vmem:[#allocation2] sm:$0xff]
  %v20 = vld [vmem:[#allocation2 + $0x8] sm:$0xff]
  %v21 = vld [vmem:[#allocation2 + $0x10] sm:$0xff]
  %v22 = vld [vmem:[#allocation2 + $0x18] sm:$0xff]
  %v23 = vld [vmem:[%s0] sm:$0xff]
  %v24 = vld [vmem:[%s0 + $0x8] sm:$0xff]
  %v25 = vld [vmem:[%s0 + $0x10] sm:$0xff]
  %v26 = vld [vmem:[%s0 + $0x18] sm:$0xff]
  %v27 = vld [vmem:[%s1] sm:$0xff]
  %v28 = vld [vmem:[%s1 + $0x8] sm:$0xf]
  %vm29 = vcmask 97280
  %v31 = vsel %vm29, %v23, 0
  %v34 = vsel %vm29, %v24, 0
  %v37 = vsel %vm29, %v25, 0
  %v40 = vsel %vm29, %v26, 0
  %vm42 = vcmask 1043456
  %v44 = vsel %vm42, %v28, 0
  %46 = vmatpush.msra.mxu0 0.0
  %47 = vmatpush.msra.mxu0 0.0
  %48 = vmatpush.msra.mxu0 0.0
  %49 = vmatpush.msra.mxu0 0.0
  %50 = vmatpush.msra.mxu0 0.0
  %51 = vmatpush.msra.mxu0 0.0
  %52 = vmatpush.msra.mxu0 0.0
  %53 = vmatpush.msra.mxu0 0.0
  %54 = vmatpush.msra.mxu0 0.0
  %55 = vmatpush.msra.mxu0 0.0
  %56 = vmatpush.msra.mxu0 0.0
  %57 = vmatpush.msra.mxu0 0.0
  %58 = vmatpush.msra.mxu0 0.0
  %59 = vmatpush.msra.mxu0 0.0
  %60 = vmatpush.msra.mxu0 %v44
  %61 = vmatpush.msra.mxu0 %v27
  %62 = vmatmul.f32.gmra.mxu0 %v31
  %v63 = vpop.f32.mrf.mxu0
  %v64 = vadd.f32 0.0, %v63
  %65 = vmatmul.f32.gmra.mxu0 %v34
  %v66 = vpop.f32.mrf.mxu0
  %v67 = vadd.f32 0.0, %v66
  %68 = vmatmul.f32.gmra.mxu0 %v37
  %v69 = vpop.f32.mrf.mxu0
  %v70 = vadd.f32 0.0, %v69
  %71 = vmatmul.f32.gmra.mxu0 %v40
  %v72 = vpop.f32.mrf.mxu0
  %v73 = vadd.f32 0.0, %v72
  %74 = vdwg.mxu0
  %v75 = vadd.f32 %v19, %v64
  %v76 = vadd.f32 %v20, %v67
  %v77 = vadd.f32 %v21, %v70
  %v78 = vadd.f32 %v22, %v73
  %79 = vst [vmem:[#allocation2] sm:$0xff] %v75
  %80 = vst [vmem:[#allocation2 + $0x8] sm:$0xff] %v76
  %81 = vst [vmem:[#allocation2 + $0x10] sm:$0xff] %v77
  %82 = vst [vmem:[#allocation2 + $0x18] sm:$0xff] %v78
  // Predicated region
  $region14: #{transformer_forward.31} parent=0 // pred_check
    %p83 = pneg %p11
  $region15: #{transformer_forward.31} parent=0 // pred_check_branch
    %85 = sbr.rel (%p83) target = $region17
  $region16: #{transformer_forward.31} parent=0 // pred_region
    %v86 = vld [vmem:[#allocation2] sm:$0xff]
    %v87 = vld [vmem:[#allocation2 + $0x8] sm:$0xff]
    %v88 = vld [vmem:[#allocation2 + $0x10] sm:$0xff]
    %v89 = vld [vmem:[#allocation2 + $0x18] sm:$0xff]
    %90 = vst [vmem:[%s2] sm:$0xff] %v86
    %91 = vst [vmem:[%s2 + $0x8] sm:$0xff] %v87
    %92 = vst [vmem:[%s2 + $0x10] sm:$0xff] %v88
    %93 = vst [vmem:[%s2 + $0x18] sm:$0xff] %v89
  $region17: #{transformer_forward.31} parent=0 // pred_fallthru
    _
  // Predicated region
  $region18: #{transformer_forward.31} parent=0 // pred_check
    _
  $region19: #{transformer_forward.31} parent=0 // pred_check_branch
    %95 = sbr.rel (0) target = $region21
  $region20: #{transformer_forward.31} parent=0 // pred_region
    _
  $region21: #{transformer_forward.31} parent=0 // pred_fallthru
    _
  // Predicated region
  $region22: #{transformer_forward.31} parent=0 // pred_check
    _
  $region23: #{transformer_forward.31} parent=0 // pred_check_branch
    %97 = sbr.rel (0) target = $region25
  $region24: #{transformer_forward.31} parent=0 // pred_region
    _
  $region25: #{transformer_forward.31} parent=0 // pred_fallthru
    _

// kernel: transformer_forward.48
$region0: #{transformer_forward.48}
  #allocation0 [shape = 'u32[]', space=smem, size = 0x4, offset = 0x4, fixed_abs, tag = 'smem constant byte address 0x4 - core index']
  #allocation1 [shape = 'u32[72,128]{1,0:T(1,128)}', space=vmem, size = 0x9000, scoped, tag = 'internal scratch']
  #allocation2 [shape = 'f32[32,384]{1,0:T(8,128)}', space=vmem, size = 0xc000, scoped, tag = 'scratch operand']
  %s0 = inlined_call_operand.vmem [shape: f32[32,128], index: 0, kind: input, shape index: {}]
  %s1 = inlined_call_operand.vmem [shape: f32[128,384], index: 1, kind: input, shape index: {}]
  %s2 = inlined_call_operand.vmem [shape: f32[1,384], index: 2, kind: input, shape index: {}]
  %s3 = inlined_call_operand.vmem [shape: f32[32,384], index: 3, kind: output, shape index: {}]
  %s4 = sld [smem:[#allocation0]]
  $region30: #{transformer_forward.48} parent=0
    _
  %s6 = ssub.s32 1, %s4
  %s7 = scalar_select 0, %s6, %s4
  // Predicated region
  $region2: #{transformer_forward.48} parent=0 // pred_check
    _
  $region3: #{transformer_forward.48} parent=0 // pred_check_branch
    %9 = sbr.rel (0) target = $region5
  $region4: #{transformer_forward.48} parent=0 // pred_region
    _
  $region5: #{transformer_forward.48} parent=0 // pred_fallthru
    _
  // Predicated region
  $region6: #{transformer_forward.48} parent=0 // pred_check
    _
  $region7: #{transformer_forward.48} parent=0 // pred_check_branch
    %11 = sbr.rel (0) target = $region9
  $region8: #{transformer_forward.48} parent=0 // pred_region
    _
  $region9: #{transformer_forward.48} parent=0 // pred_fallthru
    _
  // Predicated region
  $region10: #{transformer_forward.48} parent=0 // pred_check
    _
  $region11: #{transformer_forward.48} parent=0 // pred_check_branch
    %13 = sbr.rel (0) target = $region13
  $region12: #{transformer_forward.48} parent=0 // pred_region
    _
  $region13: #{transformer_forward.48} parent=0 // pred_fallthru
    _
  %p14 = scmp.eq.s32.totalorder 0, 0
  // Predicated region
  $region14: #{transformer_forward.48} parent=0 // pred_check
    %p15 = pneg %p14
  $region15: #{transformer_forward.48} parent=0 // pred_check_branch
    %17 = sbr.rel (%p15) target = $region17
  $region16: #{transformer_forward.48} parent=0 // pred_region
    %18 = vst [vmem:[#allocation2] sm:$0xff] 0.0
    %19 = vst [vmem:[#allocation2 + $0x8] sm:$0xff] 0.0
    %20 = vst [vmem:[#allocation2 + $0x10] sm:$0xff] 0.0
    %21 = vst [vmem:[#allocation2 + $0x18] sm:$0xff] 0.0
    %22 = vst [vmem:[#allocation2 + $0x20] sm:$0xff] 0.0
    %23 = vst [vmem:[#allocation2 + $0x28] sm:$0xff] 0.0
    %24 = vst [vmem:[#allocation2 + $0x30] sm:$0xff] 0.0
    %25 = vst [vmem:[#allocation2 + $0x38] sm:$0xff] 0.0
    %26 = vst [vmem:[#allocation2 + $0x40] sm:$0xff] 0.0
    %27 = vst [vmem:[#allocation2 + $0x48] sm:$0xff] 0.0
    %28 = vst [vmem:[#allocation2 + $0x50] sm:$0xff] 0.0
    %29 = vst [vmem:[#allocation2 + $0x58] sm:$0xff] 0.0
  $region17: #{transformer_forward.48} parent=0 // pred_fallthru
    _
  %v30 = vld [vmem:[#allocation2] sm:$0xff]
  %v31 = vld [vmem:[#allocation2 + $0x8] sm:$0xff]
  %v32 = vld [vmem:[#allocation2 + $0x10] sm:$0xff]
  %v33 = vld [vmem:[#allocation2 + $0x18] sm:$0xff]
  %v34 = vld [vmem:[#allocation2 + $0x20] sm:$0xff]
  %v35 = vld [vmem:[#allocation2 + $0x28] sm:$0xff]
  %v36 = vld [vmem:[#allocation2 + $0x30] sm:$0xff]
  %v37 = vld [vmem:[#allocation2 + $0x38] sm:$0xff]
  %v38 = vld [vmem:[#allocation2 + $0x40] sm:$0xff]
  %v39 = vld [vmem:[#allocation2 + $0x48] sm:$0xff]
  %v40 = vld [vmem:[#allocation2 + $0x50] sm:$0xff]
  %v41 = vld [vmem:[#allocation2 + $0x58] sm:$0xff]
  %v42 = vld [vmem:[%s0] sm:$0xff]
  %v43 = vld [vmem:[%s0 + $0x8] sm:$0xff]
  %v44 = vld [vmem:[%s0 + $0x10] sm:$0xff]
  %v45 = vld [vmem:[%s0 + $0x18] sm:$0xff]
  %v46 = vld [vmem:[%s1] sm:$0xff]
  %v47 = vld [vmem:[%s1 + $0x8] sm:$0xff]
  %v48 = vld [vmem:[%s1 + $0x10] sm:$0xff]
  %v49 = vld [vmem:[%s1 + $0x18] sm:$0xff]
  %v50 = vld [vmem:[%s1 + $0x20] sm:$0xff]
  %v51 = vld [vmem:[%s1 + $0x28] sm:$0xff]
  %v52 = vld [vmem:[%s1 + $0x30] sm:$0xff]
  %v53 = vld [vmem:[%s1 + $0x38] sm:$0xff]
  %v54 = vld [vmem:[%s1 + $0x40] sm:$0xff]
  %v55 = vld [vmem:[%s1 + $0x48] sm:$0xff]
  %v56 = vld [vmem:[%s1 + $0x50] sm:$0xff]
  %v57 = vld [vmem:[%s1 + $0x58] sm:$0xff]
  %v58 = vld [vmem:[%s1 + $0x60] sm:$0xff]
  %v59 = vld [vmem:[%s1 + $0x68] sm:$0xff]
  %v60 = vld [vmem:[%s1 + $0x70] sm:$0xff]
  %v61 = vld [vmem:[%s1 + $0x78] sm:$0xff]
  %v62 = vld [vmem:[%s1 + $0x80] sm:$0xff]
  %v63 = vld [vmem:[%s1 + $0x88] sm:$0xff]
  %v64 = vld [vmem:[%s1 + $0x90] sm:$0xff]
  %v65 = vld [vmem:[%s1 + $0x98] sm:$0xff]
  %v66 = vld [vmem:[%s1 + $0xa0] sm:$0xff]
  %v67 = vld [vmem:[%s1 + $0xa8] sm:$0xff]
  %v68 = vld [vmem:[%s1 + $0xb0] sm:$0xff]
  %v69 = vld [vmem:[%s1 + $0xb8] sm:$0xff]
  %v70 = vld [vmem:[%s1 + $0xc0] sm:$0xff]
  %v71 = vld [vmem:[%s1 + $0xc8] sm:$0xff]
  %v72 = vld [vmem:[%s1 + $0xd0] sm:$0xff]
  %v73 = vld [vmem:[%s1 + $0xd8] sm:$0xff]
  %v74 = vld [vmem:[%s1 + $0xe0] sm:$0xff]
  %v75 = vld [vmem:[%s1 + $0xe8] sm:$0xff]
  %v76 = vld [vmem:[%s1 + $0xf0] sm:$0xff]
  %v77 = vld [vmem:[%s1 + $0xf8] sm:$0xff]
  %v78 = vld [vmem:[%s1 + $0x100] sm:$0xff]
  %v79 = vld [vmem:[%s1 + $0x108] sm:$0xff]
  %v80 = vld [vmem:[%s1 + $0x110] sm:$0xff]
  %v81 = vld [vmem:[%s1 + $0x118] sm:$0xff]
  %v82 = vld [vmem:[%s1 + $0x120] sm:$0xff]
  %v83 = vld [vmem:[%s1 + $0x128] sm:$0xff]
  %v84 = vld [vmem:[%s1 + $0x130] sm:$0xff]
  %v85 = vld [vmem:[%s1 + $0x138] sm:$0xff]
  %v86 = vld [vmem:[%s1 + $0x140] sm:$0xff]
  %v87 = vld [vmem:[%s1 + $0x148] sm:$0xff]
  %v88 = vld [vmem:[%s1 + $0x150] sm:$0xff]
  %v89 = vld [vmem:[%s1 + $0x158] sm:$0xff]
  %v90 = vld [vmem:[%s1 + $0x160] sm:$0xff]
  %v91 = vld [vmem:[%s1 + $0x168] sm:$0xff]
  %v92 = vld [vmem:[%s1 + $0x170] sm:$0xff]
  %v93 = vld [vmem:[%s1 + $0x178] sm:$0xff]
  %94 = vmatpush.msra.mxu0 %v91
  %95 = vmatpush.msra.mxu0 %v88
  %96 = vmatpush.msra.mxu0 %v85
  %97 = vmatpush.msra.mxu0 %v82
  %98 = vmatpush.msra.mxu0 %v79
  %99 = vmatpush.msra.mxu0 %v76
  %100 = vmatpush.msra.mxu0 %v73
  %101 = vmatpush.msra.mxu0 %v70
  %102 = vmatpush.msra.mxu0 %v67
  %103 = vmatpush.msra.mxu0 %v64
  %104 = vmatpush.msra.mxu0 %v61
  %105 = vmatpush.msra.mxu0 %v58
  %106 = vmatpush.msra.mxu0 %v55
  %107 = vmatpush.msra.mxu0 %v52
  %108 = vmatpush.msra.mxu0 %v49
  %109 = vmatpush.msra.mxu0 %v46
  %110 = vmatmul.f32.gmra.mxu0 %v42
  %v111 = vpop.f32.mrf.mxu0
  %v112 = vadd.f32 0.0, %v111
  %113 = vmatmul.f32.gmra.mxu0 %v43
  %v114 = vpop.f32.mrf.mxu0
  %v115 = vadd.f32 0.0, %v114
  %116 = vmatmul.f32.gmra.mxu0 %v44
  %v117 = vpop.f32.mrf.mxu0
  %v118 = vadd.f32 0.0, %v117
  %119 = vmatmul.f32.gmra.mxu0 %v45
  %v120 = vpop.f32.mrf.mxu0
  %v121 = vadd.f32 0.0, %v120
  %122 = vdwg.mxu0
  %123 = vmatpush.msra.mxu0 %v92
  %124 = vmatpush.msra.mxu0 %v89
  %125 = vmatpush.msra.mxu0 %v86
  %126 = vmatpush.msra.mxu0 %v83
  %127 = vmatpush.msra.mxu0 %v80
  %128 = vmatpush.msra.mxu0 %v77
  %129 = vmatpush.msra.mxu0 %v74
  %130 = vmatpush.msra.mxu0 %v71
  %131 = vmatpush.msra.mxu0 %v68
  %132 = vmatpush.msra.mxu0 %v65
  %133 = vmatpush.msra.mxu0 %v62
  %134 = vmatpush.msra.mxu0 %v59
  %135 = vmatpush.msra.mxu0 %v56
  %136 = vmatpush.msra.mxu0 %v53
  %137 = vmatpush.msra.mxu0 %v50
  %138 = vmatpush.msra.mxu0 %v47
  %139 = vmatmul.f32.gmra.mxu0 %v42
  %v140 = vpop.f32.mrf.mxu0
  %v141 = vadd.f32 0.0, %v140
  %142 = vmatmul.f32.gmra.mxu0 %v43
  %v143 = vpop.f32.mrf.mxu0
  %v144 = vadd.f32 0.0, %v143
  %145 = vmatmul.f32.gmra.mxu0 %v44
  %v146 = vpop.f32.mrf.mxu0
  %v147 = vadd.f32 0.0, %v146
  %148 = vmatmul.f32.gmra.mxu0 %v45
  %v149 = vpop.f32.mrf.mxu0
  %v150 = vadd.f32 0.0, %v149
  %151 = vdwg.mxu0
  %152 = vmatpush.msra.mxu0 %v93
  %153 = vmatpush.msra.mxu0 %v90
  %154 = vmatpush.msra.mxu0 %v87
  %155 = vmatpush.msra.mxu0 %v84
  %156 = vmatpush.msra.mxu0 %v81
  %157 = vmatpush.msra.mxu0 %v78
  %158 = vmatpush.msra.mxu0 %v75
  %159 = vmatpush.msra.mxu0 %v72
  %160 = vmatpush.msra.mxu0 %v69
  %161 = vmatpush.msra.mxu0 %v66
  %162 = vmatpush.msra.mxu0 %v63
  %163 = vmatpush.msra.mxu0 %v60
  %164 = vmatpush.msra.mxu0 %v57
  %165 = vmatpush.msra.mxu0 %v54
  %166 = vmatpush.msra.mxu0 %v51
  %167 = vmatpush.msra.mxu0 %v48
  %168 = vmatmul.f32.gmra.mxu0 %v42
  %v169 = vpop.f32.mrf.mxu0
  %v170 = vadd.f32 0.0, %v169
  %171 = vmatmul.f32.gmra.mxu0 %v43
  %v172 = vpop.f32.mrf.mxu0
  %v173 = vadd.f32 0.0, %v172
  %174 = vmatmul.f32.gmra.mxu0 %v44
  %v175 = vpop.f32.mrf.mxu0
  %v176 = vadd.f32 0.0, %v175
  %177 = vmatmul.f32.gmra.mxu0 %v45
  %v178 = vpop.f32.mrf.mxu0
  %v179 = vadd.f32 0.0, %v178
  %180 = vdwg.mxu0
  %v181 = vadd.f32 %v30, %v112
  %v182 = vadd.f32 %v31, %v141
  %v183 = vadd.f32 %v32, %v170
  %v184 = vadd.f32 %v33, %v115
  %v185 = vadd.f32 %v34, %v144
  %v186 = vadd.f32 %v35, %v173
  %v187 = vadd.f32 %v36, %v118
  %v188 = vadd.f32 %v37, %v147
  %v189 = vadd.f32 %v38, %v176
  %v190 = vadd.f32 %v39, %v121
  %v191 = vadd.f32 %v40, %v150
  %v192 = vadd.f32 %v41, %v179
  %193 = vst [vmem:[#allocation2] sm:$0xff] %v181
  %194 = vst [vmem:[#allocation2 + $0x8] sm:$0xff] %v182
  %195 = vst [vmem:[#allocation2 + $0x10] sm:$0xff] %v183
  %196 = vst [vmem:[#allocation2 + $0x18] sm:$0xff] %v184
  %197 = vst [vmem:[#allocation2 + $0x20] sm:$0xff] %v185
  %198 = vst [vmem:[#allocation2 + $0x28] sm:$0xff] %v186
  %199 = vst [vmem:[#allocation2 + $0x30] sm:$0xff] %v187
  %200 = vst [vmem:[#allocation2 + $0x38] sm:$0xff] %v188
  %201 = vst [vmem:[#allocation2 + $0x40] sm:$0xff] %v189
  %202 = vst [vmem:[#allocation2 + $0x48] sm:$0xff] %v190
  %203 = vst [vmem:[#allocation2 + $0x50] sm:$0xff] %v191
  %204 = vst [vmem:[#allocation2 + $0x58] sm:$0xff] %v192
  // Predicated region
  $region18: #{transformer_forward.48} parent=0 // pred_check
    %p205 = pneg %p14
  $region19: #{transformer_forward.48} parent=0 // pred_check_branch
    %207 = sbr.rel (%p205) target = $region21
  $region20: #{transformer_forward.48} parent=0 // pred_region
    %v208 = vld [vmem:[#allocation2] sm:$0xff]
    %v209 = vld [vmem:[#allocation2 + $0x8] sm:$0xff]
    %v210 = vld [vmem:[#allocation2 + $0x10] sm:$0xff]
    %v211 = vld [vmem:[#allocation2 + $0x18] sm:$0xff]
    %v212 = vld [vmem:[#allocation2 + $0x20] sm:$0xff]
    %v213 = vld [vmem:[#allocation2 + $0x28] sm:$0xff]
    %v214 = vld [vmem:[#allocation2 + $0x30] sm:$0xff]
    %v215 = vld [vmem:[#allocation2 + $0x38] sm:$0xff]
    %v216 = vld [vmem:[#allocation2 + $0x40] sm:$0xff]
    %v217 = vld [vmem:[#allocation2 + $0x48] sm:$0xff]
    %v218 = vld [vmem:[#allocation2 + $0x50] sm:$0xff]
    %v219 = vld [vmem:[#allocation2 + $0x58] sm:$0xff]
    %v220 = vld [vmem:[%s2] sm:$0x7]
    %v222 = vperm.slane %v220, 0
    %v223 = vperm.slane %v220, 1
    %v224 = vperm.slane %v220, 2
    %v228 = vadd.f32 %v208, %v222
    %v229 = vadd.f32 %v209, %v223
    %v230 = vadd.f32 %v210, %v224
    %v231 = vadd.f32 %v211, %v222
    %v232 = vadd.f32 %v212, %v223
    %v233 = vadd.f32 %v213, %v224
    %v234 = vadd.f32 %v214, %v222
    %v235 = vadd.f32 %v215, %v223
    %v236 = vadd.f32 %v216, %v224
    %v237 = vadd.f32 %v217, %v222
    %v238 = vadd.f32 %v218, %v223
    %v239 = vadd.f32 %v219, %v224
    %240 = vst [vmem:[%s3] sm:$0xff] %v228
    %241 = vst [vmem:[%s3 + $0x8] sm:$0xff] %v229
    %242 = vst [vmem:[%s3 + $0x10] sm:$0xff] %v230
    %243 = vst [vmem:[%s3 + $0x18] sm:$0xff] %v231
    %244 = vst [vmem:[%s3 + $0x20] sm:$0xff] %v232
    %245 = vst [vmem:[%s3 + $0x28] sm:$0xff] %v233
    %246 = vst [vmem:[%s3 + $0x30] sm:$0xff] %v234
    %247 = vst [vmem:[%s3 + $0x38] sm:$0xff] %v235
    %248 = vst [vmem:[%s3 + $0x40] sm:$0xff] %v236
    %249 = vst [vmem:[%s3 + $0x48] sm:$0xff] %v237
    %250 = vst [vmem:[%s3 + $0x50] sm:$0xff] %v238
    %251 = vst [vmem:[%s3 + $0x58] sm:$0xff] %v239
  $region21: #{transformer_forward.48} parent=0 // pred_fallthru
    _
  // Predicated region
  $region22: #{transformer_forward.48} parent=0 // pred_check
    _
  $region23: #{transformer_forward.48} parent=0 // pred_check_branch
    %253 = sbr.rel (0) target = $region25
  $region24: #{transformer_forward.48} parent=0 // pred_region
    _
  $region25: #{transformer_forward.48} parent=0 // pred_fallthru
    _
  // Predicated region
  $region26: #{transformer_forward.48} parent=0 // pred_check
    _
  $region27: #{transformer_forward.48} parent=0 // pred_check_branch
    %255 = sbr.rel (0) target = $region29
  $region28: #{transformer_forward.48} parent=0 // pred_region
    _
  $region29: #{transformer_forward.48} parent=0 // pred_fallthru
    _

// kernel: transformer_forward.50
$region0: #{transformer_forward.50}
  #allocation0 [shape = 'u32[]', space=smem, size = 0x4, offset = 0x4, fixed_abs, tag = 'smem constant byte address 0x4 - core index']
  #allocation1 [shape = 'u32[72,128]{1,0:T(1,128)}', space=vmem, size = 0x9000, scoped, tag = 'internal scratch']
  #allocation2 [shape = 'f32[32,128]{1,0:T(8,128)}', space=vmem, size = 0x4000, scoped, tag = 'scratch operand']
  %s0 = inlined_call_operand.vmem [shape: f32[32,128], index: 0, kind: input, shape index: {}]
  %s1 = inlined_call_operand.vmem [shape: f32[128,128], index: 1, kind: input, shape index: {}]
  %s2 = inlined_call_operand.vmem [shape: f32[1,128], index: 2, kind: input, shape index: {}]
  %s3 = inlined_call_operand.vmem [shape: f32[32,128], index: 3, kind: output, shape index: {}]
  %s4 = sld [smem:[#allocation0]]
  $region30: #{transformer_forward.50} parent=0
    _
  %s6 = ssub.s32 1, %s4
  %s7 = scalar_select 0, %s6, %s4
  // Predicated region
  $region2: #{transformer_forward.50} parent=0 // pred_check
    _
  $region3: #{transformer_forward.50} parent=0 // pred_check_branch
    %9 = sbr.rel (0) target = $region5
  $region4: #{transformer_forward.50} parent=0 // pred_region
    _
  $region5: #{transformer_forward.50} parent=0 // pred_fallthru
    _
  // Predicated region
  $region6: #{transformer_forward.50} parent=0 // pred_check
    _
  $region7: #{transformer_forward.50} parent=0 // pred_check_branch
    %11 = sbr.rel (0) target = $region9
  $region8: #{transformer_forward.50} parent=0 // pred_region
    _
  $region9: #{transformer_forward.50} parent=0 // pred_fallthru
    _
  // Predicated region
  $region10: #{transformer_forward.50} parent=0 // pred_check
    _
  $region11: #{transformer_forward.50} parent=0 // pred_check_branch
    %13 = sbr.rel (0) target = $region13
  $region12: #{transformer_forward.50} parent=0 // pred_region
    _
  $region13: #{transformer_forward.50} parent=0 // pred_fallthru
    _
  %p14 = scmp.eq.s32.totalorder 0, 0
  // Predicated region
  $region14: #{transformer_forward.50} parent=0 // pred_check
    %p15 = pneg %p14
  $region15: #{transformer_forward.50} parent=0 // pred_check_branch
    %17 = sbr.rel (%p15) target = $region17
  $region16: #{transformer_forward.50} parent=0 // pred_region
    %18 = vst [vmem:[#allocation2] sm:$0xff] 0.0
    %19 = vst [vmem:[#allocation2 + $0x8] sm:$0xff] 0.0
    %20 = vst [vmem:[#allocation2 + $0x10] sm:$0xff] 0.0
    %21 = vst [vmem:[#allocation2 + $0x18] sm:$0xff] 0.0
  $region17: #{transformer_forward.50} parent=0 // pred_fallthru
    _
  %v22 = vld [vmem:[#allocation2] sm:$0xff]
  %v23 = vld [vmem:[#allocation2 + $0x8] sm:$0xff]
  %v24 = vld [vmem:[#allocation2 + $0x10] sm:$0xff]
  %v25 = vld [vmem:[#allocation2 + $0x18] sm:$0xff]
  %v26 = vld [vmem:[%s0] sm:$0xff]
  %v27 = vld [vmem:[%s0 + $0x8] sm:$0xff]
  %v28 = vld [vmem:[%s0 + $0x10] sm:$0xff]
  %v29 = vld [vmem:[%s0 + $0x18] sm:$0xff]
  %v30 = vld [vmem:[%s1] sm:$0xff]
  %v31 = vld [vmem:[%s1 + $0x8] sm:$0xff]
  %v32 = vld [vmem:[%s1 + $0x10] sm:$0xff]
  %v33 = vld [vmem:[%s1 + $0x18] sm:$0xff]
  %v34 = vld [vmem:[%s1 + $0x20] sm:$0xff]
  %v35 = vld [vmem:[%s1 + $0x28] sm:$0xff]
  %v36 = vld [vmem:[%s1 + $0x30] sm:$0xff]
  %v37 = vld [vmem:[%s1 + $0x38] sm:$0xff]
  %v38 = vld [vmem:[%s1 + $0x40] sm:$0xff]
  %v39 = vld [vmem:[%s1 + $0x48] sm:$0xff]
  %v40 = vld [vmem:[%s1 + $0x50] sm:$0xff]
  %v41 = vld [vmem:[%s1 + $0x58] sm:$0xff]
  %v42 = vld [vmem:[%s1 + $0x60] sm:$0xff]
  %v43 = vld [vmem:[%s1 + $0x68] sm:$0xff]
  %v44 = vld [vmem:[%s1 + $0x70] sm:$0xff]
  %v45 = vld [vmem:[%s1 + $0x78] sm:$0xff]
  %46 = vmatpush.msra.mxu0 %v45
  %47 = vmatpush.msra.mxu0 %v44
  %48 = vmatpush.msra.mxu0 %v43
  %49 = vmatpush.msra.mxu0 %v42
  %50 = vmatpush.msra.mxu0 %v41
  %51 = vmatpush.msra.mxu0 %v40
  %52 = vmatpush.msra.mxu0 %v39
  %53 = vmatpush.msra.mxu0 %v38
  %54 = vmatpush.msra.mxu0 %v37
  %55 = vmatpush.msra.mxu0 %v36
  %56 = vmatpush.msra.mxu0 %v35
  %57 = vmatpush.msra.mxu0 %v34
  %58 = vmatpush.msra.mxu0 %v33
  %59 = vmatpush.msra.mxu0 %v32
  %60 = vmatpush.msra.mxu0 %v31
  %61 = vmatpush.msra.mxu0 %v30
  %62 = vmatmul.f32.gmra.mxu0 %v26
  %v63 = vpop.f32.mrf.mxu0
  %v64 = vadd.f32 0.0, %v63
  %65 = vmatmul.f32.gmra.mxu0 %v27
  %v66 = vpop.f32.mrf.mxu0
  %v67 = vadd.f32 0.0, %v66
  %68 = vmatmul.f32.gmra.mxu0 %v28
  %v69 = vpop.f32.mrf.mxu0
  %v70 = vadd.f32 0.0, %v69
  %71 = vmatmul.f32.gmra.mxu0 %v29
  %v72 = vpop.f32.mrf.mxu0
  %v73 = vadd.f32 0.0, %v72
  %74 = vdwg.mxu0
  %v75 = vadd.f32 %v22, %v64
  %v76 = vadd.f32 %v23, %v67
  %v77 = vadd.f32 %v24, %v70
  %v78 = vadd.f32 %v25, %v73
  %79 = vst [vmem:[#allocation2] sm:$0xff] %v75
  %80 = vst [vmem:[#allocation2 + $0x8] sm:$0xff] %v76
  %81 = vst [vmem:[#allocation2 + $0x10] sm:$0xff] %v77
  %82 = vst [vmem:[#allocation2 + $0x18] sm:$0xff] %v78
  // Predicated region
  $region18: #{transformer_forward.50} parent=0 // pred_check
    %p83 = pneg %p14
  $region19: #{transformer_forward.50} parent=0 // pred_check_branch
    %85 = sbr.rel (%p83) target = $region21
  $region20: #{transformer_forward.50} parent=0 // pred_region
    %v86 = vld [vmem:[#allocation2] sm:$0xff]
    %v87 = vld [vmem:[#allocation2 + $0x8] sm:$0xff]
    %v88 = vld [vmem:[#allocation2 + $0x10] sm:$0xff]
    %v89 = vld [vmem:[#allocation2 + $0x18] sm:$0xff]
    %v90 = vld [vmem:[%s2] sm:$0x1]
    %v92 = vperm.slane %v90, 0
    %v94 = vadd.f32 %v86, %v92
    %v95 = vadd.f32 %v87, %v92
    %v96 = vadd.f32 %v88, %v92
    %v97 = vadd.f32 %v89, %v92
    %98 = vst [vmem:[%s3] sm:$0xff] %v94
    %99 = vst [vmem:[%s3 + $0x8] sm:$0xff] %v95
    %100 = vst [vmem:[%s3 + $0x10] sm:$0xff] %v96
    %101 = vst [vmem:[%s3 + $0x18] sm:$0xff] %v97
  $region21: #{transformer_forward.50} parent=0 // pred_fallthru
    _
  // Predicated region
  $region22: #{transformer_forward.50} parent=0 // pred_check
    _
  $region23: #{transformer_forward.50} parent=0 // pred_check_branch
    %103 = sbr.rel (0) target = $region25
  $region24: #{transformer_forward.50} parent=0 // pred_region
    _
  $region25: #{transformer_forward.50} parent=0 // pred_fallthru
    _
  // Predicated region
  $region26: #{transformer_forward.50} parent=0 // pred_check
    _
  $region27: #{transformer_forward.50} parent=0 // pred_check_branch
    %105 = sbr.rel (0) target = $region29
  $region28: #{transformer_forward.50} parent=0 // pred_region
    _
  $region29: #{transformer_forward.50} parent=0 // pred_fallthru
    _

// kernel: transformer_forward.49
$region0: #{transformer_forward.49}
  #allocation0 [shape = 'u32[]', space=smem, size = 0x4, offset = 0x4, fixed_abs, tag = 'smem constant byte address 0x4 - core index']
  #allocation1 [shape = 'u32[72,128]{1,0:T(1,128)}', space=vmem, size = 0x9000, scoped, tag = 'internal scratch']
  %s0 = inlined_call_operand.vmem [shape: f32[2,16,384], index: 0, kind: input, shape index: {}]
  %s1 = inlined_call_operand.vmem [shape: f32[2,16,128], index: 1, kind: output, shape index: {}]
  %s2 = sld [smem:[#allocation0]]
  $region37: #{transformer_forward.49} parent=0
    _
  %s4 = ssub.s32 1, %s2
  %s5 = scalar_select 0, %s4, %s2
  loop: start=0, step=1, limit=4
  $region2: #{transformer_forward.49} parent=0 // loop_pre_header
    _
  $region3: #{transformer_forward.49} parent=0 // loop_header
    %s7 = sphi 0, %s11
    %p8 = scmp.ge.s32.totalorder %s7, 4
    %s17 = sphi 0, %s19
    %s20 = sphi 0, %s17
    %s21 = sphi 0, %s20
    %s37 = sphi 0, %s21
    %s43 = sphi 0, %s45
    %s46 = sphi 0, %s43
    %s47 = sphi 0, %s46
    %s63 = sphi 0, %s47
  $region4: #{transformer_forward.49} parent=0 // loop_header_branch
    %10 = sbr.rel (%p8) target = $region8
  $region5: #{transformer_forward.49} parent=0 // loop_body
    %s12 = ssub.s32 %s7, 1
    %s13 = ssub.s32 %s7, 2
    %s14 = sadd.s32 %s7, 1
    %s15 = ssub.s32 %s7, %s14
    %p16 = scmp.eq.s32.totalorder %s15, 0
    %s18 = sadd.s32 %s17, 1
    %s19 = scalar_select %p16, %s17, %s18
    %p22 = pneg %p16
    %p23 = scmp.eq.s32.totalorder %s7, 1
    %p24 = por %p22, %p23
    %p25 = scmp.ne.s32.totalorder %s17, %s20
    %p26 = scmp.eq.s32.totalorder %s7, 0
    %p27 = por %p25, %p26
    %p28 = scmp.ne.s32.totalorder %s17, %s20
    %p29 = scmp.eq.s32.totalorder %s12, 1
    %p30 = por %p28, %p29
    %p31 = scmp.ne.s32.totalorder %s20, %s21
    %p32 = scmp.eq.s32.totalorder %s12, 0
    %p33 = por %p31, %p32
    %p34 = scmp.ne.s32.totalorder %s20, %s21
    %p35 = scmp.eq.s32.totalorder %s13, 1
    %p36 = por %p34, %p35
    %p38 = scmp.ne.s32.totalorder %s21, %s37
    %p39 = scmp.eq.s32.totalorder %s13, 0
    %p40 = por %p38, %p39
    %s41 = ssub.s32 %s7, %s14
    %p42 = scmp.eq.s32.totalorder %s41, 0
    %s44 = sadd.s32 %s43, 1
    %s45 = scalar_select %p42, %s43, %s44
    %p48 = pneg %p42
    %p49 = scmp.eq.s32.totalorder %s7, 1
    %p50 = por %p48, %p49
    %p51 = scmp.ne.s32.totalorder %s43, %s46
    %p52 = scmp.eq.s32.totalorder %s7, 0
    %p53 = por %p51, %p52
    %p54 = scmp.ne.s32.totalorder %s43, %s46
    %p55 = scmp.eq.s32.totalorder %s12, 1
    %p56 = por %p54, %p55
    %p57 = scmp.ne.s32.totalorder %s46, %s47
    %p58 = scmp.eq.s32.totalorder %s12, 0
    %p59 = por %p57, %p58
    %p60 = scmp.ne.s32.totalorder %s46, %s47
    %p61 = scmp.eq.s32.totalorder %s13, 1
    %p62 = por %p60, %p61
    %p64 = scmp.ne.s32.totalorder %s47, %s63
    %p65 = scmp.eq.s32.totalorder %s13, 0
    %p66 = por %p64, %p65
    %p67 = scmp.le.s32.totalorder 1, %s7
    %p68 = scmp.lt.s32.totalorder %s7, 3
    %p69 = pnand %p67, %p68
    %p70 = pneg %p69
    // Predicated region
    $region9: #{transformer_forward.49} parent=5 // pred_check
      _
    $region10: #{transformer_forward.49} parent=5 // pred_check_branch
      %72 = sbr.rel (%p69) target = $region12
    $region11: #{transformer_forward.49} parent=5 // pred_region
      %s73 = ssub.s32 %s7, 1
    $region12: #{transformer_forward.49} parent=5 // pred_fallthru
      _
    %p74 = scmp.lt.s32.totalorder %s7, 2
    // Predicated region
    $region13: #{transformer_forward.49} parent=5 // pred_check
      %p75 = pneg %p74
    $region14: #{transformer_forward.49} parent=5 // pred_check_branch
      %77 = sbr.rel (%p75) target = $region16
    $region15: #{transformer_forward.49} parent=5 // pred_region
      // Predicated region
      $region17: #{transformer_forward.49} parent=15 // pred_check
        %p78 = pneg %p27
      $region18: #{transformer_forward.49} parent=15 // pred_check_branch
        %80 = sbr.rel (%p78) target = $region20
      $region19: #{transformer_forward.49} parent=15 // pred_region
        %p81 = scmp.lt.s32.totalorder %s7, 1
        %s82 = scalar_select %p81, %s7, 1
        %s83 = smul.addr %s82, 6
        %s84 = smul.addr %s83, 8
        %s85 = scalar_lea.vmem %s0, %s84
      $region20: #{transformer_forward.49} parent=15 // pred_fallthru
        _
    $region16: #{transformer_forward.49} parent=5 // pred_fallthru
      _
    %p86 = scmp.le.s32.totalorder 1, %s7
    %p87 = scmp.lt.s32.totalorder %s7, 3
    %p88 = pnand %p86, %p87
    %p89 = pneg %p88
    // Predicated region
    $region21: #{transformer_forward.49} parent=5 // pred_check
      _
    $region22: #{transformer_forward.49} parent=5 // pred_check_branch
      %91 = sbr.rel (%p88) target = $region24
    $region23: #{transformer_forward.49} parent=5 // pred_region
      %s92 = ssub.s32 %s7, 1
      %p93 = scmp.lt.s32.totalorder %s12, 1
      %s94 = scalar_select %p93, %s12, 1
      %s95 = smul.addr %s94, 6
      %s96 = smul.addr %s95, 8
      %s97 = scalar_lea.vmem %s0, %s96
      %p98 = pneg %p33
      %p99 = pneg %p30
      %p100 = pneg %p59
      %p101 = pneg %p56
      %p102 = scmp.lt.s32.totalorder %s12, 1
      %s103 = scalar_select %p102, %s12, 1
      %s104 = smul.addr %s103, 2
      %s105 = smul.addr %s104, 8
      %s106 = scalar_lea.vmem %s1, %s105
      %p107 = scmp.lt.s32.totalorder %s12, 1
      %s108 = scalar_select %p107, %s12, 1
      %s109 = smul.addr %s108, 6
      %s110 = smul.addr %s109, 8
      %s111 = scalar_lea.vmem %s0, %s110
      %p112 = scmp.lt.s32.totalorder %s12, 1
      %s113 = scalar_select %p112, %s12, 1
      %s114 = smul.addr %s113, 2
      %s115 = smul.addr %s114, 8
      %s116 = scalar_lea.vmem %s1, %s115
      %v117 = vld [vmem:[%s111] sm:$0xff]
      %v118 = vld [vmem:[%s111 + $0x18] sm:$0xff]
      %v119 = vld [vmem:[%s111 + $0x8] sm:$0xff]
      %v120 = vld [vmem:[%s111 + $0x20] sm:$0xff]
      %v121 = vld [vmem:[%s111 + $0x10] sm:$0xff]
      %v122 = vld [vmem:[%s111 + $0x28] sm:$0xff]
      %v123 = vlaneseq
      %v124 = vshrl.u32 %v123, 7
      %v125 = vadd.s32 %v124, 8
      %v126 = vlaneseq
      %v127 = vand.u32 %v126, 127
      %vm128 = vcmp.gt.s32.totalorder %v127, %v124
      %vm129 = vcmp.gt.s32.totalorder %v127, %v125
      %v130 = vsel %vm128, -inf, 0.0
      %v131 = vsel %vm129, -inf, 0.0
      %v132 = vmul.f32 %v117, 0.25
      %v133 = vmul.f32 %v118, 0.25
      %vm134 = vcmask 130048
      %v136 = vsel %vm134, %v132, 0
      %v139 = vsel %vm134, %v133, 0
      %v142 = vsel %vm134, %v119, 0
      %v145 = vsel %vm134, %v120, 0
      %147 = vmatpush.xpose.msra.mxu0 0.0
      %148 = vmatpush.xpose.msra.mxu0 0.0
      %149 = vmatpush.xpose.msra.mxu0 0.0
      %150 = vmatpush.xpose.msra.mxu0 0.0
      %151 = vmatpush.xpose.msra.mxu0 0.0
      %152 = vmatpush.xpose.msra.mxu0 0.0
      %153 = vmatpush.xpose.msra.mxu0 0.0
      %154 = vmatpush.xpose.msra.mxu0 0.0
      %155 = vmatpush.xpose.msra.mxu0 0.0
      %156 = vmatpush.xpose.msra.mxu0 0.0
      %157 = vmatpush.xpose.msra.mxu0 0.0
      %158 = vmatpush.xpose.msra.mxu0 0.0
      %159 = vmatpush.xpose.msra.mxu0 0.0
      %160 = vmatpush.xpose.msra.mxu0 0.0
      %161 = vmatpush.xpose.msra.mxu0 %v145
      %162 = vmatpush.xpose.msra.mxu0 %v142
      %163 = vmatmul.f32.gmra.mxu0 %v136
      %v164 = vpop.f32.mrf.mxu0
      %v165 = vadd.f32 %v130, %v164
      %166 = vmatmul.f32.gmra.mxu0 %v139
      %v167 = vpop.f32.mrf.mxu0
      %v168 = vadd.f32 %v131, %v167
      %169 = vdwg.mxu0
      %v170 = vsel %vm134, %v165, -inf
      %171 = vmax.xlane.f32.xlu0 %v170
      %v172 = vpop.xlane.xlu0 %171
      %v173 = vsel %vm134, %v168, -inf
      %174 = vmax.xlane.f32.xlu0 %v173
      %v175 = vpop.xlane.xlu0 %174
      %v176 = vsub.f32 %v165, %v172
      %v177 = vsub.f32 %v168, %v175
      %v178 = vmul.f32 %v176, 1.442695
      %v179 = vpow.pop %v178
      %v180 = vmul.f32 %v177, 1.442695
      %v181 = vpow.pop %v180
      %v182 = vsel %vm134, %v179, 0.0
      %183 = vadd.xlane.f32.xlu0 %v182
      %v184 = vpop.xlane.xlu0 %183
      %v185 = vsel %vm134, %v181, 0.0
      %186 = vadd.xlane.f32.xlu0 %v185
      %v187 = vpop.xlane.xlu0 %186
      %v188 = vrcp.pop %v184
      %v189 = vrcp.pop %v187
      %v190 = vmul.f32 %v179, %v188
      %v191 = vmul.f32 %v181, %v189
      %v193 = vsel %vm134, %v190, 0
      %v196 = vsel %vm134, %v191, 0
      %198 = vmatpush.msra.mxu0 0.0
      %199 = vmatpush.msra.mxu0 0.0
      %200 = vmatpush.msra.mxu0 0.0
      %201 = vmatpush.msra.mxu0 0.0
      %202 = vmatpush.msra.mxu0 0.0
      %203 = vmatpush.msra.mxu0 0.0
      %204 = vmatpush.msra.mxu0 0.0
      %205 = vmatpush.msra.mxu0 0.0
      %206 = vmatpush.msra.mxu0 0.0
      %207 = vmatpush.msra.mxu0 0.0
      %208 = vmatpush.msra.mxu0 0.0
      %209 = vmatpush.msra.mxu0 0.0
      %210 = vmatpush.msra.mxu0 0.0
      %211 = vmatpush.msra.mxu0 0.0
      %212 = vmatpush.msra.mxu0 %v122
      %213 = vmatpush.msra.mxu0 %v121
      %214 = vmatmul.f32.gmra.mxu0 %v193
      %v215 = vpop.f32.mrf.mxu0
      %v216 = vadd.f32 0.0, %v215
      %217 = vmatmul.f32.gmra.mxu0 %v196
      %v218 = vpop.f32.mrf.mxu0
      %v219 = vadd.f32 0.0, %v218
      %220 = vdwg.mxu0
      %221 = vrot.lane.b32.xlu0 %v132, 112
      %v222 = vpop.permute.xlu0 %221
      %223 = vrot.lane.b32.xlu0 %v133, 112
      %v224 = vpop.permute.xlu0 %223
      %225 = vrot.lane.b32.xlu0 %v119, 112
      %v226 = vpop.permute.xlu0 %225
      %227 = vrot.lane.b32.xlu0 %v120, 112
      %v228 = vpop.permute.xlu0 %227
      %v229 = vsel %vm134, %v222, 0
      %v231 = vsel %vm134, %v224, 0
      %v233 = vsel %vm134, %v226, 0
      %v235 = vsel %vm134, %v228, 0
      %237 = vmatpush.xpose.msra.mxu0 0.0
      %238 = vmatpush.xpose.msra.mxu0 0.0
      %239 = vmatpush.xpose.msra.mxu0 0.0
      %240 = vmatpush.xpose.msra.mxu0 0.0
      %241 = vmatpush.xpose.msra.mxu0 0.0
      %242 = vmatpush.xpose.msra.mxu0 0.0
      %243 = vmatpush.xpose.msra.mxu0 0.0
      %244 = vmatpush.xpose.msra.mxu0 0.0
      %245 = vmatpush.xpose.msra.mxu0 0.0
      %246 = vmatpush.xpose.msra.mxu0 0.0
      %247 = vmatpush.xpose.msra.mxu0 0.0
      %248 = vmatpush.xpose.msra.mxu0 0.0
      %249 = vmatpush.xpose.msra.mxu0 0.0
      %250 = vmatpush.xpose.msra.mxu0 0.0
      %251 = vmatpush.xpose.msra.mxu0 %v235
      %252 = vmatpush.xpose.msra.mxu0 %v233
      %253 = vmatmul.f32.gmra.mxu0 %v229
      %v254 = vpop.f32.mrf.mxu0
      %v255 = vadd.f32 %v130, %v254
      %256 = vmatmul.f32.gmra.mxu0 %v231
      %v257 = vpop.f32.mrf.mxu0
      %v258 = vadd.f32 %v131, %v257
      %259 = vdwg.mxu0
      %v260 = vsel %vm134, %v255, -inf
      %261 = vmax.xlane.f32.xlu0 %v260
      %v262 = vpop.xlane.xlu0 %261
      %v263 = vsel %vm134, %v258, -inf
      %264 = vmax.xlane.f32.xlu0 %v263
      %v265 = vpop.xlane.xlu0 %264
      %v266 = vsub.f32 %v255, %v262
      %v267 = vsub.f32 %v258, %v265
      %v268 = vmul.f32 %v266, 1.442695
      %v269 = vpow.pop %v268
      %v270 = vmul.f32 %v267, 1.442695
      %v271 = vpow.pop %v270
      %v272 = vsel %vm134, %v269, 0.0
      %273 = vadd.xlane.f32.xlu0 %v272
      %v274 = vpop.xlane.xlu0 %273
      %v275 = vsel %vm134, %v271, 0.0
      %276 = vadd.xlane.f32.xlu0 %v275
      %v277 = vpop.xlane.xlu0 %276
      %v278 = vrcp.pop %v274
      %v279 = vrcp.pop %v277
      %v280 = vmul.f32 %v269, %v278
      %v281 = vmul.f32 %v271, %v279
      %284 = vrot.lane.b32.xlu0 %v121, 112
      %v285 = vpop.permute.xlu0 %284
      %286 = vrot.lane.b32.xlu0 %v122, 112
      %v287 = vpop.permute.xlu0 %286
      %v291 = vsel %vm134, %v280, 0
      %v294 = vsel %vm134, %v281, 0
      %296 = vmatpush.msra.mxu0 0.0
      %297 = vmatpush.msra.mxu0 0.0
      %298 = vmatpush.msra.mxu0 0.0
      %299 = vmatpush.msra.mxu0 0.0
      %300 = vmatpush.msra.mxu0 0.0
      %301 = vmatpush.msra.mxu0 0.0
      %302 = vmatpush.msra.mxu0 0.0
      %303 = vmatpush.msra.mxu0 0.0
      %304 = vmatpush.msra.mxu0 0.0
      %305 = vmatpush.msra.mxu0 0.0
      %306 = vmatpush.msra.mxu0 0.0
      %307 = vmatpush.msra.mxu0 0.0
      %308 = vmatpush.msra.mxu0 0.0
      %309 = vmatpush.msra.mxu0 0.0
      %310 = vmatpush.msra.mxu0 %v287
      %311 = vmatpush.msra.mxu0 %v285
      %312 = vmatmul.f32.gmra.mxu0 %v291
      %v313 = vpop.f32.mrf.mxu0
      %v314 = vadd.f32 0.0, %v313
      %315 = vmatmul.f32.gmra.mxu0 %v294
      %v316 = vpop.f32.mrf.mxu0
      %v317 = vadd.f32 0.0, %v316
      %318 = vdwg.mxu0
      %319 = vrot.lane.b32.xlu0 %v132, 96
      %v320 = vpop.permute.xlu0 %319
      %321 = vrot.lane.b32.xlu0 %v133, 96
      %v322 = vpop.permute.xlu0 %321
      %323 = vrot.lane.b32.xlu0 %v119, 96
      %v324 = vpop.permute.xlu0 %323
      %325 = vrot.lane.b32.xlu0 %v120, 96
      %v326 = vpop.permute.xlu0 %325
      %v327 = vsel %vm134, %v320, 0
      %v329 = vsel %vm134, %v322, 0
      %v331 = vsel %vm134, %v324, 0
      %v333 = vsel %vm134, %v326, 0
      %335 = vmatpush.xpose.msra.mxu0 0.0
      %336 = vmatpush.xpose.msra.mxu0 0.0
      %337 = vmatpush.xpose.msra.mxu0 0.0
      %338 = vmatpush.xpose.msra.mxu0 0.0
      %339 = vmatpush.xpose.msra.mxu0 0.0
      %340 = vmatpush.xpose.msra.mxu0 0.0
      %341 = vmatpush.xpose.msra.mxu0 0.0
      %342 = vmatpush.xpose.msra.mxu0 0.0
      %343 = vmatpush.xpose.msra.mxu0 0.0
      %344 = vmatpush.xpose.msra.mxu0 0.0
      %345 = vmatpush.xpose.msra.mxu0 0.0
      %346 = vmatpush.xpose.msra.mxu0 0.0
      %347 = vmatpush.xpose.msra.mxu0 0.0
      %348 = vmatpush.xpose.msra.mxu0 0.0
      %349 = vmatpush.xpose.msra.mxu0 %v333
      %350 = vmatpush.xpose.msra.mxu0 %v331
      %351 = vmatmul.f32.gmra.mxu0 %v327
      %v352 = vpop.f32.mrf.mxu0
      %v353 = vadd.f32 %v130, %v352
      %354 = vmatmul.f32.gmra.mxu0 %v329
      %v355 = vpop.f32.mrf.mxu0
      %v356 = vadd.f32 %v131, %v355
      %357 = vdwg.mxu0
      %v358 = vsel %vm134, %v353, -inf
      %359 = vmax.xlane.f32.xlu0 %v358
      %v360 = vpop.xlane.xlu0 %359
      %v361 = vsel %vm134, %v356, -inf
      %362 = vmax.xlane.f32.xlu0 %v361
      %v363 = vpop.xlane.xlu0 %362
      %v364 = vsub.f32 %v353, %v360
      %v365 = vsub.f32 %v356, %v363
      %v366 = vmul.f32 %v364, 1.442695
      %v367 = vpow.pop %v366
      %v368 = vmul.f32 %v365, 1.442695
      %v369 = vpow.pop %v368
      %v370 = vsel %vm134, %v367, 0.0
      %371 = vadd.xlane.f32.xlu0 %v370
      %v372 = vpop.xlane.xlu0 %371
      %v373 = vsel %vm134, %v369, 0.0
      %374 = vadd.xlane.f32.xlu0 %v373
      %v375 = vpop.xlane.xlu0 %374
      %v376 = vrcp.pop %v372
      %v377 = vrcp.pop %v375
      %v378 = vmul.f32 %v367, %v376
      %v379 = vmul.f32 %v369, %v377
      %380 = vrot.lane.b32.xlu0 %v121, 96
      %v381 = vpop.permute.xlu0 %380
      %382 = vrot.lane.b32.xlu0 %v122, 96
      %v383 = vpop.permute.xlu0 %382
      %v387 = vsel %vm134, %v378, 0
      %v390 = vsel %vm134, %v379, 0
      %392 = vmatpush.msra.mxu0 0.0
      %393 = vmatpush.msra.mxu0 0.0
      %394 = vmatpush.msra.mxu0 0.0
      %395 = vmatpush.msra.mxu0 0.0
      %396 = vmatpush.msra.mxu0 0.0
      %397 = vmatpush.msra.mxu0 0.0
      %398 = vmatpush.msra.mxu0 0.0
      %399 = vmatpush.msra.mxu0 0.0
      %400 = vmatpush.msra.mxu0 0.0
      %401 = vmatpush.msra.mxu0 0.0
      %402 = vmatpush.msra.mxu0 0.0
      %403 = vmatpush.msra.mxu0 0.0
      %404 = vmatpush.msra.mxu0 0.0
      %405 = vmatpush.msra.mxu0 0.0
      %406 = vmatpush.msra.mxu0 %v383
      %407 = vmatpush.msra.mxu0 %v381
      %408 = vmatmul.f32.gmra.mxu0 %v387
      %v409 = vpop.f32.mrf.mxu0
      %v410 = vadd.f32 0.0, %v409
      %411 = vmatmul.f32.gmra.mxu0 %v390
      %v412 = vpop.f32.mrf.mxu0
      %v413 = vadd.f32 0.0, %v412
      %414 = vdwg.mxu0
      %415 = vrot.lane.b32.xlu0 %v132, 80
      %v416 = vpop.permute.xlu0 %415
      %417 = vrot.lane.b32.xlu0 %v133, 80
      %v418 = vpop.permute.xlu0 %417
      %419 = vrot.lane.b32.xlu0 %v119, 80
      %v420 = vpop.permute.xlu0 %419
      %421 = vrot.lane.b32.xlu0 %v120, 80
      %v422 = vpop.permute.xlu0 %421
      %v423 = vsel %vm134, %v416, 0
      %v425 = vsel %vm134, %v418, 0
      %v427 = vsel %vm134, %v420, 0
      %v429 = vsel %vm134, %v422, 0
      %431 = vmatpush.xpose.msra.mxu0 0.0
      %432 = vmatpush.xpose.msra.mxu0 0.0
      %433 = vmatpush.xpose.msra.mxu0 0.0
      %434 = vmatpush.xpose.msra.mxu0 0.0
      %435 = vmatpush.xpose.msra.mxu0 0.0
      %436 = vmatpush.xpose.msra.mxu0 0.0
      %437 = vmatpush.xpose.msra.mxu0 0.0
      %438 = vmatpush.xpose.msra.mxu0 0.0
      %439 = vmatpush.xpose.msra.mxu0 0.0
      %440 = vmatpush.xpose.msra.mxu0 0.0
      %441 = vmatpush.xpose.msra.mxu0 0.0
      %442 = vmatpush.xpose.msra.mxu0 0.0
      %443 = vmatpush.xpose.msra.mxu0 0.0
      %444 = vmatpush.xpose.msra.mxu0 0.0
      %445 = vmatpush.xpose.msra.mxu0 %v429
      %446 = vmatpush.xpose.msra.mxu0 %v427
      %447 = vmatmul.f32.gmra.mxu0 %v423
      %v448 = vpop.f32.mrf.mxu0
      %v449 = vadd.f32 %v130, %v448
      %450 = vmatmul.f32.gmra.mxu0 %v425
      %v451 = vpop.f32.mrf.mxu0
      %v452 = vadd.f32 %v131, %v451
      %453 = vdwg.mxu0
      %v454 = vsel %vm134, %v449, -inf
      %455 = vmax.xlane.f32.xlu0 %v454
      %v456 = vpop.xlane.xlu0 %455
      %v457 = vsel %vm134, %v452, -inf
      %458 = vmax.xlane.f32.xlu0 %v457
      %v459 = vpop.xlane.xlu0 %458
      %v460 = vsub.f32 %v449, %v456
      %v461 = vsub.f32 %v452, %v459
      %v462 = vmul.f32 %v460, 1.442695
      %v463 = vpow.pop %v462
      %v464 = vmul.f32 %v461, 1.442695
      %v465 = vpow.pop %v464
      %v466 = vsel %vm134, %v463, 0.0
      %467 = vadd.xlane.f32.xlu0 %v466
      %v468 = vpop.xlane.xlu0 %467
      %v469 = vsel %vm134, %v465, 0.0
      %470 = vadd.xlane.f32.xlu0 %v469
      %v471 = vpop.xlane.xlu0 %470
      %v472 = vrcp.pop %v468
      %v473 = vrcp.pop %v471
      %v474 = vmul.f32 %v463, %v472
      %v475 = vmul.f32 %v465, %v473
      %476 = vrot.lane.b32.xlu0 %v121, 80
      %v477 = vpop.permute.xlu0 %476
      %478 = vrot.lane.b32.xlu0 %v122, 80
      %v479 = vpop.permute.xlu0 %478
      %v483 = vsel %vm134, %v474, 0
      %v486 = vsel %vm134, %v475, 0
      %488 = vmatpush.msra.mxu0 0.0
      %489 = vmatpush.msra.mxu0 0.0
      %490 = vmatpush.msra.mxu0 0.0
      %491 = vmatpush.msra.mxu0 0.0
      %492 = vmatpush.msra.mxu0 0.0
      %493 = vmatpush.msra.mxu0 0.0
      %494 = vmatpush.msra.mxu0 0.0
      %495 = vmatpush.msra.mxu0 0.0
      %496 = vmatpush.msra.mxu0 0.0
      %497 = vmatpush.msra.mxu0 0.0
      %498 = vmatpush.msra.mxu0 0.0
      %499 = vmatpush.msra.mxu0 0.0
      %500 = vmatpush.msra.mxu0 0.0
      %501 = vmatpush.msra.mxu0 0.0
      %502 = vmatpush.msra.mxu0 %v479
      %503 = vmatpush.msra.mxu0 %v477
      %504 = vmatmul.f32.gmra.mxu0 %v483
      %v505 = vpop.f32.mrf.mxu0
      %v506 = vadd.f32 0.0, %v505
      %507 = vmatmul.f32.gmra.mxu0 %v486
      %v508 = vpop.f32.mrf.mxu0
      %v509 = vadd.f32 0.0, %v508
      %510 = vdwg.mxu0
      %511 = vrot.lane.b32.xlu0 %v132, 64
      %v512 = vpop.permute.xlu0 %511
      %513 = vrot.lane.b32.xlu0 %v133, 64
      %v514 = vpop.permute.xlu0 %513
      %515 = vrot.lane.b32.xlu0 %v119, 64
      %v516 = vpop.permute.xlu0 %515
      %517 = vrot.lane.b32.xlu0 %v120, 64
      %v518 = vpop.permute.xlu0 %517
      %v519 = vsel %vm134, %v512, 0
      %v521 = vsel %vm134, %v514, 0
      %v523 = vsel %vm134, %v516, 0
      %v525 = vsel %vm134, %v518, 0
      %527 = vmatpush.xpose.msra.mxu0 0.0
      %528 = vmatpush.xpose.msra.mxu0 0.0
      %529 = vmatpush.xpose.msra.mxu0 0.0
      %530 = vmatpush.xpose.msra.mxu0 0.0
      %531 = vmatpush.xpose.msra.mxu0 0.0
      %532 = vmatpush.xpose.msra.mxu0 0.0
      %533 = vmatpush.xpose.msra.mxu0 0.0
      %534 = vmatpush.xpose.msra.mxu0 0.0
      %535 = vmatpush.xpose.msra.mxu0 0.0
      %536 = vmatpush.xpose.msra.mxu0 0.0
      %537 = vmatpush.xpose.msra.mxu0 0.0
      %538 = vmatpush.xpose.msra.mxu0 0.0
      %539 = vmatpush.xpose.msra.mxu0 0.0
      %540 = vmatpush.xpose.msra.mxu0 0.0
      %541 = vmatpush.xpose.msra.mxu0 %v525
      %542 = vmatpush.xpose.msra.mxu0 %v523
      %543 = vmatmul.f32.gmra.mxu0 %v519
      %v544 = vpop.f32.mrf.mxu0
      %v545 = vadd.f32 %v130, %v544
      %546 = vmatmul.f32.gmra.mxu0 %v521
      %v547 = vpop.f32.mrf.mxu0
      %v548 = vadd.f32 %v131, %v547
      %549 = vdwg.mxu0
      %v550 = vsel %vm134, %v545, -inf
      %551 = vmax.xlane.f32.xlu0 %v550
      %v552 = vpop.xlane.xlu0 %551
      %v553 = vsel %vm134, %v548, -inf
      %554 = vmax.xlane.f32.xlu0 %v553
      %v555 = vpop.xlane.xlu0 %554
      %v556 = vsub.f32 %v545, %v552
      %v557 = vsub.f32 %v548, %v555
      %v558 = vmul.f32 %v556, 1.442695
      %v559 = vpow.pop %v558
      %v560 = vmul.f32 %v557, 1.442695
      %v561 = vpow.pop %v560
      %v562 = vsel %vm134, %v559, 0.0
      %563 = vadd.xlane.f32.xlu0 %v562
      %v564 = vpop.xlane.xlu0 %563
      %v565 = vsel %vm134, %v561, 0.0
      %566 = vadd.xlane.f32.xlu0 %v565
      %v567 = vpop.xlane.xlu0 %566
      %v568 = vrcp.pop %v564
      %v569 = vrcp.pop %v567
      %v570 = vmul.f32 %v559, %v568
      %v571 = vmul.f32 %v561, %v569
      %572 = vrot.lane.b32.xlu0 %v121, 64
      %v573 = vpop.permute.xlu0 %572
      %574 = vrot.lane.b32.xlu0 %v122, 64
      %v575 = vpop.permute.xlu0 %574
      %v579 = vsel %vm134, %v570, 0
      %v582 = vsel %vm134, %v571, 0
      %584 = vmatpush.msra.mxu0 0.0
      %585 = vmatpush.msra.mxu0 0.0
      %586 = vmatpush.msra.mxu0 0.0
      %587 = vmatpush.msra.mxu0 0.0
      %588 = vmatpush.msra.mxu0 0.0
      %589 = vmatpush.msra.mxu0 0.0
      %590 = vmatpush.msra.mxu0 0.0
      %591 = vmatpush.msra.mxu0 0.0
      %592 = vmatpush.msra.mxu0 0.0
      %593 = vmatpush.msra.mxu0 0.0
      %594 = vmatpush.msra.mxu0 0.0
      %595 = vmatpush.msra.mxu0 0.0
      %596 = vmatpush.msra.mxu0 0.0
      %597 = vmatpush.msra.mxu0 0.0
      %598 = vmatpush.msra.mxu0 %v575
      %599 = vmatpush.msra.mxu0 %v573
      %600 = vmatmul.f32.gmra.mxu0 %v579
      %v601 = vpop.f32.mrf.mxu0
      %v602 = vadd.f32 0.0, %v601
      %603 = vmatmul.f32.gmra.mxu0 %v582
      %v604 = vpop.f32.mrf.mxu0
      %v605 = vadd.f32 0.0, %v604
      %606 = vdwg.mxu0
      %607 = vrot.lane.b32.xlu0 %v132, 48
      %v608 = vpop.permute.xlu0 %607
      %609 = vrot.lane.b32.xlu0 %v133, 48
      %v610 = vpop.permute.xlu0 %609
      %611 = vrot.lane.b32.xlu0 %v119, 48
      %v612 = vpop.permute.xlu0 %611
      %613 = vrot.lane.b32.xlu0 %v120, 48
      %v614 = vpop.permute.xlu0 %613
      %v615 = vsel %vm134, %v608, 0
      %v617 = vsel %vm134, %v610, 0
      %v619 = vsel %vm134, %v612, 0
      %v621 = vsel %vm134, %v614, 0
      %623 = vmatpush.xpose.msra.mxu0 0.0
      %624 = vmatpush.xpose.msra.mxu0 0.0
      %625 = vmatpush.xpose.msra.mxu0 0.0
      %626 = vmatpush.xpose.msra.mxu0 0.0
      %627 = vmatpush.xpose.msra.mxu0 0.0
      %628 = vmatpush.xpose.msra.mxu0 0.0
      %629 = vmatpush.xpose.msra.mxu0 0.0
      %630 = vmatpush.xpose.msra.mxu0 0.0
      %631 = vmatpush.xpose.msra.mxu0 0.0
      %632 = vmatpush.xpose.msra.mxu0 0.0
      %633 = vmatpush.xpose.msra.mxu0 0.0
      %634 = vmatpush.xpose.msra.mxu0 0.0
      %635 = vmatpush.xpose.msra.mxu0 0.0
      %636 = vmatpush.xpose.msra.mxu0 0.0
      %637 = vmatpush.xpose.msra.mxu0 %v621
      %638 = vmatpush.xpose.msra.mxu0 %v619
      %639 = vmatmul.f32.gmra.mxu0 %v615
      %v640 = vpop.f32.mrf.mxu0
      %v641 = vadd.f32 %v130, %v640
      %642 = vmatmul.f32.gmra.mxu0 %v617
      %v643 = vpop.f32.mrf.mxu0
      %v644 = vadd.f32 %v131, %v643
      %645 = vdwg.mxu0
      %v646 = vsel %vm134, %v641, -inf
      %647 = vmax.xlane.f32.xlu0 %v646
      %v648 = vpop.xlane.xlu0 %647
      %v649 = vsel %vm134, %v644, -inf
      %650 = vmax.xlane.f32.xlu0 %v649
      %v651 = vpop.xlane.xlu0 %650
      %v652 = vsub.f32 %v641, %v648
      %v653 = vsub.f32 %v644, %v651
      %v654 = vmul.f32 %v652, 1.442695
      %v655 = vpow.pop %v654
      %v656 = vmul.f32 %v653, 1.442695
      %v657 = vpow.pop %v656
      %v658 = vsel %vm134, %v655, 0.0
      %659 = vadd.xlane.f32.xlu0 %v658
      %v660 = vpop.xlane.xlu0 %659
      %v661 = vsel %vm134, %v657, 0.0
      %662 = vadd.xlane.f32.xlu0 %v661
      %v663 = vpop.xlane.xlu0 %662
      %v664 = vrcp.pop %v660
      %v665 = vrcp.pop %v663
      %v666 = vmul.f32 %v655, %v664
      %v667 = vmul.f32 %v657, %v665
      %668 = vrot.lane.b32.xlu0 %v121, 48
      %v669 = vpop.permute.xlu0 %668
      %670 = vrot.lane.b32.xlu0 %v122, 48
      %v671 = vpop.permute.xlu0 %670
      %v675 = vsel %vm134, %v666, 0
      %v678 = vsel %vm134, %v667, 0
      %680 = vmatpush.msra.mxu0 0.0
      %681 = vmatpush.msra.mxu0 0.0
      %682 = vmatpush.msra.mxu0 0.0
      %683 = vmatpush.msra.mxu0 0.0
      %684 = vmatpush.msra.mxu0 0.0
      %685 = vmatpush.msra.mxu0 0.0
      %686 = vmatpush.msra.mxu0 0.0
      %687 = vmatpush.msra.mxu0 0.0
      %688 = vmatpush.msra.mxu0 0.0
      %689 = vmatpush.msra.mxu0 0.0
      %690 = vmatpush.msra.mxu0 0.0
      %691 = vmatpush.msra.mxu0 0.0
      %692 = vmatpush.msra.mxu0 0.0
      %693 = vmatpush.msra.mxu0 0.0
      %694 = vmatpush.msra.mxu0 %v671
      %695 = vmatpush.msra.mxu0 %v669
      %696 = vmatmul.f32.gmra.mxu0 %v675
      %v697 = vpop.f32.mrf.mxu0
      %v698 = vadd.f32 0.0, %v697
      %699 = vmatmul.f32.gmra.mxu0 %v678
      %v700 = vpop.f32.mrf.mxu0
      %v701 = vadd.f32 0.0, %v700
      %702 = vdwg.mxu0
      %703 = vrot.lane.b32.xlu0 %v132, 32
      %v704 = vpop.permute.xlu0 %703
      %705 = vrot.lane.b32.xlu0 %v133, 32
      %v706 = vpop.permute.xlu0 %705
      %707 = vrot.lane.b32.xlu0 %v119, 32
      %v708 = vpop.permute.xlu0 %707
      %709 = vrot.lane.b32.xlu0 %v120, 32
      %v710 = vpop.permute.xlu0 %709
      %v711 = vsel %vm134, %v704, 0
      %v713 = vsel %vm134, %v706, 0
      %v715 = vsel %vm134, %v708, 0
      %v717 = vsel %vm134, %v710, 0
      %719 = vmatpush.xpose.msra.mxu0 0.0
      %720 = vmatpush.xpose.msra.mxu0 0.0
      %721 = vmatpush.xpose.msra.mxu0 0.0
      %722 = vmatpush.xpose.msra.mxu0 0.0
      %723 = vmatpush.xpose.msra.mxu0 0.0
      %724 = vmatpush.xpose.msra.mxu0 0.0
      %725 = vmatpush.xpose.msra.mxu0 0.0
      %726 = vmatpush.xpose.msra.mxu0 0.0
      %727 = vmatpush.xpose.msra.mxu0 0.0
      %728 = vmatpush.xpose.msra.mxu0 0.0
      %729 = vmatpush.xpose.msra.mxu0 0.0
      %730 = vmatpush.xpose.msra.mxu0 0.0
      %731 = vmatpush.xpose.msra.mxu0 0.0
      %732 = vmatpush.xpose.msra.mxu0 0.0
      %733 = vmatpush.xpose.msra.mxu0 %v717
      %734 = vmatpush.xpose.msra.mxu0 %v715
      %735 = vmatmul.f32.gmra.mxu0 %v711
      %v736 = vpop.f32.mrf.mxu0
      %v737 = vadd.f32 %v130, %v736
      %738 = vmatmul.f32.gmra.mxu0 %v713
      %v739 = vpop.f32.mrf.mxu0
      %v740 = vadd.f32 %v131, %v739
      %741 = vdwg.mxu0
      %v742 = vsel %vm134, %v737, -inf
      %743 = vmax.xlane.f32.xlu0 %v742
      %v744 = vpop.xlane.xlu0 %743
      %v745 = vsel %vm134, %v740, -inf
      %746 = vmax.xlane.f32.xlu0 %v745
      %v747 = vpop.xlane.xlu0 %746
      %v748 = vsub.f32 %v737, %v744
      %v749 = vsub.f32 %v740, %v747
      %v750 = vmul.f32 %v748, 1.442695
      %v751 = vpow.pop %v750
      %v752 = vmul.f32 %v749, 1.442695
      %v753 = vpow.pop %v752
      %v754 = vsel %vm134, %v751, 0.0
      %755 = vadd.xlane.f32.xlu0 %v754
      %v756 = vpop.xlane.xlu0 %755
      %v757 = vsel %vm134, %v753, 0.0
      %758 = vadd.xlane.f32.xlu0 %v757
      %v759 = vpop.xlane.xlu0 %758
      %v760 = vrcp.pop %v756
      %v761 = vrcp.pop %v759
      %v762 = vmul.f32 %v751, %v760
      %v763 = vmul.f32 %v753, %v761
      %764 = vrot.lane.b32.xlu0 %v121, 32
      %v765 = vpop.permute.xlu0 %764
      %766 = vrot.lane.b32.xlu0 %v122, 32
      %v767 = vpop.permute.xlu0 %766
      %v771 = vsel %vm134, %v762, 0
      %v774 = vsel %vm134, %v763, 0
      %776 = vmatpush.msra.mxu0 0.0
      %777 = vmatpush.msra.mxu0 0.0
      %778 = vmatpush.msra.mxu0 0.0
      %779 = vmatpush.msra.mxu0 0.0
      %780 = vmatpush.msra.mxu0 0.0
      %781 = vmatpush.msra.mxu0 0.0
      %782 = vmatpush.msra.mxu0 0.0
      %783 = vmatpush.msra.mxu0 0.0
      %784 = vmatpush.msra.mxu0 0.0
      %785 = vmatpush.msra.mxu0 0.0
      %786 = vmatpush.msra.mxu0 0.0
      %787 = vmatpush.msra.mxu0 0.0
      %788 = vmatpush.msra.mxu0 0.0
      %789 = vmatpush.msra.mxu0 0.0
      %790 = vmatpush.msra.mxu0 %v767
      %791 = vmatpush.msra.mxu0 %v765
      %792 = vmatmul.f32.gmra.mxu0 %v771
      %v793 = vpop.f32.mrf.mxu0
      %v794 = vadd.f32 0.0, %v793
      %795 = vmatmul.f32.gmra.mxu0 %v774
      %v796 = vpop.f32.mrf.mxu0
      %v797 = vadd.f32 0.0, %v796
      %798 = vdwg.mxu0
      %799 = vrot.lane.b32.xlu0 %v132, 16
      %v800 = vpop.permute.xlu0 %799
      %801 = vrot.lane.b32.xlu0 %v133, 16
      %v802 = vpop.permute.xlu0 %801
      %803 = vrot.lane.b32.xlu0 %v119, 16
      %v804 = vpop.permute.xlu0 %803
      %805 = vrot.lane.b32.xlu0 %v120, 16
      %v806 = vpop.permute.xlu0 %805
      %v807 = vsel %vm134, %v800, 0
      %v809 = vsel %vm134, %v802, 0
      %v811 = vsel %vm134, %v804, 0
      %v813 = vsel %vm134, %v806, 0
      %815 = vmatpush.xpose.msra.mxu0 0.0
      %816 = vmatpush.xpose.msra.mxu0 0.0
      %817 = vmatpush.xpose.msra.mxu0 0.0
      %818 = vmatpush.xpose.msra.mxu0 0.0
      %819 = vmatpush.xpose.msra.mxu0 0.0
      %820 = vmatpush.xpose.msra.mxu0 0.0
      %821 = vmatpush.xpose.msra.mxu0 0.0
      %822 = vmatpush.xpose.msra.mxu0 0.0
      %823 = vmatpush.xpose.msra.mxu0 0.0
      %824 = vmatpush.xpose.msra.mxu0 0.0
      %825 = vmatpush.xpose.msra.mxu0 0.0
      %826 = vmatpush.xpose.msra.mxu0 0.0
      %827 = vmatpush.xpose.msra.mxu0 0.0
      %828 = vmatpush.xpose.msra.mxu0 0.0
      %829 = vmatpush.xpose.msra.mxu0 %v813
      %830 = vmatpush.xpose.msra.mxu0 %v811
      %831 = vmatmul.f32.gmra.mxu0 %v807
      %v832 = vpop.f32.mrf.mxu0
      %v833 = vadd.f32 %v130, %v832
      %834 = vmatmul.f32.gmra.mxu0 %v809
      %v835 = vpop.f32.mrf.mxu0
      %v836 = vadd.f32 %v131, %v835
      %837 = vdwg.mxu0
      %v838 = vsel %vm134, %v833, -inf
      %839 = vmax.xlane.f32.xlu0 %v838
      %v840 = vpop.xlane.xlu0 %839
      %v841 = vsel %vm134, %v836, -inf
      %842 = vmax.xlane.f32.xlu0 %v841
      %v843 = vpop.xlane.xlu0 %842
      %v844 = vsub.f32 %v833, %v840
      %v845 = vsub.f32 %v836, %v843
      %v846 = vmul.f32 %v844, 1.442695
      %v847 = vpow.pop %v846
      %v848 = vmul.f32 %v845, 1.442695
      %v849 = vpow.pop %v848
      %v850 = vsel %vm134, %v847, 0.0
      %851 = vadd.xlane.f32.xlu0 %v850
      %v852 = vpop.xlane.xlu0 %851
      %v853 = vsel %vm134, %v849, 0.0
      %854 = vadd.xlane.f32.xlu0 %v853
      %v855 = vpop.xlane.xlu0 %854
      %v856 = vrcp.pop %v852
      %v857 = vrcp.pop %v855
      %v858 = vmul.f32 %v847, %v856
      %v859 = vmul.f32 %v849, %v857
      %860 = vrot.lane.b32.xlu0 %v121, 16
      %v861 = vpop.permute.xlu0 %860
      %862 = vrot.lane.b32.xlu0 %v122, 16
      %v863 = vpop.permute.xlu0 %862
      %v867 = vsel %vm134, %v858, 0
      %v870 = vsel %vm134, %v859, 0
      %872 = vmatpush.msra.mxu0 0.0
      %873 = vmatpush.msra.mxu0 0.0
      %874 = vmatpush.msra.mxu0 0.0
      %875 = vmatpush.msra.mxu0 0.0
      %876 = vmatpush.msra.mxu0 0.0
      %877 = vmatpush.msra.mxu0 0.0
      %878 = vmatpush.msra.mxu0 0.0
      %879 = vmatpush.msra.mxu0 0.0
      %880 = vmatpush.msra.mxu0 0.0
      %881 = vmatpush.msra.mxu0 0.0
      %882 = vmatpush.msra.mxu0 0.0
      %883 = vmatpush.msra.mxu0 0.0
      %884 = vmatpush.msra.mxu0 0.0
      %885 = vmatpush.msra.mxu0 0.0
      %886 = vmatpush.msra.mxu0 %v863
      %887 = vmatpush.msra.mxu0 %v861
      %888 = vmatmul.f32.gmra.mxu0 %v867
      %v889 = vpop.f32.mrf.mxu0
      %v890 = vadd.f32 0.0, %v889
      %891 = vmatmul.f32.gmra.mxu0 %v870
      %v892 = vpop.f32.mrf.mxu0
      %v893 = vadd.f32 0.0, %v892
      %894 = vdwg.mxu0
      %897 = vrot.lane.b32.xlu0 %v314, 16
      %v898 = vpop.permute.xlu0 %897
      %899 = vrot.lane.b32.xlu0 %v317, 16
      %v900 = vpop.permute.xlu0 %899
      %905 = vrot.lane.b32.xlu0 %v410, 32
      %v906 = vpop.permute.xlu0 %905
      %907 = vrot.lane.b32.xlu0 %v413, 32
      %v908 = vpop.permute.xlu0 %907
      %913 = vrot.lane.b32.xlu0 %v506, 48
      %v914 = vpop.permute.xlu0 %913
      %915 = vrot.lane.b32.xlu0 %v509, 48
      %v916 = vpop.permute.xlu0 %915
      %921 = vrot.lane.b32.xlu0 %v602, 64
      %v922 = vpop.permute.xlu0 %921
      %923 = vrot.lane.b32.xlu0 %v605, 64
      %v924 = vpop.permute.xlu0 %923
      %929 = vrot.lane.b32.xlu0 %v698, 80
      %v930 = vpop.permute.xlu0 %929
      %931 = vrot.lane.b32.xlu0 %v701, 80
      %v932 = vpop.permute.xlu0 %931
      %937 = vrot.lane.b32.xlu0 %v794, 96
      %v938 = vpop.permute.xlu0 %937
      %939 = vrot.lane.b32.xlu0 %v797, 96
      %v940 = vpop.permute.xlu0 %939
      %945 = vrot.lane.b32.xlu0 %v890, 112
      %v946 = vpop.permute.xlu0 %945
      %947 = vrot.lane.b32.xlu0 %v893, 112
      %v948 = vpop.permute.xlu0 %947
      %v951 = vsel %vm134, %v216, %v898
      %v952 = vsel %vm134, %v219, %v900
      %vm953 = vcmask 261120
      %v954 = vsel %vm953, %v951, %v906
      %v955 = vsel %vm953, %v952, %v908
      %vm956 = vcmask 392192
      %v957 = vsel %vm956, %v954, %v914
      %v958 = vsel %vm956, %v955, %v916
      %vm959 = vcmask 523264
      %v960 = vsel %vm959, %v957, %v922
      %v961 = vsel %vm959, %v958, %v924
      %vm962 = vcmask 654336
      %v963 = vsel %vm962, %v960, %v930
      %v964 = vsel %vm962, %v961, %v932
      %vm965 = vcmask 785408
      %v966 = vsel %vm965, %v963, %v938
      %v967 = vsel %vm965, %v964, %v940
      %vm968 = vcmask 916480
      %v969 = vsel %vm968, %v966, %v946
      %v970 = vsel %vm968, %v967, %v948
      %971 = vst [vmem:[%s116] sm:$0xff] %v969
      %972 = vst [vmem:[%s116 + $0x8] sm:$0xff] %v970
      %p973 = scmp.lt.s32.totalorder %s12, 1
      %s974 = scalar_select %p973, %s12, 1
      %s975 = smul.addr %s974, 2
      %s976 = smul.addr %s975, 8
      %s977 = scalar_lea.vmem %s1, %s976
      // Predicated region
      $region25: #{transformer_forward.49} parent=23 // pred_check
        %p978 = pneg %p56
      $region26: #{transformer_forward.49} parent=23 // pred_check_branch
        %980 = sbr.rel (%p978) target = $region28
      $region27: #{transformer_forward.49} parent=23 // pred_region
        _
      $region28: #{transformer_forward.49} parent=23 // pred_fallthru
        _
    $region24: #{transformer_forward.49} parent=5 // pred_fallthru
      _
    %p981 = scmp.le.s32.totalorder 2, %s7
    // Predicated region
    $region29: #{transformer_forward.49} parent=5 // pred_check
      %p982 = pneg %p981
    $region30: #{transformer_forward.49} parent=5 // pred_check_branch
      %984 = sbr.rel (%p982) target = $region32
    $region31: #{transformer_forward.49} parent=5 // pred_region
      %s985 = ssub.s32 %s7, 2
      // Predicated region
      $region33: #{transformer_forward.49} parent=31 // pred_check
        %p986 = pneg %p62
      $region34: #{transformer_forward.49} parent=31 // pred_check_branch
        %988 = sbr.rel (%p986) target = $region36
      $region35: #{transformer_forward.49} parent=31 // pred_region
        %p989 = scmp.lt.s32.totalorder %s13, 1
        %s990 = scalar_select %p989, %s13, 1
        %s991 = smul.addr %s990, 2
        %s992 = smul.addr %s991, 8
        %s993 = scalar_lea.vmem %s1, %s992
      $region36: #{transformer_forward.49} parent=31 // pred_fallthru
        _
    $region32: #{transformer_forward.49} parent=5 // pred_fallthru
      _
  $region6: #{transformer_forward.49} parent=0 // loop_footer
    %s11 = sadd.s32 1, %s7
  $region7: #{transformer_forward.49} parent=0 // loop_footer_branch
    %6 = sbr.rel target = $region3
  $region8: #{transformer_forward.49} parent=0 // loop_exit
    _

// kernel: transformer_forward.51
$region0: #{transformer_forward.51}
  #allocation0 [shape = 'u32[]', space=smem, size = 0x4, offset = 0x4, fixed_abs, tag = 'smem constant byte address 0x4 - core index']
  #allocation1 [shape = 'u32[72,128]{1,0:T(1,128)}', space=vmem, size = 0x9000, scoped, tag = 'internal scratch']
  %s0 = inlined_call_operand.vmem [shape: f32[32,128], index: 0, kind: input, shape index: {}]
  %s1 = inlined_call_operand.vmem [shape: f32[32,128], index: 1, kind: input, shape index: {}]
  %s2 = inlined_call_operand.vmem [shape: f32[1,128], index: 2, kind: input, shape index: {}]
  %s3 = inlined_call_operand.vmem [shape: f32[1,128], index: 3, kind: input, shape index: {}]
  %s4 = inlined_call_operand.vmem [shape: f32[32,128], index: 4, kind: output, shape index: {}]
  %s5 = sld [smem:[#allocation0]]
  $region26: #{transformer_forward.51} parent=0
    _
  %s7 = ssub.s32 1, %s5
  %s8 = scalar_select 0, %s7, %s5
  // Predicated region
  $region2: #{transformer_forward.51} parent=0 // pred_check
    _
  $region3: #{transformer_forward.51} parent=0 // pred_check_branch
    %10 = sbr.rel (0) target = $region5
  $region4: #{transformer_forward.51} parent=0 // pred_region
    _
  $region5: #{transformer_forward.51} parent=0 // pred_fallthru
    _
  // Predicated region
  $region6: #{transformer_forward.51} parent=0 // pred_check
    _
  $region7: #{transformer_forward.51} parent=0 // pred_check_branch
    %12 = sbr.rel (0) target = $region9
  $region8: #{transformer_forward.51} parent=0 // pred_region
    _
  $region9: #{transformer_forward.51} parent=0 // pred_fallthru
    _
  // Predicated region
  $region10: #{transformer_forward.51} parent=0 // pred_check
    _
  $region11: #{transformer_forward.51} parent=0 // pred_check_branch
    %14 = sbr.rel (0) target = $region13
  $region12: #{transformer_forward.51} parent=0 // pred_region
    _
  $region13: #{transformer_forward.51} parent=0 // pred_fallthru
    _
  // Predicated region
  $region14: #{transformer_forward.51} parent=0 // pred_check
    _
  $region15: #{transformer_forward.51} parent=0 // pred_check_branch
    %16 = sbr.rel (0) target = $region17
  $region16: #{transformer_forward.51} parent=0 // pred_region
    _
  $region17: #{transformer_forward.51} parent=0 // pred_fallthru
    _
  %v17 = vld [vmem:[%s0] sm:$0xff]
  %v18 = vld [vmem:[%s0 + $0x8] sm:$0xff]
  %v19 = vld [vmem:[%s0 + $0x10] sm:$0xff]
  %v20 = vld [vmem:[%s0 + $0x18] sm:$0xff]
  %v21 = vld [vmem:[%s1] sm:$0xff]
  %v22 = vld [vmem:[%s1 + $0x8] sm:$0xff]
  %v23 = vld [vmem:[%s1 + $0x10] sm:$0xff]
  %v24 = vld [vmem:[%s1 + $0x18] sm:$0xff]
  %v25 = vadd.f32 %v17, %v21
  %v26 = vadd.f32 %v18, %v22
  %v27 = vadd.f32 %v19, %v23
  %v28 = vadd.f32 %v20, %v24
  %29 = vadd.xlane.f32.xlu0 %v25
  %v30 = vpop.xlane.xlu0 %29
  %31 = vadd.xlane.f32.xlu0 %v26
  %v32 = vpop.xlane.xlu0 %31
  %33 = vadd.xlane.f32.xlu0 %v27
  %v34 = vpop.xlane.xlu0 %33
  %35 = vadd.xlane.f32.xlu0 %v28
  %v36 = vpop.xlane.xlu0 %35
  %v37 = vrcp.pop 128.0
  %v38 = vmul.f32 128.0, %v37
  %v39 = vsub.f32 1.0, %v38
  %v40 = vmul.f32 %v37, %v39
  %v41 = vadd.f32 %v37, %v40
  %vm42 = vweird.f32 %v37
  %v43 = vsel %vm42, %v37, %v41
  %v44 = vmul.f32 %v30, %v43
  %v45 = vmul.f32 %v32, %v43
  %v46 = vmul.f32 %v34, %v43
  %v47 = vmul.f32 %v36, %v43
  %v48 = vsub.f32 %v25, %v44
  %v49 = vsub.f32 %v26, %v45
  %v50 = vsub.f32 %v27, %v46
  %v51 = vsub.f32 %v28, %v47
  %v52 = vmul.f32 %v48, %v48
  %v53 = vmul.f32 %v49, %v49
  %v54 = vmul.f32 %v50, %v50
  %v55 = vmul.f32 %v51, %v51
  %56 = vadd.xlane.f32.xlu0 %v52
  %v57 = vpop.xlane.xlu0 %56
  %58 = vadd.xlane.f32.xlu0 %v53
  %v59 = vpop.xlane.xlu0 %58
  %60 = vadd.xlane.f32.xlu0 %v54
  %v61 = vpop.xlane.xlu0 %60
  %62 = vadd.xlane.f32.xlu0 %v55
  %v63 = vpop.xlane.xlu0 %62
  %v64 = vmul.f32 %v57, %v43
  %v65 = vmul.f32 %v59, %v43
  %v66 = vmul.f32 %v61, %v43
  %v67 = vmul.f32 %v63, %v43
  %v68 = vadd.f32 %v64, 1e-05
  %v69 = vadd.f32 %v65, 1e-05
  %v70 = vadd.f32 %v66, 1e-05
  %v71 = vadd.f32 %v67, 1e-05
  %v72 = vrsqrt.pop %v68
  %v73 = vmul.f32 %v72, %v68
  %v74 = vmul.f32 %v73, %v72
  %v75 = vmul.f32 0.5, %v74
  %v76 = vsub.f32 1.5, %v75
  %v77 = vmul.f32 %v72, %v76
  %vm78 = vweird.f32 %v68
  %vm79 = vweird.f32 %v72
  %vm80 = vmor %vm78, %vm79
  %v81 = vsel %vm80, %v72, %v77
  %v82 = vrsqrt.pop %v69
  %v83 = vmul.f32 %v82, %v69
  %v84 = vmul.f32 %v83, %v82
  %v85 = vmul.f32 0.5, %v84
  %v86 = vsub.f32 1.5, %v85
  %v87 = vmul.f32 %v82, %v86
  %vm88 = vweird.f32 %v69
  %vm89 = vweird.f32 %v82
  %vm90 = vmor %vm88, %vm89
  %v91 = vsel %vm90, %v82, %v87
  %v92 = vrsqrt.pop %v70
  %v93 = vmul.f32 %v92, %v70
  %v94 = vmul.f32 %v93, %v92
  %v95 = vmul.f32 0.5, %v94
  %v96 = vsub.f32 1.5, %v95
  %v97 = vmul.f32 %v92, %v96
  %vm98 = vweird.f32 %v70
  %vm99 = vweird.f32 %v92
  %vm100 = vmor %vm98, %vm99
  %v101 = vsel %vm100, %v92, %v97
  %v102 = vrsqrt.pop %v71
  %v103 = vmul.f32 %v102, %v71
  %v104 = vmul.f32 %v103, %v102
  %v105 = vmul.f32 0.5, %v104
  %v106 = vsub.f32 1.5, %v105
  %v107 = vmul.f32 %v102, %v106
  %vm108 = vweird.f32 %v71
  %vm109 = vweird.f32 %v102
  %vm110 = vmor %vm108, %vm109
  %v111 = vsel %vm110, %v102, %v107
  %v112 = vmul.f32 %v48, %v81
  %v113 = vmul.f32 %v49, %v91
  %v114 = vmul.f32 %v50, %v101
  %v115 = vmul.f32 %v51, %v111
  %v116 = vld [vmem:[%s2] sm:$0x1]
  %v118 = vperm.slane %v116, 0
  %v120 = vmul.f32 %v112, %v118
  %v121 = vmul.f32 %v113, %v118
  %v122 = vmul.f32 %v114, %v118
  %v123 = vmul.f32 %v115, %v118
  %v124 = vld [vmem:[%s3] sm:$0x1]
  %v126 = vperm.slane %v124, 0
  %v128 = vadd.f32 %v120, %v126
  %v129 = vadd.f32 %v121, %v126
  %v130 = vadd.f32 %v122, %v126
  %v131 = vadd.f32 %v123, %v126
  %132 = vst [vmem:[%s4] sm:$0xff] %v128
  %133 = vst [vmem:[%s4 + $0x8] sm:$0xff] %v129
  %134 = vst [vmem:[%s4 + $0x10] sm:$0xff] %v130
  %135 = vst [vmem:[%s4 + $0x18] sm:$0xff] %v131
  // Predicated region
  $region18: #{transformer_forward.51} parent=0 // pred_check
    _
  $region19: #{transformer_forward.51} parent=0 // pred_check_branch
    %137 = sbr.rel (0) target = $region21
  $region20: #{transformer_forward.51} parent=0 // pred_region
    _
  $region21: #{transformer_forward.51} parent=0 // pred_fallthru
    _
  // Predicated region
  $region22: #{transformer_forward.51} parent=0 // pred_check
    _
  $region23: #{transformer_forward.51} parent=0 // pred_check_branch
    %139 = sbr.rel (0) target = $region25
  $region24: #{transformer_forward.51} parent=0 // pred_region
    _
  $region25: #{transformer_forward.51} parent=0 // pred_fallthru
    _

// kernel: transformer_forward.33
$region0: #{transformer_forward.33}
  #allocation0 [shape = 'u32[]', space=smem, size = 0x4, offset = 0x4, fixed_abs, tag = 'smem constant byte address 0x4 - core index']
  #allocation1 [shape = 'u32[72,128]{1,0:T(1,128)}', space=vmem, size = 0x9000, scoped, tag = 'internal scratch']
  %s0 = inlined_call_operand.vmem [shape: f32[2,16,384], index: 0, kind: input, shape index: {}]
  %s1 = inlined_call_operand.vmem [shape: f32[2,16,128], index: 1, kind: output, shape index: {}]
  %s2 = sld [smem:[#allocation0]]
  $region37: #{transformer_forward.33} parent=0
    _
  %s4 = ssub.s32 1, %s2
  %s5 = scalar_select 0, %s4, %s2
  loop: start=0, step=1, limit=4
  $region2: #{transformer_forward.33} parent=0 // loop_pre_header
    _
  $region3: #{transformer_forward.33} parent=0 // loop_header
    %s7 = sphi 0, %s11
    %p8 = scmp.ge.s32.totalorder %s7, 4
    %s17 = sphi 0, %s19
    %s20 = sphi 0, %s17
    %s21 = sphi 0, %s20
    %s37 = sphi 0, %s21
    %s43 = sphi 0, %s45
    %s46 = sphi 0, %s43
    %s47 = sphi 0, %s46
    %s63 = sphi 0, %s47
  $region4: #{transformer_forward.33} parent=0 // loop_header_branch
    %10 = sbr.rel (%p8) target = $region8
  $region5: #{transformer_forward.33} parent=0 // loop_body
    %s12 = ssub.s32 %s7, 1
    %s13 = ssub.s32 %s7, 2
    %s14 = sadd.s32 %s7, 1
    %s15 = ssub.s32 %s7, %s14
    %p16 = scmp.eq.s32.totalorder %s15, 0
    %s18 = sadd.s32 %s17, 1
    %s19 = scalar_select %p16, %s17, %s18
    %p22 = pneg %p16
    %p23 = scmp.eq.s32.totalorder %s7, 1
    %p24 = por %p22, %p23
    %p25 = scmp.ne.s32.totalorder %s17, %s20
    %p26 = scmp.eq.s32.totalorder %s7, 0
    %p27 = por %p25, %p26
    %p28 = scmp.ne.s32.totalorder %s17, %s20
    %p29 = scmp.eq.s32.totalorder %s12, 1
    %p30 = por %p28, %p29
    %p31 = scmp.ne.s32.totalorder %s20, %s21
    %p32 = scmp.eq.s32.totalorder %s12, 0
    %p33 = por %p31, %p32
    %p34 = scmp.ne.s32.totalorder %s20, %s21
    %p35 = scmp.eq.s32.totalorder %s13, 1
    %p36 = por %p34, %p35
    %p38 = scmp.ne.s32.totalorder %s21, %s37
    %p39 = scmp.eq.s32.totalorder %s13, 0
    %p40 = por %p38, %p39
    %s41 = ssub.s32 %s7, %s14
    %p42 = scmp.eq.s32.totalorder %s41, 0
    %s44 = sadd.s32 %s43, 1
    %s45 = scalar_select %p42, %s43, %s44
    %p48 = pneg %p42
    %p49 = scmp.eq.s32.totalorder %s7, 1
    %p50 = por %p48, %p49
    %p51 = scmp.ne.s32.totalorder %s43, %s46
    %p52 = scmp.eq.s32.totalorder %s7, 0
    %p53 = por %p51, %p52
    %p54 = scmp.ne.s32.totalorder %s43, %s46
    %p55 = scmp.eq.s32.totalorder %s12, 1
    %p56 = por %p54, %p55
    %p57 = scmp.ne.s32.totalorder %s46, %s47
    %p58 = scmp.eq.s32.totalorder %s12, 0
    %p59 = por %p57, %p58
    %p60 = scmp.ne.s32.totalorder %s46, %s47
    %p61 = scmp.eq.s32.totalorder %s13, 1
    %p62 = por %p60, %p61
    %p64 = scmp.ne.s32.totalorder %s47, %s63
    %p65 = scmp.eq.s32.totalorder %s13, 0
    %p66 = por %p64, %p65
    %p67 = scmp.le.s32.totalorder 1, %s7
    %p68 = scmp.lt.s32.totalorder %s7, 3
    %p69 = pnand %p67, %p68
    %p70 = pneg %p69
    // Predicated region
    $region9: #{transformer_forward.33} parent=5 // pred_check
      _
    $region10: #{transformer_forward.33} parent=5 // pred_check_branch
      %72 = sbr.rel (%p69) target = $region12
    $region11: #{transformer_forward.33} parent=5 // pred_region
      %s73 = ssub.s32 %s7, 1
    $region12: #{transformer_forward.33} parent=5 // pred_fallthru
      _
    %p74 = scmp.lt.s32.totalorder %s7, 2
    // Predicated region
    $region13: #{transformer_forward.33} parent=5 // pred_check
      %p75 = pneg %p74
    $region14: #{transformer_forward.33} parent=5 // pred_check_branch
      %77 = sbr.rel (%p75) target = $region16
    $region15: #{transformer_forward.33} parent=5 // pred_region
      // Predicated region
      $region17: #{transformer_forward.33} parent=15 // pred_check
        %p78 = pneg %p27
      $region18: #{transformer_forward.33} parent=15 // pred_check_branch
        %80 = sbr.rel (%p78) target = $region20
      $region19: #{transformer_forward.33} parent=15 // pred_region
        %p81 = scmp.lt.s32.totalorder %s7, 1
        %s82 = scalar_select %p81, %s7, 1
        %s83 = smul.addr %s82, 6
        %s84 = smul.addr %s83, 8
        %s85 = scalar_lea.vmem %s0, %s84
      $region20: #{transformer_forward.33} parent=15 // pred_fallthru
        _
    $region16: #{transformer_forward.33} parent=5 // pred_fallthru
      _
    %p86 = scmp.le.s32.totalorder 1, %s7
    %p87 = scmp.lt.s32.totalorder %s7, 3
    %p88 = pnand %p86, %p87
    %p89 = pneg %p88
    // Predicated region
    $region21: #{transformer_forward.33} parent=5 // pred_check
      _
    $region22: #{transformer_forward.33} parent=5 // pred_check_branch
      %91 = sbr.rel (%p88) target = $region24
    $region23: #{transformer_forward.33} parent=5 // pred_region
      %s92 = ssub.s32 %s7, 1
      %p93 = scmp.lt.s32.totalorder %s12, 1
      %s94 = scalar_select %p93, %s12, 1
      %s95 = smul.addr %s94, 6
      %s96 = smul.addr %s95, 8
      %s97 = scalar_lea.vmem %s0, %s96
      %p98 = pneg %p33
      %p99 = pneg %p30
      %p100 = pneg %p59
      %p101 = pneg %p56
      %p102 = scmp.lt.s32.totalorder %s12, 1
      %s103 = scalar_select %p102, %s12, 1
      %s104 = smul.addr %s103, 2
      %s105 = smul.addr %s104, 8
      %s106 = scalar_lea.vmem %s1, %s105
      %p107 = scmp.lt.s32.totalorder %s12, 1
      %s108 = scalar_select %p107, %s12, 1
      %s109 = smul.addr %s108, 6
      %s110 = smul.addr %s109, 8
      %s111 = scalar_lea.vmem %s0, %s110
      %p112 = scmp.lt.s32.totalorder %s12, 1
      %s113 = scalar_select %p112, %s12, 1
      %s114 = smul.addr %s113, 2
      %s115 = smul.addr %s114, 8
      %s116 = scalar_lea.vmem %s1, %s115
      %v117 = vld [vmem:[%s111] sm:$0xff]
      %v118 = vld [vmem:[%s111 + $0x18] sm:$0xff]
      %v119 = vld [vmem:[%s111 + $0x8] sm:$0xff]
      %v120 = vld [vmem:[%s111 + $0x20] sm:$0xff]
      %v121 = vld [vmem:[%s111 + $0x10] sm:$0xff]
      %v122 = vld [vmem:[%s111 + $0x28] sm:$0xff]
      %v123 = vmul.f32 %v117, 0.25
      %v124 = vmul.f32 %v118, 0.25
      %vm125 = vcmask 130048
      %v127 = vsel %vm125, %v123, 0
      %v130 = vsel %vm125, %v124, 0
      %v133 = vsel %vm125, %v119, 0
      %v136 = vsel %vm125, %v120, 0
      %138 = vmatpush.xpose.msra.mxu0 0.0
      %139 = vmatpush.xpose.msra.mxu0 0.0
      %140 = vmatpush.xpose.msra.mxu0 0.0
      %141 = vmatpush.xpose.msra.mxu0 0.0
      %142 = vmatpush.xpose.msra.mxu0 0.0
      %143 = vmatpush.xpose.msra.mxu0 0.0
      %144 = vmatpush.xpose.msra.mxu0 0.0
      %145 = vmatpush.xpose.msra.mxu0 0.0
      %146 = vmatpush.xpose.msra.mxu0 0.0
      %147 = vmatpush.xpose.msra.mxu0 0.0
      %148 = vmatpush.xpose.msra.mxu0 0.0
      %149 = vmatpush.xpose.msra.mxu0 0.0
      %150 = vmatpush.xpose.msra.mxu0 0.0
      %151 = vmatpush.xpose.msra.mxu0 0.0
      %152 = vmatpush.xpose.msra.mxu0 %v136
      %153 = vmatpush.xpose.msra.mxu0 %v133
      %154 = vmatmul.f32.gmra.mxu0 %v127
      %v155 = vpop.f32.mrf.mxu0
      %v156 = vadd.f32 0.0, %v155
      %157 = vmatmul.f32.gmra.mxu0 %v130
      %v158 = vpop.f32.mrf.mxu0
      %v159 = vadd.f32 0.0, %v158
      %160 = vdwg.mxu0
      %v161 = vsel %vm125, %v156, -inf
      %162 = vmax.xlane.f32.xlu0 %v161
      %v163 = vpop.xlane.xlu0 %162
      %v164 = vsel %vm125, %v159, -inf
      %165 = vmax.xlane.f32.xlu0 %v164
      %v166 = vpop.xlane.xlu0 %165
      %v167 = vsub.f32 %v156, %v163
      %v168 = vsub.f32 %v159, %v166
      %v169 = vmul.f32 %v167, 1.442695
      %v170 = vpow.pop %v169
      %v171 = vmul.f32 %v168, 1.442695
      %v172 = vpow.pop %v171
      %v173 = vsel %vm125, %v170, 0.0
      %174 = vadd.xlane.f32.xlu0 %v173
      %v175 = vpop.xlane.xlu0 %174
      %v176 = vsel %vm125, %v172, 0.0
      %177 = vadd.xlane.f32.xlu0 %v176
      %v178 = vpop.xlane.xlu0 %177
      %v179 = vrcp.pop %v175
      %v180 = vrcp.pop %v178
      %v181 = vmul.f32 %v170, %v179
      %v182 = vmul.f32 %v172, %v180
      %v184 = vsel %vm125, %v181, 0
      %v187 = vsel %vm125, %v182, 0
      %189 = vmatpush.msra.mxu0 0.0
      %190 = vmatpush.msra.mxu0 0.0
      %191 = vmatpush.msra.mxu0 0.0
      %192 = vmatpush.msra.mxu0 0.0
      %193 = vmatpush.msra.mxu0 0.0
      %194 = vmatpush.msra.mxu0 0.0
      %195 = vmatpush.msra.mxu0 0.0
      %196 = vmatpush.msra.mxu0 0.0
      %197 = vmatpush.msra.mxu0 0.0
      %198 = vmatpush.msra.mxu0 0.0
      %199 = vmatpush.msra.mxu0 0.0
      %200 = vmatpush.msra.mxu0 0.0
      %201 = vmatpush.msra.mxu0 0.0
      %202 = vmatpush.msra.mxu0 0.0
      %203 = vmatpush.msra.mxu0 %v122
      %204 = vmatpush.msra.mxu0 %v121
      %205 = vmatmul.f32.gmra.mxu0 %v184
      %v206 = vpop.f32.mrf.mxu0
      %v207 = vadd.f32 0.0, %v206
      %208 = vmatmul.f32.gmra.mxu0 %v187
      %v209 = vpop.f32.mrf.mxu0
      %v210 = vadd.f32 0.0, %v209
      %211 = vdwg.mxu0
      %212 = vrot.lane.b32.xlu0 %v123, 112
      %v213 = vpop.permute.xlu0 %212
      %214 = vrot.lane.b32.xlu0 %v124, 112
      %v215 = vpop.permute.xlu0 %214
      %216 = vrot.lane.b32.xlu0 %v119, 112
      %v217 = vpop.permute.xlu0 %216
      %218 = vrot.lane.b32.xlu0 %v120, 112
      %v219 = vpop.permute.xlu0 %218
      %v220 = vsel %vm125, %v213, 0
      %v222 = vsel %vm125, %v215, 0
      %v224 = vsel %vm125, %v217, 0
      %v226 = vsel %vm125, %v219, 0
      %228 = vmatpush.xpose.msra.mxu0 0.0
      %229 = vmatpush.xpose.msra.mxu0 0.0
      %230 = vmatpush.xpose.msra.mxu0 0.0
      %231 = vmatpush.xpose.msra.mxu0 0.0
      %232 = vmatpush.xpose.msra.mxu0 0.0
      %233 = vmatpush.xpose.msra.mxu0 0.0
      %234 = vmatpush.xpose.msra.mxu0 0.0
      %235 = vmatpush.xpose.msra.mxu0 0.0
      %236 = vmatpush.xpose.msra.mxu0 0.0
      %237 = vmatpush.xpose.msra.mxu0 0.0
      %238 = vmatpush.xpose.msra.mxu0 0.0
      %239 = vmatpush.xpose.msra.mxu0 0.0
      %240 = vmatpush.xpose.msra.mxu0 0.0
      %241 = vmatpush.xpose.msra.mxu0 0.0
      %242 = vmatpush.xpose.msra.mxu0 %v226
      %243 = vmatpush.xpose.msra.mxu0 %v224
      %244 = vmatmul.f32.gmra.mxu0 %v220
      %v245 = vpop.f32.mrf.mxu0
      %v246 = vadd.f32 0.0, %v245
      %247 = vmatmul.f32.gmra.mxu0 %v222
      %v248 = vpop.f32.mrf.mxu0
      %v249 = vadd.f32 0.0, %v248
      %250 = vdwg.mxu0
      %v251 = vsel %vm125, %v246, -inf
      %252 = vmax.xlane.f32.xlu0 %v251
      %v253 = vpop.xlane.xlu0 %252
      %v254 = vsel %vm125, %v249, -inf
      %255 = vmax.xlane.f32.xlu0 %v254
      %v256 = vpop.xlane.xlu0 %255
      %v257 = vsub.f32 %v246, %v253
      %v258 = vsub.f32 %v249, %v256
      %v259 = vmul.f32 %v257, 1.442695
      %v260 = vpow.pop %v259
      %v261 = vmul.f32 %v258, 1.442695
      %v262 = vpow.pop %v261
      %v263 = vsel %vm125, %v260, 0.0
      %264 = vadd.xlane.f32.xlu0 %v263
      %v265 = vpop.xlane.xlu0 %264
      %v266 = vsel %vm125, %v262, 0.0
      %267 = vadd.xlane.f32.xlu0 %v266
      %v268 = vpop.xlane.xlu0 %267
      %v269 = vrcp.pop %v265
      %v270 = vrcp.pop %v268
      %v271 = vmul.f32 %v260, %v269
      %v272 = vmul.f32 %v262, %v270
      %275 = vrot.lane.b32.xlu0 %v121, 112
      %v276 = vpop.permute.xlu0 %275
      %277 = vrot.lane.b32.xlu0 %v122, 112
      %v278 = vpop.permute.xlu0 %277
      %v282 = vsel %vm125, %v271, 0
      %v285 = vsel %vm125, %v272, 0
      %287 = vmatpush.msra.mxu0 0.0
      %288 = vmatpush.msra.mxu0 0.0
      %289 = vmatpush.msra.mxu0 0.0
      %290 = vmatpush.msra.mxu0 0.0
      %291 = vmatpush.msra.mxu0 0.0
      %292 = vmatpush.msra.mxu0 0.0
      %293 = vmatpush.msra.mxu0 0.0
      %294 = vmatpush.msra.mxu0 0.0
      %295 = vmatpush.msra.mxu0 0.0
      %296 = vmatpush.msra.mxu0 0.0
      %297 = vmatpush.msra.mxu0 0.0
      %298 = vmatpush.msra.mxu0 0.0
      %299 = vmatpush.msra.mxu0 0.0
      %300 = vmatpush.msra.mxu0 0.0
      %301 = vmatpush.msra.mxu0 %v278
      %302 = vmatpush.msra.mxu0 %v276
      %303 = vmatmul.f32.gmra.mxu0 %v282
      %v304 = vpop.f32.mrf.mxu0
      %v305 = vadd.f32 0.0, %v304
      %306 = vmatmul.f32.gmra.mxu0 %v285
      %v307 = vpop.f32.mrf.mxu0
      %v308 = vadd.f32 0.0, %v307
      %309 = vdwg.mxu0
      %310 = vrot.lane.b32.xlu0 %v123, 96
      %v311 = vpop.permute.xlu0 %310
      %312 = vrot.lane.b32.xlu0 %v124, 96
      %v313 = vpop.permute.xlu0 %312
      %314 = vrot.lane.b32.xlu0 %v119, 96
      %v315 = vpop.permute.xlu0 %314
      %316 = vrot.lane.b32.xlu0 %v120, 96
      %v317 = vpop.permute.xlu0 %316
      %v318 = vsel %vm125, %v311, 0
      %v320 = vsel %vm125, %v313, 0
      %v322 = vsel %vm125, %v315, 0
      %v324 = vsel %vm125, %v317, 0
      %326 = vmatpush.xpose.msra.mxu0 0.0
      %327 = vmatpush.xpose.msra.mxu0 0.0
      %328 = vmatpush.xpose.msra.mxu0 0.0
      %329 = vmatpush.xpose.msra.mxu0 0.0
      %330 = vmatpush.xpose.msra.mxu0 0.0
      %331 = vmatpush.xpose.msra.mxu0 0.0
      %332 = vmatpush.xpose.msra.mxu0 0.0
      %333 = vmatpush.xpose.msra.mxu0 0.0
      %334 = vmatpush.xpose.msra.mxu0 0.0
      %335 = vmatpush.xpose.msra.mxu0 0.0
      %336 = vmatpush.xpose.msra.mxu0 0.0
      %337 = vmatpush.xpose.msra.mxu0 0.0
      %338 = vmatpush.xpose.msra.mxu0 0.0
      %339 = vmatpush.xpose.msra.mxu0 0.0
      %340 = vmatpush.xpose.msra.mxu0 %v324
      %341 = vmatpush.xpose.msra.mxu0 %v322
      %342 = vmatmul.f32.gmra.mxu0 %v318
      %v343 = vpop.f32.mrf.mxu0
      %v344 = vadd.f32 0.0, %v343
      %345 = vmatmul.f32.gmra.mxu0 %v320
      %v346 = vpop.f32.mrf.mxu0
      %v347 = vadd.f32 0.0, %v346
      %348 = vdwg.mxu0
      %v349 = vsel %vm125, %v344, -inf
      %350 = vmax.xlane.f32.xlu0 %v349
      %v351 = vpop.xlane.xlu0 %350
      %v352 = vsel %vm125, %v347, -inf
      %353 = vmax.xlane.f32.xlu0 %v352
      %v354 = vpop.xlane.xlu0 %353
      %v355 = vsub.f32 %v344, %v351
      %v356 = vsub.f32 %v347, %v354
      %v357 = vmul.f32 %v355, 1.442695
      %v358 = vpow.pop %v357
      %v359 = vmul.f32 %v356, 1.442695
      %v360 = vpow.pop %v359
      %v361 = vsel %vm125, %v358, 0.0
      %362 = vadd.xlane.f32.xlu0 %v361
      %v363 = vpop.xlane.xlu0 %362
      %v364 = vsel %vm125, %v360, 0.0
      %365 = vadd.xlane.f32.xlu0 %v364
      %v366 = vpop.xlane.xlu0 %365
      %v367 = vrcp.pop %v363
      %v368 = vrcp.pop %v366
      %v369 = vmul.f32 %v358, %v367
      %v370 = vmul.f32 %v360, %v368
      %371 = vrot.lane.b32.xlu0 %v121, 96
      %v372 = vpop.permute.xlu0 %371
      %373 = vrot.lane.b32.xlu0 %v122, 96
      %v374 = vpop.permute.xlu0 %373
      %v378 = vsel %vm125, %v369, 0
      %v381 = vsel %vm125, %v370, 0
      %383 = vmatpush.msra.mxu0 0.0
      %384 = vmatpush.msra.mxu0 0.0
      %385 = vmatpush.msra.mxu0 0.0
      %386 = vmatpush.msra.mxu0 0.0
      %387 = vmatpush.msra.mxu0 0.0
      %388 = vmatpush.msra.mxu0 0.0
      %389 = vmatpush.msra.mxu0 0.0
      %390 = vmatpush.msra.mxu0 0.0
      %391 = vmatpush.msra.mxu0 0.0
      %392 = vmatpush.msra.mxu0 0.0
      %393 = vmatpush.msra.mxu0 0.0
      %394 = vmatpush.msra.mxu0 0.0
      %395 = vmatpush.msra.mxu0 0.0
      %396 = vmatpush.msra.mxu0 0.0
      %397 = vmatpush.msra.mxu0 %v374
      %398 = vmatpush.msra.mxu0 %v372
      %399 = vmatmul.f32.gmra.mxu0 %v378
      %v400 = vpop.f32.mrf.mxu0
      %v401 = vadd.f32 0.0, %v400
      %402 = vmatmul.f32.gmra.mxu0 %v381
      %v403 = vpop.f32.mrf.mxu0
      %v404 = vadd.f32 0.0, %v403
      %405 = vdwg.mxu0
      %406 = vrot.lane.b32.xlu0 %v123, 80
      %v407 = vpop.permute.xlu0 %406
      %408 = vrot.lane.b32.xlu0 %v124, 80
      %v409 = vpop.permute.xlu0 %408
      %410 = vrot.lane.b32.xlu0 %v119, 80
      %v411 = vpop.permute.xlu0 %410
      %412 = vrot.lane.b32.xlu0 %v120, 80
      %v413 = vpop.permute.xlu0 %412
      %v414 = vsel %vm125, %v407, 0
      %v416 = vsel %vm125, %v409, 0
      %v418 = vsel %vm125, %v411, 0
      %v420 = vsel %vm125, %v413, 0
      %422 = vmatpush.xpose.msra.mxu0 0.0
      %423 = vmatpush.xpose.msra.mxu0 0.0
      %424 = vmatpush.xpose.msra.mxu0 0.0
      %425 = vmatpush.xpose.msra.mxu0 0.0
      %426 = vmatpush.xpose.msra.mxu0 0.0
      %427 = vmatpush.xpose.msra.mxu0 0.0
      %428 = vmatpush.xpose.msra.mxu0 0.0
      %429 = vmatpush.xpose.msra.mxu0 0.0
      %430 = vmatpush.xpose.msra.mxu0 0.0
      %431 = vmatpush.xpose.msra.mxu0 0.0
      %432 = vmatpush.xpose.msra.mxu0 0.0
      %433 = vmatpush.xpose.msra.mxu0 0.0
      %434 = vmatpush.xpose.msra.mxu0 0.0
      %435 = vmatpush.xpose.msra.mxu0 0.0
      %436 = vmatpush.xpose.msra.mxu0 %v420
      %437 = vmatpush.xpose.msra.mxu0 %v418
      %438 = vmatmul.f32.gmra.mxu0 %v414
      %v439 = vpop.f32.mrf.mxu0
      %v440 = vadd.f32 0.0, %v439
      %441 = vmatmul.f32.gmra.mxu0 %v416
      %v442 = vpop.f32.mrf.mxu0
      %v443 = vadd.f32 0.0, %v442
      %444 = vdwg.mxu0
      %v445 = vsel %vm125, %v440, -inf
      %446 = vmax.xlane.f32.xlu0 %v445
      %v447 = vpop.xlane.xlu0 %446
      %v448 = vsel %vm125, %v443, -inf
      %449 = vmax.xlane.f32.xlu0 %v448
      %v450 = vpop.xlane.xlu0 %449
      %v451 = vsub.f32 %v440, %v447
      %v452 = vsub.f32 %v443, %v450
      %v453 = vmul.f32 %v451, 1.442695
      %v454 = vpow.pop %v453
      %v455 = vmul.f32 %v452, 1.442695
      %v456 = vpow.pop %v455
      %v457 = vsel %vm125, %v454, 0.0
      %458 = vadd.xlane.f32.xlu0 %v457
      %v459 = vpop.xlane.xlu0 %458
      %v460 = vsel %vm125, %v456, 0.0
      %461 = vadd.xlane.f32.xlu0 %v460
      %v462 = vpop.xlane.xlu0 %461
      %v463 = vrcp.pop %v459
      %v464 = vrcp.pop %v462
      %v465 = vmul.f32 %v454, %v463
      %v466 = vmul.f32 %v456, %v464
      %467 = vrot.lane.b32.xlu0 %v121, 80
      %v468 = vpop.permute.xlu0 %467
      %469 = vrot.lane.b32.xlu0 %v122, 80
      %v470 = vpop.permute.xlu0 %469
      %v474 = vsel %vm125, %v465, 0
      %v477 = vsel %vm125, %v466, 0
      %479 = vmatpush.msra.mxu0 0.0
      %480 = vmatpush.msra.mxu0 0.0
      %481 = vmatpush.msra.mxu0 0.0
      %482 = vmatpush.msra.mxu0 0.0
      %483 = vmatpush.msra.mxu0 0.0
      %484 = vmatpush.msra.mxu0 0.0
      %485 = vmatpush.msra.mxu0 0.0
      %486 = vmatpush.msra.mxu0 0.0
      %487 = vmatpush.msra.mxu0 0.0
      %488 = vmatpush.msra.mxu0 0.0
      %489 = vmatpush.msra.mxu0 0.0
      %490 = vmatpush.msra.mxu0 0.0
      %491 = vmatpush.msra.mxu0 0.0
      %492 = vmatpush.msra.mxu0 0.0
      %493 = vmatpush.msra.mxu0 %v470
      %494 = vmatpush.msra.mxu0 %v468
      %495 = vmatmul.f32.gmra.mxu0 %v474
      %v496 = vpop.f32.mrf.mxu0
      %v497 = vadd.f32 0.0, %v496
      %498 = vmatmul.f32.gmra.mxu0 %v477
      %v499 = vpop.f32.mrf.mxu0
      %v500 = vadd.f32 0.0, %v499
      %501 = vdwg.mxu0
      %502 = vrot.lane.b32.xlu0 %v123, 64
      %v503 = vpop.permute.xlu0 %502
      %504 = vrot.lane.b32.xlu0 %v124, 64
      %v505 = vpop.permute.xlu0 %504
      %506 = vrot.lane.b32.xlu0 %v119, 64
      %v507 = vpop.permute.xlu0 %506
      %508 = vrot.lane.b32.xlu0 %v120, 64
      %v509 = vpop.permute.xlu0 %508
      %v510 = vsel %vm125, %v503, 0
      %v512 = vsel %vm125, %v505, 0
      %v514 = vsel %vm125, %v507, 0
      %v516 = vsel %vm125, %v509, 0
      %518 = vmatpush.xpose.msra.mxu0 0.0
      %519 = vmatpush.xpose.msra.mxu0 0.0
      %520 = vmatpush.xpose.msra.mxu0 0.0
      %521 = vmatpush.xpose.msra.mxu0 0.0
      %522 = vmatpush.xpose.msra.mxu0 0.0
      %523 = vmatpush.xpose.msra.mxu0 0.0
      %524 = vmatpush.xpose.msra.mxu0 0.0
      %525 = vmatpush.xpose.msra.mxu0 0.0
      %526 = vmatpush.xpose.msra.mxu0 0.0
      %527 = vmatpush.xpose.msra.mxu0 0.0
      %528 = vmatpush.xpose.msra.mxu0 0.0
      %529 = vmatpush.xpose.msra.mxu0 0.0
      %530 = vmatpush.xpose.msra.mxu0 0.0
      %531 = vmatpush.xpose.msra.mxu0 0.0
      %532 = vmatpush.xpose.msra.mxu0 %v516
      %533 = vmatpush.xpose.msra.mxu0 %v514
      %534 = vmatmul.f32.gmra.mxu0 %v510
      %v535 = vpop.f32.mrf.mxu0
      %v536 = vadd.f32 0.0, %v535
      %537 = vmatmul.f32.gmra.mxu0 %v512
      %v538 = vpop.f32.mrf.mxu0
      %v539 = vadd.f32 0.0, %v538
      %540 = vdwg.mxu0
      %v541 = vsel %vm125, %v536, -inf
      %542 = vmax.xlane.f32.xlu0 %v541
      %v543 = vpop.xlane.xlu0 %542
      %v544 = vsel %vm125, %v539, -inf
      %545 = vmax.xlane.f32.xlu0 %v544
      %v546 = vpop.xlane.xlu0 %545
      %v547 = vsub.f32 %v536, %v543
      %v548 = vsub.f32 %v539, %v546
      %v549 = vmul.f32 %v547, 1.442695
      %v550 = vpow.pop %v549
      %v551 = vmul.f32 %v548, 1.442695
      %v552 = vpow.pop %v551
      %v553 = vsel %vm125, %v550, 0.0
      %554 = vadd.xlane.f32.xlu0 %v553
      %v555 = vpop.xlane.xlu0 %554
      %v556 = vsel %vm125, %v552, 0.0
      %557 = vadd.xlane.f32.xlu0 %v556
      %v558 = vpop.xlane.xlu0 %557
      %v559 = vrcp.pop %v555
      %v560 = vrcp.pop %v558
      %v561 = vmul.f32 %v550, %v559
      %v562 = vmul.f32 %v552, %v560
      %563 = vrot.lane.b32.xlu0 %v121, 64
      %v564 = vpop.permute.xlu0 %563
      %565 = vrot.lane.b32.xlu0 %v122, 64
      %v566 = vpop.permute.xlu0 %565
      %v570 = vsel %vm125, %v561, 0
      %v573 = vsel %vm125, %v562, 0
      %575 = vmatpush.msra.mxu0 0.0
      %576 = vmatpush.msra.mxu0 0.0
      %577 = vmatpush.msra.mxu0 0.0
      %578 = vmatpush.msra.mxu0 0.0
      %579 = vmatpush.msra.mxu0 0.0
      %580 = vmatpush.msra.mxu0 0.0
      %581 = vmatpush.msra.mxu0 0.0
      %582 = vmatpush.msra.mxu0 0.0
      %583 = vmatpush.msra.mxu0 0.0
      %584 = vmatpush.msra.mxu0 0.0
      %585 = vmatpush.msra.mxu0 0.0
      %586 = vmatpush.msra.mxu0 0.0
      %587 = vmatpush.msra.mxu0 0.0
      %588 = vmatpush.msra.mxu0 0.0
      %589 = vmatpush.msra.mxu0 %v566
      %590 = vmatpush.msra.mxu0 %v564
      %591 = vmatmul.f32.gmra.mxu0 %v570
      %v592 = vpop.f32.mrf.mxu0
      %v593 = vadd.f32 0.0, %v592
      %594 = vmatmul.f32.gmra.mxu0 %v573
      %v595 = vpop.f32.mrf.mxu0
      %v596 = vadd.f32 0.0, %v595
      %597 = vdwg.mxu0
      %598 = vrot.lane.b32.xlu0 %v123, 48
      %v599 = vpop.permute.xlu0 %598
      %600 = vrot.lane.b32.xlu0 %v124, 48
      %v601 = vpop.permute.xlu0 %600
      %602 = vrot.lane.b32.xlu0 %v119, 48
      %v603 = vpop.permute.xlu0 %602
      %604 = vrot.lane.b32.xlu0 %v120, 48
      %v605 = vpop.permute.xlu0 %604
      %v606 = vsel %vm125, %v599, 0
      %v608 = vsel %vm125, %v601, 0
      %v610 = vsel %vm125, %v603, 0
      %v612 = vsel %vm125, %v605, 0
      %614 = vmatpush.xpose.msra.mxu0 0.0
      %615 = vmatpush.xpose.msra.mxu0 0.0
      %616 = vmatpush.xpose.msra.mxu0 0.0
      %617 = vmatpush.xpose.msra.mxu0 0.0
      %618 = vmatpush.xpose.msra.mxu0 0.0
      %619 = vmatpush.xpose.msra.mxu0 0.0
      %620 = vmatpush.xpose.msra.mxu0 0.0
      %621 = vmatpush.xpose.msra.mxu0 0.0
      %622 = vmatpush.xpose.msra.mxu0 0.0
      %623 = vmatpush.xpose.msra.mxu0 0.0
      %624 = vmatpush.xpose.msra.mxu0 0.0
      %625 = vmatpush.xpose.msra.mxu0 0.0
      %626 = vmatpush.xpose.msra.mxu0 0.0
      %627 = vmatpush.xpose.msra.mxu0 0.0
      %628 = vmatpush.xpose.msra.mxu0 %v612
      %629 = vmatpush.xpose.msra.mxu0 %v610
      %630 = vmatmul.f32.gmra.mxu0 %v606
      %v631 = vpop.f32.mrf.mxu0
      %v632 = vadd.f32 0.0, %v631
      %633 = vmatmul.f32.gmra.mxu0 %v608
      %v634 = vpop.f32.mrf.mxu0
      %v635 = vadd.f32 0.0, %v634
      %636 = vdwg.mxu0
      %v637 = vsel %vm125, %v632, -inf
      %638 = vmax.xlane.f32.xlu0 %v637
      %v639 = vpop.xlane.xlu0 %638
      %v640 = vsel %vm125, %v635, -inf
      %641 = vmax.xlane.f32.xlu0 %v640
      %v642 = vpop.xlane.xlu0 %641
      %v643 = vsub.f32 %v632, %v639
      %v644 = vsub.f32 %v635, %v642
      %v645 = vmul.f32 %v643, 1.442695
      %v646 = vpow.pop %v645
      %v647 = vmul.f32 %v644, 1.442695
      %v648 = vpow.pop %v647
      %v649 = vsel %vm125, %v646, 0.0
      %650 = vadd.xlane.f32.xlu0 %v649
      %v651 = vpop.xlane.xlu0 %650
      %v652 = vsel %vm125, %v648, 0.0
      %653 = vadd.xlane.f32.xlu0 %v652
      %v654 = vpop.xlane.xlu0 %653
      %v655 = vrcp.pop %v651
      %v656 = vrcp.pop %v654
      %v657 = vmul.f32 %v646, %v655
      %v658 = vmul.f32 %v648, %v656
      %659 = vrot.lane.b32.xlu0 %v121, 48
      %v660 = vpop.permute.xlu0 %659
      %661 = vrot.lane.b32.xlu0 %v122, 48
      %v662 = vpop.permute.xlu0 %661
      %v666 = vsel %vm125, %v657, 0
      %v669 = vsel %vm125, %v658, 0
      %671 = vmatpush.msra.mxu0 0.0
      %672 = vmatpush.msra.mxu0 0.0
      %673 = vmatpush.msra.mxu0 0.0
      %674 = vmatpush.msra.mxu0 0.0
      %675 = vmatpush.msra.mxu0 0.0
      %676 = vmatpush.msra.mxu0 0.0
      %677 = vmatpush.msra.mxu0 0.0
      %678 = vmatpush.msra.mxu0 0.0
      %679 = vmatpush.msra.mxu0 0.0
      %680 = vmatpush.msra.mxu0 0.0
      %681 = vmatpush.msra.mxu0 0.0
      %682 = vmatpush.msra.mxu0 0.0
      %683 = vmatpush.msra.mxu0 0.0
      %684 = vmatpush.msra.mxu0 0.0
      %685 = vmatpush.msra.mxu0 %v662
      %686 = vmatpush.msra.mxu0 %v660
      %687 = vmatmul.f32.gmra.mxu0 %v666
      %v688 = vpop.f32.mrf.mxu0
      %v689 = vadd.f32 0.0, %v688
      %690 = vmatmul.f32.gmra.mxu0 %v669
      %v691 = vpop.f32.mrf.mxu0
      %v692 = vadd.f32 0.0, %v691
      %693 = vdwg.mxu0
      %694 = vrot.lane.b32.xlu0 %v123, 32
      %v695 = vpop.permute.xlu0 %694
      %696 = vrot.lane.b32.xlu0 %v124, 32
      %v697 = vpop.permute.xlu0 %696
      %698 = vrot.lane.b32.xlu0 %v119, 32
      %v699 = vpop.permute.xlu0 %698
      %700 = vrot.lane.b32.xlu0 %v120, 32
      %v701 = vpop.permute.xlu0 %700
      %v702 = vsel %vm125, %v695, 0
      %v704 = vsel %vm125, %v697, 0
      %v706 = vsel %vm125, %v699, 0
      %v708 = vsel %vm125, %v701, 0
      %710 = vmatpush.xpose.msra.mxu0 0.0
      %711 = vmatpush.xpose.msra.mxu0 0.0
      %712 = vmatpush.xpose.msra.mxu0 0.0
      %713 = vmatpush.xpose.msra.mxu0 0.0
      %714 = vmatpush.xpose.msra.mxu0 0.0
      %715 = vmatpush.xpose.msra.mxu0 0.0
      %716 = vmatpush.xpose.msra.mxu0 0.0
      %717 = vmatpush.xpose.msra.mxu0 0.0
      %718 = vmatpush.xpose.msra.mxu0 0.0
      %719 = vmatpush.xpose.msra.mxu0 0.0
      %720 = vmatpush.xpose.msra.mxu0 0.0
      %721 = vmatpush.xpose.msra.mxu0 0.0
      %722 = vmatpush.xpose.msra.mxu0 0.0
      %723 = vmatpush.xpose.msra.mxu0 0.0
      %724 = vmatpush.xpose.msra.mxu0 %v708
      %725 = vmatpush.xpose.msra.mxu0 %v706
      %726 = vmatmul.f32.gmra.mxu0 %v702
      %v727 = vpop.f32.mrf.mxu0
      %v728 = vadd.f32 0.0, %v727
      %729 = vmatmul.f32.gmra.mxu0 %v704
      %v730 = vpop.f32.mrf.mxu0
      %v731 = vadd.f32 0.0, %v730
      %732 = vdwg.mxu0
      %v733 = vsel %vm125, %v728, -inf
      %734 = vmax.xlane.f32.xlu0 %v733
      %v735 = vpop.xlane.xlu0 %734
      %v736 = vsel %vm125, %v731, -inf
      %737 = vmax.xlane.f32.xlu0 %v736
      %v738 = vpop.xlane.xlu0 %737
      %v739 = vsub.f32 %v728, %v735
      %v740 = vsub.f32 %v731, %v738
      %v741 = vmul.f32 %v739, 1.442695
      %v742 = vpow.pop %v741
      %v743 = vmul.f32 %v740, 1.442695
      %v744 = vpow.pop %v743
      %v745 = vsel %vm125, %v742, 0.0
      %746 = vadd.xlane.f32.xlu0 %v745
      %v747 = vpop.xlane.xlu0 %746
      %v748 = vsel %vm125, %v744, 0.0
      %749 = vadd.xlane.f32.xlu0 %v748
      %v750 = vpop.xlane.xlu0 %749
      %v751 = vrcp.pop %v747
      %v752 = vrcp.pop %v750
      %v753 = vmul.f32 %v742, %v751
      %v754 = vmul.f32 %v744, %v752
      %755 = vrot.lane.b32.xlu0 %v121, 32
      %v756 = vpop.permute.xlu0 %755
      %757 = vrot.lane.b32.xlu0 %v122, 32
      %v758 = vpop.permute.xlu0 %757
      %v762 = vsel %vm125, %v753, 0
      %v765 = vsel %vm125, %v754, 0
      %767 = vmatpush.msra.mxu0 0.0
      %768 = vmatpush.msra.mxu0 0.0
      %769 = vmatpush.msra.mxu0 0.0
      %770 = vmatpush.msra.mxu0 0.0
      %771 = vmatpush.msra.mxu0 0.0
      %772 = vmatpush.msra.mxu0 0.0
      %773 = vmatpush.msra.mxu0 0.0
      %774 = vmatpush.msra.mxu0 0.0
      %775 = vmatpush.msra.mxu0 0.0
      %776 = vmatpush.msra.mxu0 0.0
      %777 = vmatpush.msra.mxu0 0.0
      %778 = vmatpush.msra.mxu0 0.0
      %779 = vmatpush.msra.mxu0 0.0
      %780 = vmatpush.msra.mxu0 0.0
      %781 = vmatpush.msra.mxu0 %v758
      %782 = vmatpush.msra.mxu0 %v756
      %783 = vmatmul.f32.gmra.mxu0 %v762
      %v784 = vpop.f32.mrf.mxu0
      %v785 = vadd.f32 0.0, %v784
      %786 = vmatmul.f32.gmra.mxu0 %v765
      %v787 = vpop.f32.mrf.mxu0
      %v788 = vadd.f32 0.0, %v787
      %789 = vdwg.mxu0
      %790 = vrot.lane.b32.xlu0 %v123, 16
      %v791 = vpop.permute.xlu0 %790
      %792 = vrot.lane.b32.xlu0 %v124, 16
      %v793 = vpop.permute.xlu0 %792
      %794 = vrot.lane.b32.xlu0 %v119, 16
      %v795 = vpop.permute.xlu0 %794
      %796 = vrot.lane.b32.xlu0 %v120, 16
      %v797 = vpop.permute.xlu0 %796
      %v798 = vsel %vm125, %v791, 0
      %v800 = vsel %vm125, %v793, 0
      %v802 = vsel %vm125, %v795, 0
      %v804 = vsel %vm125, %v797, 0
      %806 = vmatpush.xpose.msra.mxu0 0.0
      %807 = vmatpush.xpose.msra.mxu0 0.0
      %808 = vmatpush.xpose.msra.mxu0 0.0
      %809 = vmatpush.xpose.msra.mxu0 0.0
      %810 = vmatpush.xpose.msra.mxu0 0.0
      %811 = vmatpush.xpose.msra.mxu0 0.0
      %812 = vmatpush.xpose.msra.mxu0 0.0
      %813 = vmatpush.xpose.msra.mxu0 0.0
      %814 = vmatpush.xpose.msra.mxu0 0.0
      %815 = vmatpush.xpose.msra.mxu0 0.0
      %816 = vmatpush.xpose.msra.mxu0 0.0
      %817 = vmatpush.xpose.msra.mxu0 0.0
      %818 = vmatpush.xpose.msra.mxu0 0.0
      %819 = vmatpush.xpose.msra.mxu0 0.0
      %820 = vmatpush.xpose.msra.mxu0 %v804
      %821 = vmatpush.xpose.msra.mxu0 %v802
      %822 = vmatmul.f32.gmra.mxu0 %v798
      %v823 = vpop.f32.mrf.mxu0
      %v824 = vadd.f32 0.0, %v823
      %825 = vmatmul.f32.gmra.mxu0 %v800
      %v826 = vpop.f32.mrf.mxu0
      %v827 = vadd.f32 0.0, %v826
      %828 = vdwg.mxu0
      %v829 = vsel %vm125, %v824, -inf
      %830 = vmax.xlane.f32.xlu0 %v829
      %v831 = vpop.xlane.xlu0 %830
      %v832 = vsel %vm125, %v827, -inf
      %833 = vmax.xlane.f32.xlu0 %v832
      %v834 = vpop.xlane.xlu0 %833
      %v835 = vsub.f32 %v824, %v831
      %v836 = vsub.f32 %v827, %v834
      %v837 = vmul.f32 %v835, 1.442695
      %v838 = vpow.pop %v837
      %v839 = vmul.f32 %v836, 1.442695
      %v840 = vpow.pop %v839
      %v841 = vsel %vm125, %v838, 0.0
      %842 = vadd.xlane.f32.xlu0 %v841
      %v843 = vpop.xlane.xlu0 %842
      %v844 = vsel %vm125, %v840, 0.0
      %845 = vadd.xlane.f32.xlu0 %v844
      %v846 = vpop.xlane.xlu0 %845
      %v847 = vrcp.pop %v843
      %v848 = vrcp.pop %v846
      %v849 = vmul.f32 %v838, %v847
      %v850 = vmul.f32 %v840, %v848
      %851 = vrot.lane.b32.xlu0 %v121, 16
      %v852 = vpop.permute.xlu0 %851
      %853 = vrot.lane.b32.xlu0 %v122, 16
      %v854 = vpop.permute.xlu0 %853
      %v858 = vsel %vm125, %v849, 0
      %v861 = vsel %vm125, %v850, 0
      %863 = vmatpush.msra.mxu0 0.0
      %864 = vmatpush.msra.mxu0 0.0
      %865 = vmatpush.msra.mxu0 0.0
      %866 = vmatpush.msra.mxu0 0.0
      %867 = vmatpush.msra.mxu0 0.0
      %868 = vmatpush.msra.mxu0 0.0
      %869 = vmatpush.msra.mxu0 0.0
      %870 = vmatpush.msra.mxu0 0.0
      %871 = vmatpush.msra.mxu0 0.0
      %872 = vmatpush.msra.mxu0 0.0
      %873 = vmatpush.msra.mxu0 0.0
      %874 = vmatpush.msra.mxu0 0.0
      %875 = vmatpush.msra.mxu0 0.0
      %876 = vmatpush.msra.mxu0 0.0
      %877 = vmatpush.msra.mxu0 %v854
      %878 = vmatpush.msra.mxu0 %v852
      %879 = vmatmul.f32.gmra.mxu0 %v858
      %v880 = vpop.f32.mrf.mxu0
      %v881 = vadd.f32 0.0, %v880
      %882 = vmatmul.f32.gmra.mxu0 %v861
      %v883 = vpop.f32.mrf.mxu0
      %v884 = vadd.f32 0.0, %v883
      %885 = vdwg.mxu0
      %888 = vrot.lane.b32.xlu0 %v305, 16
      %v889 = vpop.permute.xlu0 %888
      %890 = vrot.lane.b32.xlu0 %v308, 16
      %v891 = vpop.permute.xlu0 %890
      %896 = vrot.lane.b32.xlu0 %v401, 32
      %v897 = vpop.permute.xlu0 %896
      %898 = vrot.lane.b32.xlu0 %v404, 32
      %v899 = vpop.permute.xlu0 %898
      %904 = vrot.lane.b32.xlu0 %v497, 48
      %v905 = vpop.permute.xlu0 %904
      %906 = vrot.lane.b32.xlu0 %v500, 48
      %v907 = vpop.permute.xlu0 %906
      %912 = vrot.lane.b32.xlu0 %v593, 64
      %v913 = vpop.permute.xlu0 %912
      %914 = vrot.lane.b32.xlu0 %v596, 64
      %v915 = vpop.permute.xlu0 %914
      %920 = vrot.lane.b32.xlu0 %v689, 80
      %v921 = vpop.permute.xlu0 %920
      %922 = vrot.lane.b32.xlu0 %v692, 80
      %v923 = vpop.permute.xlu0 %922
      %928 = vrot.lane.b32.xlu0 %v785, 96
      %v929 = vpop.permute.xlu0 %928
      %930 = vrot.lane.b32.xlu0 %v788, 96
      %v931 = vpop.permute.xlu0 %930
      %936 = vrot.lane.b32.xlu0 %v881, 112
      %v937 = vpop.permute.xlu0 %936
      %938 = vrot.lane.b32.xlu0 %v884, 112
      %v939 = vpop.permute.xlu0 %938
      %v942 = vsel %vm125, %v207, %v889
      %v943 = vsel %vm125, %v210, %v891
      %vm944 = vcmask 261120
      %v945 = vsel %vm944, %v942, %v897
      %v946 = vsel %vm944, %v943, %v899
      %vm947 = vcmask 392192
      %v948 = vsel %vm947, %v945, %v905
      %v949 = vsel %vm947, %v946, %v907
      %vm950 = vcmask 523264
      %v951 = vsel %vm950, %v948, %v913
      %v952 = vsel %vm950, %v949, %v915
      %vm953 = vcmask 654336
      %v954 = vsel %vm953, %v951, %v921
      %v955 = vsel %vm953, %v952, %v923
      %vm956 = vcmask 785408
      %v957 = vsel %vm956, %v954, %v929
      %v958 = vsel %vm956, %v955, %v931
      %vm959 = vcmask 916480
      %v960 = vsel %vm959, %v957, %v937
      %v961 = vsel %vm959, %v958, %v939
      %962 = vst [vmem:[%s116] sm:$0xff] %v960
      %963 = vst [vmem:[%s116 + $0x8] sm:$0xff] %v961
      %p964 = scmp.lt.s32.totalorder %s12, 1
      %s965 = scalar_select %p964, %s12, 1
      %s966 = smul.addr %s965, 2
      %s967 = smul.addr %s966, 8
      %s968 = scalar_lea.vmem %s1, %s967
      // Predicated region
      $region25: #{transformer_forward.33} parent=23 // pred_check
        %p969 = pneg %p56
      $region26: #{transformer_forward.33} parent=23 // pred_check_branch
        %971 = sbr.rel (%p969) target = $region28
      $region27: #{transformer_forward.33} parent=23 // pred_region
        _
      $region28: #{transformer_forward.33} parent=23 // pred_fallthru
        _
    $region24: #{transformer_forward.33} parent=5 // pred_fallthru
      _
    %p972 = scmp.le.s32.totalorder 2, %s7
    // Predicated region
    $region29: #{transformer_forward.33} parent=5 // pred_check
      %p973 = pneg %p972
    $region30: #{transformer_forward.33} parent=5 // pred_check_branch
      %975 = sbr.rel (%p973) target = $region32
    $region31: #{transformer_forward.33} parent=5 // pred_region
      %s976 = ssub.s32 %s7, 2
      // Predicated region
      $region33: #{transformer_forward.33} parent=31 // pred_check
        %p977 = pneg %p62
      $region34: #{transformer_forward.33} parent=31 // pred_check_branch
        %979 = sbr.rel (%p977) target = $region36
      $region35: #{transformer_forward.33} parent=31 // pred_region
        %p980 = scmp.lt.s32.totalorder %s13, 1
        %s981 = scalar_select %p980, %s13, 1
        %s982 = smul.addr %s981, 2
        %s983 = smul.addr %s982, 8
        %s984 = scalar_lea.vmem %s1, %s983
      $region36: #{transformer_forward.33} parent=31 // pred_fallthru
        _
    $region32: #{transformer_forward.33} parent=5 // pred_fallthru
      _
  $region6: #{transformer_forward.33} parent=0 // loop_footer
    %s11 = sadd.s32 1, %s7
  $region7: #{transformer_forward.33} parent=0 // loop_footer_branch
    %6 = sbr.rel target = $region3
  $region8: #{transformer_forward.33} parent=0 // loop_exit
    _

// kernel: transformer_forward.36
$region0: #{transformer_forward.36}
  #allocation0 [shape = 'u32[]', space=smem, size = 0x4, offset = 0x4, fixed_abs, tag = 'smem constant byte address 0x4 - core index']
  #allocation1 [shape = 'u32[72,128]{1,0:T(1,128)}', space=vmem, size = 0x9000, scoped, tag = 'internal scratch']
  #allocation2 [shape = 'f32[32,128]{1,0:T(8,128)}', space=vmem, size = 0x4000, scoped, tag = 'scratch operand']
  %s0 = inlined_call_operand.vmem [shape: f32[32,128], index: 0, kind: input, shape index: {}]
  %s1 = inlined_call_operand.vmem [shape: f32[128,128], index: 1, kind: input, shape index: {}]
  %s2 = inlined_call_operand.vmem [shape: f32[1,128], index: 2, kind: input, shape index: {}]
  %s3 = inlined_call_operand.vmem [shape: f32[32,128], index: 3, kind: output, shape index: {}]
  %s4 = sld [smem:[#allocation0]]
  $region30: #{transformer_forward.36} parent=0
    _
  %s6 = ssub.s32 1, %s4
  %s7 = scalar_select 0, %s6, %s4
  // Predicated region
  $region2: #{transformer_forward.36} parent=0 // pred_check
    _
  $region3: #{transformer_forward.36} parent=0 // pred_check_branch
    %9 = sbr.rel (0) target = $region5
  $region4: #{transformer_forward.36} parent=0 // pred_region
    _
  $region5: #{transformer_forward.36} parent=0 // pred_fallthru
    _
  // Predicated region
  $region6: #{transformer_forward.36} parent=0 // pred_check
    _
  $region7: #{transformer_forward.36} parent=0 // pred_check_branch
    %11 = sbr.rel (0) target = $region9
  $region8: #{transformer_forward.36} parent=0 // pred_region
    _
  $region9: #{transformer_forward.36} parent=0 // pred_fallthru
    _
  // Predicated region
  $region10: #{transformer_forward.36} parent=0 // pred_check
    _
  $region11: #{transformer_forward.36} parent=0 // pred_check_branch
    %13 = sbr.rel (0) target = $region13
  $region12: #{transformer_forward.36} parent=0 // pred_region
    _
  $region13: #{transformer_forward.36} parent=0 // pred_fallthru
    _
  %p14 = scmp.eq.s32.totalorder 0, 0
  // Predicated region
  $region14: #{transformer_forward.36} parent=0 // pred_check
    %p15 = pneg %p14
  $region15: #{transformer_forward.36} parent=0 // pred_check_branch
    %17 = sbr.rel (%p15) target = $region17
  $region16: #{transformer_forward.36} parent=0 // pred_region
    %18 = vst [vmem:[#allocation2] sm:$0xff] 0.0
    %19 = vst [vmem:[#allocation2 + $0x8] sm:$0xff] 0.0
    %20 = vst [vmem:[#allocation2 + $0x10] sm:$0xff] 0.0
    %21 = vst [vmem:[#allocation2 + $0x18] sm:$0xff] 0.0
  $region17: #{transformer_forward.36} parent=0 // pred_fallthru
    _
  %v22 = vld [vmem:[#allocation2] sm:$0xff]
  %v23 = vld [vmem:[#allocation2 + $0x8] sm:$0xff]
  %v24 = vld [vmem:[#allocation2 + $0x10] sm:$0xff]
  %v25 = vld [vmem:[#allocation2 + $0x18] sm:$0xff]
  %v26 = vld [vmem:[%s0] sm:$0xff]
  %v27 = vld [vmem:[%s0 + $0x8] sm:$0xff]
  %v28 = vld [vmem:[%s0 + $0x10] sm:$0xff]
  %v29 = vld [vmem:[%s0 + $0x18] sm:$0xff]
  %v30 = vld [vmem:[%s1] sm:$0xff]
  %v31 = vld [vmem:[%s1 + $0x8] sm:$0xff]
  %v32 = vld [vmem:[%s1 + $0x10] sm:$0xff]
  %v33 = vld [vmem:[%s1 + $0x18] sm:$0xff]
  %v34 = vld [vmem:[%s1 + $0x20] sm:$0xff]
  %v35 = vld [vmem:[%s1 + $0x28] sm:$0xff]
  %v36 = vld [vmem:[%s1 + $0x30] sm:$0xff]
  %v37 = vld [vmem:[%s1 + $0x38] sm:$0xff]
  %v38 = vld [vmem:[%s1 + $0x40] sm:$0xff]
  %v39 = vld [vmem:[%s1 + $0x48] sm:$0xff]
  %v40 = vld [vmem:[%s1 + $0x50] sm:$0xff]
  %v41 = vld [vmem:[%s1 + $0x58] sm:$0xff]
  %v42 = vld [vmem:[%s1 + $0x60] sm:$0xff]
  %v43 = vld [vmem:[%s1 + $0x68] sm:$0xff]
  %v44 = vld [vmem:[%s1 + $0x70] sm:$0xff]
  %v45 = vld [vmem:[%s1 + $0x78] sm:$0xff]
  %46 = vmatpush.msra.mxu0 %v45
  %47 = vmatpush.msra.mxu0 %v44
  %48 = vmatpush.msra.mxu0 %v43
  %49 = vmatpush.msra.mxu0 %v42
  %50 = vmatpush.msra.mxu0 %v41
  %51 = vmatpush.msra.mxu0 %v40
  %52 = vmatpush.msra.mxu0 %v39
  %53 = vmatpush.msra.mxu0 %v38
  %54 = vmatpush.msra.mxu0 %v37
  %55 = vmatpush.msra.mxu0 %v36
  %56 = vmatpush.msra.mxu0 %v35
  %57 = vmatpush.msra.mxu0 %v34
  %58 = vmatpush.msra.mxu0 %v33
  %59 = vmatpush.msra.mxu0 %v32
  %60 = vmatpush.msra.mxu0 %v31
  %61 = vmatpush.msra.mxu0 %v30
  %62 = vmatmul.f32.gmra.mxu0 %v26
  %v63 = vpop.f32.mrf.mxu0
  %v64 = vadd.f32 0.0, %v63
  %65 = vmatmul.f32.gmra.mxu0 %v27
  %v66 = vpop.f32.mrf.mxu0
  %v67 = vadd.f32 0.0, %v66
  %68 = vmatmul.f32.gmra.mxu0 %v28
  %v69 = vpop.f32.mrf.mxu0
  %v70 = vadd.f32 0.0, %v69
  %71 = vmatmul.f32.gmra.mxu0 %v29
  %v72 = vpop.f32.mrf.mxu0
  %v73 = vadd.f32 0.0, %v72
  %74 = vdwg.mxu0
  %v75 = vadd.f32 %v22, %v64
  %v76 = vadd.f32 %v23, %v67
  %v77 = vadd.f32 %v24, %v70
  %v78 = vadd.f32 %v25, %v73
  %79 = vst [vmem:[#allocation2] sm:$0xff] %v75
  %80 = vst [vmem:[#allocation2 + $0x8] sm:$0xff] %v76
  %81 = vst [vmem:[#allocation2 + $0x10] sm:$0xff] %v77
  %82 = vst [vmem:[#allocation2 + $0x18] sm:$0xff] %v78
  // Predicated region
  $region18: #{transformer_forward.36} parent=0 // pred_check
    %p83 = pneg %p14
  $region19: #{transformer_forward.36} parent=0 // pred_check_branch
    %85 = sbr.rel (%p83) target = $region21
  $region20: #{transformer_forward.36} parent=0 // pred_region
    %v86 = vld [vmem:[#allocation2] sm:$0xff]
    %v87 = vld [vmem:[#allocation2 + $0x8] sm:$0xff]
    %v88 = vld [vmem:[#allocation2 + $0x10] sm:$0xff]
    %v89 = vld [vmem:[#allocation2 + $0x18] sm:$0xff]
    %v90 = vld [vmem:[%s2] sm:$0x1]
    %v92 = vperm.slane %v90, 0
    %v94 = vadd.f32 %v86, %v92
    %v95 = vadd.f32 %v87, %v92
    %v96 = vadd.f32 %v88, %v92
    %v97 = vadd.f32 %v89, %v92
    %v98 = vmul.f32 %v94, 0.5
    %v99 = vmul.f32 %v95, 0.5
    %v100 = vmul.f32 %v96, 0.5
    %v101 = vmul.f32 %v97, 0.5
    %v102 = vmul.f32 %v94, 0.70710677
    %v103 = vmul.f32 %v95, 0.70710677
    %v104 = vmul.f32 %v96, 0.70710677
    %v105 = vmul.f32 %v97, 0.70710677
    %vm106 = vcmp.ge.f32.partialorder %v102, 0.0
    %vm107 = vcmp.ge.f32.partialorder %v103, 0.0
    %vm108 = vcmp.ge.f32.partialorder %v104, 0.0
    %vm109 = vcmp.ge.f32.partialorder %v105, 0.0
    %v110 = vsel %vm106, 1.0, -1.0
    %v111 = vsel %vm107, 1.0, -1.0
    %v112 = vsel %vm108, 1.0, -1.0
    %v113 = vsel %vm109, 1.0, -1.0
    %v114 = vand.u32 2147483647, %v102
    %v115 = vand.u32 2147483647, %v103
    %v116 = vand.u32 2147483647, %v104
    %v117 = vand.u32 2147483647, %v105
    %v118 = vmul.f32 %v114, 0.3275911
    %v119 = vmul.f32 %v115, 0.3275911
    %v120 = vmul.f32 %v116, 0.3275911
    %v121 = vmul.f32 %v117, 0.3275911
    %v122 = vadd.f32 %v118, 1.0
    %v123 = vadd.f32 %v119, 1.0
    %v124 = vadd.f32 %v120, 1.0
    %v125 = vadd.f32 %v121, 1.0
    %v126 = vrcp.pop %v122
    %v127 = vmul.f32 %v122, %v126
    %v128 = vsub.f32 1.0, %v127
    %v129 = vmul.f32 %v126, %v128
    %v130 = vadd.f32 %v126, %v129
    %vm131 = vweird.f32 %v122
    %vm132 = vweird.f32 %v126
    %vm133 = vmor %vm131, %vm132
    %v134 = vsel %vm133, %v126, %v130
    %v135 = vand.u32 2147483647, %v122
    %vm136 = vcmp.eq.f32.partialorder %v135, 8.507059e+37
    %v137 = vand.u32 %v122, 2147483648
    %v138 = vor.u32 1.1754944e-38, %v137
    %v139 = vsel %vm136, %v138, %v134
    %v140 = vmul.f32 1.0, %v139
    %v141 = vrcp.pop %v123
    %v142 = vmul.f32 %v123, %v141
    %v143 = vsub.f32 1.0, %v142
    %v144 = vmul.f32 %v141, %v143
    %v145 = vadd.f32 %v141, %v144
    %vm146 = vweird.f32 %v123
    %vm147 = vweird.f32 %v141
    %vm148 = vmor %vm146, %vm147
    %v149 = vsel %vm148, %v141, %v145
    %v150 = vand.u32 2147483647, %v123
    %vm151 = vcmp.eq.f32.partialorder %v150, 8.507059e+37
    %v152 = vand.u32 %v123, 2147483648
    %v153 = vor.u32 1.1754944e-38, %v152
    %v154 = vsel %vm151, %v153, %v149
    %v155 = vmul.f32 1.0, %v154
    %v156 = vrcp.pop %v124
    %v157 = vmul.f32 %v124, %v156
    %v158 = vsub.f32 1.0, %v157
    %v159 = vmul.f32 %v156, %v158
    %v160 = vadd.f32 %v156, %v159
    %vm161 = vweird.f32 %v124
    %vm162 = vweird.f32 %v156
    %vm163 = vmor %vm161, %vm162
    %v164 = vsel %vm163, %v156, %v160
    %v165 = vand.u32 2147483647, %v124
    %vm166 = vcmp.eq.f32.partialorder %v165, 8.507059e+37
    %v167 = vand.u32 %v124, 2147483648
    %v168 = vor.u32 1.1754944e-38, %v167
    %v169 = vsel %vm166, %v168, %v164
    %v170 = vmul.f32 1.0, %v169
    %v171 = vrcp.pop %v125
    %v172 = vmul.f32 %v125, %v171
    %v173 = vsub.f32 1.0, %v172
    %v174 = vmul.f32 %v171, %v173
    %v175 = vadd.f32 %v171, %v174
    %vm176 = vweird.f32 %v125
    %vm177 = vweird.f32 %v171
    %vm178 = vmor %vm176, %vm177
    %v179 = vsel %vm178, %v171, %v175
    %v180 = vand.u32 2147483647, %v125
    %vm181 = vcmp.eq.f32.partialorder %v180, 8.507059e+37
    %v182 = vand.u32 %v125, 2147483648
    %v183 = vor.u32 1.1754944e-38, %v182
    %v184 = vsel %vm181, %v183, %v179
    %v185 = vmul.f32 1.0, %v184
    %v186 = vmul.f32 %v140, 1.0614054
    %v187 = vmul.f32 %v155, 1.0614054
    %v188 = vmul.f32 %v170, 1.0614054
    %v189 = vmul.f32 %v185, 1.0614054
    %v190 = vadd.f32 %v186, -1.4531521
    %v191 = vadd.f32 %v187, -1.4531521
    %v192 = vadd.f32 %v188, -1.4531521
    %v193 = vadd.f32 %v189, -1.4531521
    %v194 = vmul.f32 %v190, %v140
    %v195 = vmul.f32 %v191, %v155
    %v196 = vmul.f32 %v192, %v170
    %v197 = vmul.f32 %v193, %v185
    %v198 = vadd.f32 %v194, 1.4214138
    %v199 = vadd.f32 %v195, 1.4214138
    %v200 = vadd.f32 %v196, 1.4214138
    %v201 = vadd.f32 %v197, 1.4214138
    %v202 = vmul.f32 %v198, %v140
    %v203 = vmul.f32 %v199, %v155
    %v204 = vmul.f32 %v200, %v170
    %v205 = vmul.f32 %v201, %v185
    %v206 = vadd.f32 %v202, -0.28449672
    %v207 = vadd.f32 %v203, -0.28449672
    %v208 = vadd.f32 %v204, -0.28449672
    %v209 = vadd.f32 %v205, -0.28449672
    %v210 = vmul.f32 %v206, %v140
    %v211 = vmul.f32 %v207, %v155
    %v212 = vmul.f32 %v208, %v170
    %v213 = vmul.f32 %v209, %v185
    %v214 = vadd.f32 %v210, 0.2548296
    %v215 = vadd.f32 %v211, 0.2548296
    %v216 = vadd.f32 %v212, 0.2548296
    %v217 = vadd.f32 %v213, 0.2548296
    %v218 = vmul.f32 %v214, %v140
    %v219 = vmul.f32 %v215, %v155
    %v220 = vmul.f32 %v216, %v170
    %v221 = vmul.f32 %v217, %v185
    %v222 = vsub.f32 0.0, %v114
    %v223 = vsub.f32 0.0, %v115
    %v224 = vsub.f32 0.0, %v116
    %v225 = vsub.f32 0.0, %v117
    %v226 = vmul.f32 %v222, %v114
    %v227 = vmul.f32 %v223, %v115
    %v228 = vmul.f32 %v224, %v116
    %v229 = vmul.f32 %v225, %v117
    %v230 = vmul.f32 %v226, 1.442695
    %v231 = vpow.pop %v230
    %v232 = vmul.f32 %v227, 1.442695
    %v233 = vpow.pop %v232
    %v234 = vmul.f32 %v228, 1.442695
    %v235 = vpow.pop %v234
    %v236 = vmul.f32 %v229, 1.442695
    %v237 = vpow.pop %v236
    %v238 = vmul.f32 %v218, %v231
    %v239 = vmul.f32 %v219, %v233
    %v240 = vmul.f32 %v220, %v235
    %v241 = vmul.f32 %v221, %v237
    %v242 = vsub.f32 1.0, %v238
    %v243 = vsub.f32 1.0, %v239
    %v244 = vsub.f32 1.0, %v240
    %v245 = vsub.f32 1.0, %v241
    %v246 = vmul.f32 %v110, %v242
    %v247 = vmul.f32 %v111, %v243
    %v248 = vmul.f32 %v112, %v244
    %v249 = vmul.f32 %v113, %v245
    %v250 = vadd.f32 %v246, 1.0
    %v251 = vadd.f32 %v247, 1.0
    %v252 = vadd.f32 %v248, 1.0
    %v253 = vadd.f32 %v249, 1.0
    %v254 = vmul.f32 %v98, %v250
    %v255 = vmul.f32 %v99, %v251
    %v256 = vmul.f32 %v100, %v252
    %v257 = vmul.f32 %v101, %v253
    %258 = vst [vmem:[%s3] sm:$0xff] %v254
    %259 = vst [vmem:[%s3 + $0x8] sm:$0xff] %v255
    %260 = vst [vmem:[%s3 + $0x10] sm:$0xff] %v256
    %261 = vst [vmem:[%s3 + $0x18] sm:$0xff] %v257
  $region21: #{transformer_forward.36} parent=0 // pred_fallthru
    _
  // Predicated region
  $region22: #{transformer_forward.36} parent=0 // pred_check
    _
  $region23: #{transformer_forward.36} parent=0 // pred_check_branch
    %263 = sbr.rel (0) target = $region25
  $region24: #{transformer_forward.36} parent=0 // pred_region
    _
  $region25: #{transformer_forward.36} parent=0 // pred_fallthru
    _
  // Predicated region
  $region26: #{transformer_forward.36} parent=0 // pred_check
    _
  $region27: #{transformer_forward.36} parent=0 // pred_check_branch
    %265 = sbr.rel (0) target = $region29
  $region28: #{transformer_forward.36} parent=0 // pred_region
    _
  $region29: #{transformer_forward.36} parent=0 // pred_fallthru
    _

// kernel: transformer_forward.46
$region0: #{transformer_forward.46}
  #allocation0 [shape = 'u32[]', space=smem, size = 0x4, offset = 0x4, fixed_abs, tag = 'smem constant byte address 0x4 - core index']
  #allocation1 [shape = 'u32[72,128]{1,0:T(1,128)}', space=vmem, size = 0x9000, scoped, tag = 'internal scratch']
  %s0 = inlined_call_operand.vmem [shape: f32[32,128], index: 0, kind: input, shape index: {}]
  %s1 = inlined_call_operand.vmem [shape: f32[1,128], index: 1, kind: input, shape index: {}]
  %s2 = inlined_call_operand.vmem [shape: f32[1,128], index: 2, kind: input, shape index: {}]
  %s3 = inlined_call_operand.vmem [shape: f32[32,128], index: 3, kind: output, shape index: {}]
  %s4 = sld [smem:[#allocation0]]
  $region22: #{transformer_forward.46} parent=0
    _
  %s6 = ssub.s32 1, %s4
  %s7 = scalar_select 0, %s6, %s4
  // Predicated region
  $region2: #{transformer_forward.46} parent=0 // pred_check
    _
  $region3: #{transformer_forward.46} parent=0 // pred_check_branch
    %9 = sbr.rel (0) target = $region5
  $region4: #{transformer_forward.46} parent=0 // pred_region
    _
  $region5: #{transformer_forward.46} parent=0 // pred_fallthru
    _
  // Predicated region
  $region6: #{transformer_forward.46} parent=0 // pred_check
    _
  $region7: #{transformer_forward.46} parent=0 // pred_check_branch
    %11 = sbr.rel (0) target = $region9
  $region8: #{transformer_forward.46} parent=0 // pred_region
    _
  $region9: #{transformer_forward.46} parent=0 // pred_fallthru
    _
  // Predicated region
  $region10: #{transformer_forward.46} parent=0 // pred_check
    _
  $region11: #{transformer_forward.46} parent=0 // pred_check_branch
    %13 = sbr.rel (0) target = $region13
  $region12: #{transformer_forward.46} parent=0 // pred_region
    _
  $region13: #{transformer_forward.46} parent=0 // pred_fallthru
    _
  %v14 = vld [vmem:[%s0] sm:$0xff]
  %v15 = vld [vmem:[%s0 + $0x8] sm:$0xff]
  %v16 = vld [vmem:[%s0 + $0x10] sm:$0xff]
  %v17 = vld [vmem:[%s0 + $0x18] sm:$0xff]
  %18 = vadd.xlane.f32.xlu0 %v14
  %v19 = vpop.xlane.xlu0 %18
  %20 = vadd.xlane.f32.xlu0 %v15
  %v21 = vpop.xlane.xlu0 %20
  %22 = vadd.xlane.f32.xlu0 %v16
  %v23 = vpop.xlane.xlu0 %22
  %24 = vadd.xlane.f32.xlu0 %v17
  %v25 = vpop.xlane.xlu0 %24
  %v26 = vrcp.pop 128.0
  %v27 = vmul.f32 128.0, %v26
  %v28 = vsub.f32 1.0, %v27
  %v29 = vmul.f32 %v26, %v28
  %v30 = vadd.f32 %v26, %v29
  %vm31 = vweird.f32 %v26
  %v32 = vsel %vm31, %v26, %v30
  %v33 = vmul.f32 %v19, %v32
  %v34 = vmul.f32 %v21, %v32
  %v35 = vmul.f32 %v23, %v32
  %v36 = vmul.f32 %v25, %v32
  %v37 = vsub.f32 %v14, %v33
  %v38 = vsub.f32 %v15, %v34
  %v39 = vsub.f32 %v16, %v35
  %v40 = vsub.f32 %v17, %v36
  %v41 = vmul.f32 %v37, %v37
  %v42 = vmul.f32 %v38, %v38
  %v43 = vmul.f32 %v39, %v39
  %v44 = vmul.f32 %v40, %v40
  %45 = vadd.xlane.f32.xlu0 %v41
  %v46 = vpop.xlane.xlu0 %45
  %47 = vadd.xlane.f32.xlu0 %v42
  %v48 = vpop.xlane.xlu0 %47
  %49 = vadd.xlane.f32.xlu0 %v43
  %v50 = vpop.xlane.xlu0 %49
  %51 = vadd.xlane.f32.xlu0 %v44
  %v52 = vpop.xlane.xlu0 %51
  %v53 = vmul.f32 %v46, %v32
  %v54 = vmul.f32 %v48, %v32
  %v55 = vmul.f32 %v50, %v32
  %v56 = vmul.f32 %v52, %v32
  %v57 = vadd.f32 %v53, 1e-05
  %v58 = vadd.f32 %v54, 1e-05
  %v59 = vadd.f32 %v55, 1e-05
  %v60 = vadd.f32 %v56, 1e-05
  %v61 = vrsqrt.pop %v57
  %v62 = vmul.f32 %v61, %v57
  %v63 = vmul.f32 %v62, %v61
  %v64 = vmul.f32 0.5, %v63
  %v65 = vsub.f32 1.5, %v64
  %v66 = vmul.f32 %v61, %v65
  %vm67 = vweird.f32 %v57
  %vm68 = vweird.f32 %v61
  %vm69 = vmor %vm67, %vm68
  %v70 = vsel %vm69, %v61, %v66
  %v71 = vrsqrt.pop %v58
  %v72 = vmul.f32 %v71, %v58
  %v73 = vmul.f32 %v72, %v71
  %v74 = vmul.f32 0.5, %v73
  %v75 = vsub.f32 1.5, %v74
  %v76 = vmul.f32 %v71, %v75
  %vm77 = vweird.f32 %v58
  %vm78 = vweird.f32 %v71
  %vm79 = vmor %vm77, %vm78
  %v80 = vsel %vm79, %v71, %v76
  %v81 = vrsqrt.pop %v59
  %v82 = vmul.f32 %v81, %v59
  %v83 = vmul.f32 %v82, %v81
  %v84 = vmul.f32 0.5, %v83
  %v85 = vsub.f32 1.5, %v84
  %v86 = vmul.f32 %v81, %v85
  %vm87 = vweird.f32 %v59
  %vm88 = vweird.f32 %v81
  %vm89 = vmor %vm87, %vm88
  %v90 = vsel %vm89, %v81, %v86
  %v91 = vrsqrt.pop %v60
  %v92 = vmul.f32 %v91, %v60
  %v93 = vmul.f32 %v92, %v91
  %v94 = vmul.f32 0.5, %v93
  %v95 = vsub.f32 1.5, %v94
  %v96 = vmul.f32 %v91, %v95
  %vm97 = vweird.f32 %v60
  %vm98 = vweird.f32 %v91
  %vm99 = vmor %vm97, %vm98
  %v100 = vsel %vm99, %v91, %v96
  %v101 = vmul.f32 %v37, %v70
  %v102 = vmul.f32 %v38, %v80
  %v103 = vmul.f32 %v39, %v90
  %v104 = vmul.f32 %v40, %v100
  %v105 = vld [vmem:[%s1] sm:$0x1]
  %v107 = vperm.slane %v105, 0
  %v109 = vmul.f32 %v101, %v107
  %v110 = vmul.f32 %v102, %v107
  %v111 = vmul.f32 %v103, %v107
  %v112 = vmul.f32 %v104, %v107
  %v113 = vld [vmem:[%s2] sm:$0x1]
  %v115 = vperm.slane %v113, 0
  %v117 = vadd.f32 %v109, %v115
  %v118 = vadd.f32 %v110, %v115
  %v119 = vadd.f32 %v111, %v115
  %v120 = vadd.f32 %v112, %v115
  %121 = vst [vmem:[%s3] sm:$0xff] %v117
  %122 = vst [vmem:[%s3 + $0x8] sm:$0xff] %v118
  %123 = vst [vmem:[%s3 + $0x10] sm:$0xff] %v119
  %124 = vst [vmem:[%s3 + $0x18] sm:$0xff] %v120
  // Predicated region
  $region14: #{transformer_forward.46} parent=0 // pred_check
    _
  $region15: #{transformer_forward.46} parent=0 // pred_check_branch
    %126 = sbr.rel (0) target = $region17
  $region16: #{transformer_forward.46} parent=0 // pred_region
    _
  $region17: #{transformer_forward.46} parent=0 // pred_fallthru
    _
  // Predicated region
  $region18: #{transformer_forward.46} parent=0 // pred_check
    _
  $region19: #{transformer_forward.46} parent=0 // pred_check_branch
    %128 = sbr.rel (0) target = $region21
  $region20: #{transformer_forward.46} parent=0 // pred_region
    _
  $region21: #{transformer_forward.46} parent=0 // pred_fallthru
    _

// kernel: transformer_forward.53
$region0: #{transformer_forward.53}
  #allocation0 [shape = 'u32[]', space=smem, size = 0x4, offset = 0x4, fixed_abs, tag = 'smem constant byte address 0x4 - core index']
  #allocation1 [shape = 'u32[72,128]{1,0:T(1,128)}', space=vmem, size = 0x9000, scoped, tag = 'internal scratch']
  #allocation2 [shape = 'f32[32,256]{1,0:T(8,128)}', space=vmem, size = 0x8000, scoped, tag = 'scratch operand']
  %s0 = inlined_call_operand.vmem [shape: f32[32,128], index: 0, kind: input, shape index: {}]
  %s1 = inlined_call_operand.vmem [shape: f32[128,256], index: 1, kind: input, shape index: {}]
  %s2 = inlined_call_operand.vmem [shape: f32[1,256], index: 2, kind: input, shape index: {}]
  %s3 = inlined_call_operand.vmem [shape: f32[32,256], index: 3, kind: output, shape index: {}]
  %s4 = sld [smem:[#allocation0]]
  $region30: #{transformer_forward.53} parent=0
    _
  %s6 = ssub.s32 1, %s4
  %s7 = scalar_select 0, %s6, %s4
  // Predicated region
  $region2: #{transformer_forward.53} parent=0 // pred_check
    _
  $region3: #{transformer_forward.53} parent=0 // pred_check_branch
    %9 = sbr.rel (0) target = $region5
  $region4: #{transformer_forward.53} parent=0 // pred_region
    _
  $region5: #{transformer_forward.53} parent=0 // pred_fallthru
    _
  // Predicated region
  $region6: #{transformer_forward.53} parent=0 // pred_check
    _
  $region7: #{transformer_forward.53} parent=0 // pred_check_branch
    %11 = sbr.rel (0) target = $region9
  $region8: #{transformer_forward.53} parent=0 // pred_region
    _
  $region9: #{transformer_forward.53} parent=0 // pred_fallthru
    _
  // Predicated region
  $region10: #{transformer_forward.53} parent=0 // pred_check
    _
  $region11: #{transformer_forward.53} parent=0 // pred_check_branch
    %13 = sbr.rel (0) target = $region13
  $region12: #{transformer_forward.53} parent=0 // pred_region
    _
  $region13: #{transformer_forward.53} parent=0 // pred_fallthru
    _
  %p14 = scmp.eq.s32.totalorder 0, 0
  // Predicated region
  $region14: #{transformer_forward.53} parent=0 // pred_check
    %p15 = pneg %p14
  $region15: #{transformer_forward.53} parent=0 // pred_check_branch
    %17 = sbr.rel (%p15) target = $region17
  $region16: #{transformer_forward.53} parent=0 // pred_region
    %18 = vst [vmem:[#allocation2] sm:$0xff] 0.0
    %19 = vst [vmem:[#allocation2 + $0x8] sm:$0xff] 0.0
    %20 = vst [vmem:[#allocation2 + $0x10] sm:$0xff] 0.0
    %21 = vst [vmem:[#allocation2 + $0x18] sm:$0xff] 0.0
    %22 = vst [vmem:[#allocation2 + $0x20] sm:$0xff] 0.0
    %23 = vst [vmem:[#allocation2 + $0x28] sm:$0xff] 0.0
    %24 = vst [vmem:[#allocation2 + $0x30] sm:$0xff] 0.0
    %25 = vst [vmem:[#allocation2 + $0x38] sm:$0xff] 0.0
  $region17: #{transformer_forward.53} parent=0 // pred_fallthru
    _
  %v26 = vld [vmem:[#allocation2] sm:$0xff]
  %v27 = vld [vmem:[#allocation2 + $0x8] sm:$0xff]
  %v28 = vld [vmem:[#allocation2 + $0x10] sm:$0xff]
  %v29 = vld [vmem:[#allocation2 + $0x18] sm:$0xff]
  %v30 = vld [vmem:[#allocation2 + $0x20] sm:$0xff]
  %v31 = vld [vmem:[#allocation2 + $0x28] sm:$0xff]
  %v32 = vld [vmem:[#allocation2 + $0x30] sm:$0xff]
  %v33 = vld [vmem:[#allocation2 + $0x38] sm:$0xff]
  %v34 = vld [vmem:[%s0] sm:$0xff]
  %v35 = vld [vmem:[%s0 + $0x8] sm:$0xff]
  %v36 = vld [vmem:[%s0 + $0x10] sm:$0xff]
  %v37 = vld [vmem:[%s0 + $0x18] sm:$0xff]
  %v38 = vld [vmem:[%s1] sm:$0xff]
  %v39 = vld [vmem:[%s1 + $0x8] sm:$0xff]
  %v40 = vld [vmem:[%s1 + $0x10] sm:$0xff]
  %v41 = vld [vmem:[%s1 + $0x18] sm:$0xff]
  %v42 = vld [vmem:[%s1 + $0x20] sm:$0xff]
  %v43 = vld [vmem:[%s1 + $0x28] sm:$0xff]
  %v44 = vld [vmem:[%s1 + $0x30] sm:$0xff]
  %v45 = vld [vmem:[%s1 + $0x38] sm:$0xff]
  %v46 = vld [vmem:[%s1 + $0x40] sm:$0xff]
  %v47 = vld [vmem:[%s1 + $0x48] sm:$0xff]
  %v48 = vld [vmem:[%s1 + $0x50] sm:$0xff]
  %v49 = vld [vmem:[%s1 + $0x58] sm:$0xff]
  %v50 = vld [vmem:[%s1 + $0x60] sm:$0xff]
  %v51 = vld [vmem:[%s1 + $0x68] sm:$0xff]
  %v52 = vld [vmem:[%s1 + $0x70] sm:$0xff]
  %v53 = vld [vmem:[%s1 + $0x78] sm:$0xff]
  %v54 = vld [vmem:[%s1 + $0x80] sm:$0xff]
  %v55 = vld [vmem:[%s1 + $0x88] sm:$0xff]
  %v56 = vld [vmem:[%s1 + $0x90] sm:$0xff]
  %v57 = vld [vmem:[%s1 + $0x98] sm:$0xff]
  %v58 = vld [vmem:[%s1 + $0xa0] sm:$0xff]
  %v59 = vld [vmem:[%s1 + $0xa8] sm:$0xff]
  %v60 = vld [vmem:[%s1 + $0xb0] sm:$0xff]
  %v61 = vld [vmem:[%s1 + $0xb8] sm:$0xff]
  %v62 = vld [vmem:[%s1 + $0xc0] sm:$0xff]
  %v63 = vld [vmem:[%s1 + $0xc8] sm:$0xff]
  %v64 = vld [vmem:[%s1 + $0xd0] sm:$0xff]
  %v65 = vld [vmem:[%s1 + $0xd8] sm:$0xff]
  %v66 = vld [vmem:[%s1 + $0xe0] sm:$0xff]
  %v67 = vld [vmem:[%s1 + $0xe8] sm:$0xff]
  %v68 = vld [vmem:[%s1 + $0xf0] sm:$0xff]
  %v69 = vld [vmem:[%s1 + $0xf8] sm:$0xff]
  %70 = vmatpush.msra.mxu0 %v68
  %71 = vmatpush.msra.mxu0 %v66
  %72 = vmatpush.msra.mxu0 %v64
  %73 = vmatpush.msra.mxu0 %v62
  %74 = vmatpush.msra.mxu0 %v60
  %75 = vmatpush.msra.mxu0 %v58
  %76 = vmatpush.msra.mxu0 %v56
  %77 = vmatpush.msra.mxu0 %v54
  %78 = vmatpush.msra.mxu0 %v52
  %79 = vmatpush.msra.mxu0 %v50
  %80 = vmatpush.msra.mxu0 %v48
  %81 = vmatpush.msra.mxu0 %v46
  %82 = vmatpush.msra.mxu0 %v44
  %83 = vmatpush.msra.mxu0 %v42
  %84 = vmatpush.msra.mxu0 %v40
  %85 = vmatpush.msra.mxu0 %v38
  %86 = vmatmul.f32.gmra.mxu0 %v34
  %v87 = vpop.f32.mrf.mxu0
  %v88 = vadd.f32 0.0, %v87
  %89 = vmatmul.f32.gmra.mxu0 %v35
  %v90 = vpop.f32.mrf.mxu0
  %v91 = vadd.f32 0.0, %v90
  %92 = vmatmul.f32.gmra.mxu0 %v36
  %v93 = vpop.f32.mrf.mxu0
  %v94 = vadd.f32 0.0, %v93
  %95 = vmatmul.f32.gmra.mxu0 %v37
  %v96 = vpop.f32.mrf.mxu0
  %v97 = vadd.f32 0.0, %v96
  %98 = vdwg.mxu0
  %99 = vmatpush.msra.mxu0 %v69
  %100 = vmatpush.msra.mxu0 %v67
  %101 = vmatpush.msra.mxu0 %v65
  %102 = vmatpush.msra.mxu0 %v63
  %103 = vmatpush.msra.mxu0 %v61
  %104 = vmatpush.msra.mxu0 %v59
  %105 = vmatpush.msra.mxu0 %v57
  %106 = vmatpush.msra.mxu0 %v55
  %107 = vmatpush.msra.mxu0 %v53
  %108 = vmatpush.msra.mxu0 %v51
  %109 = vmatpush.msra.mxu0 %v49
  %110 = vmatpush.msra.mxu0 %v47
  %111 = vmatpush.msra.mxu0 %v45
  %112 = vmatpush.msra.mxu0 %v43
  %113 = vmatpush.msra.mxu0 %v41
  %114 = vmatpush.msra.mxu0 %v39
  %115 = vmatmul.f32.gmra.mxu0 %v34
  %v116 = vpop.f32.mrf.mxu0
  %v117 = vadd.f32 0.0, %v116
  %118 = vmatmul.f32.gmra.mxu0 %v35
  %v119 = vpop.f32.mrf.mxu0
  %v120 = vadd.f32 0.0, %v119
  %121 = vmatmul.f32.gmra.mxu0 %v36
  %v122 = vpop.f32.mrf.mxu0
  %v123 = vadd.f32 0.0, %v122
  %124 = vmatmul.f32.gmra.mxu0 %v37
  %v125 = vpop.f32.mrf.mxu0
  %v126 = vadd.f32 0.0, %v125
  %127 = vdwg.mxu0
  %v128 = vadd.f32 %v26, %v88
  %v129 = vadd.f32 %v27, %v117
  %v130 = vadd.f32 %v28, %v91
  %v131 = vadd.f32 %v29, %v120
  %v132 = vadd.f32 %v30, %v94
  %v133 = vadd.f32 %v31, %v123
  %v134 = vadd.f32 %v32, %v97
  %v135 = vadd.f32 %v33, %v126
  %136 = vst [vmem:[#allocation2] sm:$0xff] %v128
  %137 = vst [vmem:[#allocation2 + $0x8] sm:$0xff] %v129
  %138 = vst [vmem:[#allocation2 + $0x10] sm:$0xff] %v130
  %139 = vst [vmem:[#allocation2 + $0x18] sm:$0xff] %v131
  %140 = vst [vmem:[#allocation2 + $0x20] sm:$0xff] %v132
  %141 = vst [vmem:[#allocation2 + $0x28] sm:$0xff] %v133
  %142 = vst [vmem:[#allocation2 + $0x30] sm:$0xff] %v134
  %143 = vst [vmem:[#allocation2 + $0x38] sm:$0xff] %v135
  // Predicated region
  $region18: #{transformer_forward.53} parent=0 // pred_check
    %p144 = pneg %p14
  $region19: #{transformer_forward.53} parent=0 // pred_check_branch
    %146 = sbr.rel (%p144) target = $region21
  $region20: #{transformer_forward.53} parent=0 // pred_region
    %v147 = vld [vmem:[#allocation2] sm:$0xff]
    %v148 = vld [vmem:[#allocation2 + $0x8] sm:$0xff]
    %v149 = vld [vmem:[#allocation2 + $0x10] sm:$0xff]
    %v150 = vld [vmem:[#allocation2 + $0x18] sm:$0xff]
    %v151 = vld [vmem:[#allocation2 + $0x20] sm:$0xff]
    %v152 = vld [vmem:[#allocation2 + $0x28] sm:$0xff]
    %v153 = vld [vmem:[#allocation2 + $0x30] sm:$0xff]
    %v154 = vld [vmem:[#allocation2 + $0x38] sm:$0xff]
    %v155 = vld [vmem:[%s2] sm:$0x3]
    %v157 = vperm.slane %v155, 0
    %v158 = vperm.slane %v155, 1
    %v161 = vadd.f32 %v147, %v157
    %v162 = vadd.f32 %v148, %v158
    %v163 = vadd.f32 %v149, %v157
    %v164 = vadd.f32 %v150, %v158
    %v165 = vadd.f32 %v151, %v157
    %v166 = vadd.f32 %v152, %v158
    %v167 = vadd.f32 %v153, %v157
    %v168 = vadd.f32 %v154, %v158
    %169 = vst [vmem:[%s3] sm:$0xff] %v161
    %170 = vst [vmem:[%s3 + $0x8] sm:$0xff] %v162
    %171 = vst [vmem:[%s3 + $0x10] sm:$0xff] %v163
    %172 = vst [vmem:[%s3 + $0x18] sm:$0xff] %v164
    %173 = vst [vmem:[%s3 + $0x20] sm:$0xff] %v165
    %174 = vst [vmem:[%s3 + $0x28] sm:$0xff] %v166
    %175 = vst [vmem:[%s3 + $0x30] sm:$0xff] %v167
    %176 = vst [vmem:[%s3 + $0x38] sm:$0xff] %v168
  $region21: #{transformer_forward.53} parent=0 // pred_fallthru
    _
  // Predicated region
  $region22: #{transformer_forward.53} parent=0 // pred_check
    _
  $region23: #{transformer_forward.53} parent=0 // pred_check_branch
    %178 = sbr.rel (0) target = $region25
  $region24: #{transformer_forward.53} parent=0 // pred_region
    _
  $region25: #{transformer_forward.53} parent=0 // pred_fallthru
    _
  // Predicated region
  $region26: #{transformer_forward.53} parent=0 // pred_check
    _
  $region27: #{transformer_forward.53} parent=0 // pred_check_branch
    %180 = sbr.rel (0) target = $region29
  $region28: #{transformer_forward.53} parent=0 // pred_region
    _
  $region29: #{transformer_forward.53} parent=0 // pred_fallthru
    _

// kernel: transformer_forward.61
$region0: #{transformer_forward.61}
  #allocation0 [shape = 'u32[]', space=smem, size = 0x4, offset = 0x4, fixed_abs, tag = 'smem constant byte address 0x4 - core index']
  #allocation1 [shape = 'u32[72,128]{1,0:T(1,128)}', space=vmem, size = 0x9000, scoped, tag = 'internal scratch']
  #allocation2 [shape = 'f32[32,4]{1,0:T(8,128)}', space=vmem, size = 0x4000, scoped, tag = 'scratch operand']
  %s0 = inlined_call_operand.vmem [shape: f32[32,128], index: 0, kind: input, shape index: {}]
  %s1 = inlined_call_operand.vmem [shape: f32[128,4], index: 1, kind: input, shape index: {}]
  %s2 = inlined_call_operand.vmem [shape: f32[1,4], index: 2, kind: input, shape index: {}]
  %s3 = inlined_call_operand.vmem [shape: f32[32,4], index: 3, kind: output, shape index: {}]
  %s4 = sld [smem:[#allocation0]]
  $region30: #{transformer_forward.61} parent=0
    _
  %s6 = ssub.s32 1, %s4
  %s7 = scalar_select 0, %s6, %s4
  // Predicated region
  $region2: #{transformer_forward.61} parent=0 // pred_check
    _
  $region3: #{transformer_forward.61} parent=0 // pred_check_branch
    %9 = sbr.rel (0) target = $region5
  $region4: #{transformer_forward.61} parent=0 // pred_region
    _
  $region5: #{transformer_forward.61} parent=0 // pred_fallthru
    _
  // Predicated region
  $region6: #{transformer_forward.61} parent=0 // pred_check
    _
  $region7: #{transformer_forward.61} parent=0 // pred_check_branch
    %11 = sbr.rel (0) target = $region9
  $region8: #{transformer_forward.61} parent=0 // pred_region
    _
  $region9: #{transformer_forward.61} parent=0 // pred_fallthru
    _
  // Predicated region
  $region10: #{transformer_forward.61} parent=0 // pred_check
    _
  $region11: #{transformer_forward.61} parent=0 // pred_check_branch
    %13 = sbr.rel (0) target = $region13
  $region12: #{transformer_forward.61} parent=0 // pred_region
    _
  $region13: #{transformer_forward.61} parent=0 // pred_fallthru
    _
  %p14 = scmp.eq.s32.totalorder 0, 0
  // Predicated region
  $region14: #{transformer_forward.61} parent=0 // pred_check
    %p15 = pneg %p14
  $region15: #{transformer_forward.61} parent=0 // pred_check_branch
    %17 = sbr.rel (%p15) target = $region17
  $region16: #{transformer_forward.61} parent=0 // pred_region
    %vm18 = vcmask 31744
    %19 = vst.msk [vmem:[#allocation2] sm:$0xff] %vm18, 0.0
    %20 = vst.msk [vmem:[#allocation2 + $0x8] sm:$0xff] %vm18, 0.0
    %21 = vst.msk [vmem:[#allocation2 + $0x10] sm:$0xff] %vm18, 0.0
    %22 = vst.msk [vmem:[#allocation2 + $0x18] sm:$0xff] %vm18, 0.0
  $region17: #{transformer_forward.61} parent=0 // pred_fallthru
    _
  %v23 = vld [vmem:[#allocation2] sm:$0xff]
  %v24 = vld [vmem:[#allocation2 + $0x8] sm:$0xff]
  %v25 = vld [vmem:[#allocation2 + $0x10] sm:$0xff]
  %v26 = vld [vmem:[#allocation2 + $0x18] sm:$0xff]
  %v27 = vld [vmem:[%s0] sm:$0xff]
  %v28 = vld [vmem:[%s0 + $0x8] sm:$0xff]
  %v29 = vld [vmem:[%s0 + $0x10] sm:$0xff]
  %v30 = vld [vmem:[%s0 + $0x18] sm:$0xff]
  %v31 = vld [vmem:[%s1] sm:$0xff]
  %v32 = vld [vmem:[%s1 + $0x8] sm:$0xff]
  %v33 = vld [vmem:[%s1 + $0x10] sm:$0xff]
  %v34 = vld [vmem:[%s1 + $0x18] sm:$0xff]
  %v35 = vld [vmem:[%s1 + $0x20] sm:$0xff]
  %v36 = vld [vmem:[%s1 + $0x28] sm:$0xff]
  %v37 = vld [vmem:[%s1 + $0x30] sm:$0xff]
  %v38 = vld [vmem:[%s1 + $0x38] sm:$0xff]
  %v39 = vld [vmem:[%s1 + $0x40] sm:$0xff]
  %v40 = vld [vmem:[%s1 + $0x48] sm:$0xff]
  %v41 = vld [vmem:[%s1 + $0x50] sm:$0xff]
  %v42 = vld [vmem:[%s1 + $0x58] sm:$0xff]
  %v43 = vld [vmem:[%s1 + $0x60] sm:$0xff]
  %v44 = vld [vmem:[%s1 + $0x68] sm:$0xff]
  %v45 = vld [vmem:[%s1 + $0x70] sm:$0xff]
  %v46 = vld [vmem:[%s1 + $0x78] sm:$0xff]
  %47 = vmatpush.msra.mxu0 %v46
  %48 = vmatpush.msra.mxu0 %v45
  %49 = vmatpush.msra.mxu0 %v44
  %50 = vmatpush.msra.mxu0 %v43
  %51 = vmatpush.msra.mxu0 %v42
  %52 = vmatpush.msra.mxu0 %v41
  %53 = vmatpush.msra.mxu0 %v40
  %54 = vmatpush.msra.mxu0 %v39
  %55 = vmatpush.msra.mxu0 %v38
  %56 = vmatpush.msra.mxu0 %v37
  %57 = vmatpush.msra.mxu0 %v36
  %58 = vmatpush.msra.mxu0 %v35
  %59 = vmatpush.msra.mxu0 %v34
  %60 = vmatpush.msra.mxu0 %v33
  %61 = vmatpush.msra.mxu0 %v32
  %62 = vmatpush.msra.mxu0 %v31
  %63 = vmatmul.f32.gmra.mxu0 %v27
  %v64 = vpop.f32.mrf.mxu0
  %v65 = vadd.f32 0.0, %v64
  %66 = vmatmul.f32.gmra.mxu0 %v28
  %v67 = vpop.f32.mrf.mxu0
  %v68 = vadd.f32 0.0, %v67
  %69 = vmatmul.f32.gmra.mxu0 %v29
  %v70 = vpop.f32.mrf.mxu0
  %v71 = vadd.f32 0.0, %v70
  %72 = vmatmul.f32.gmra.mxu0 %v30
  %v73 = vpop.f32.mrf.mxu0
  %v74 = vadd.f32 0.0, %v73
  %75 = vdwg.mxu0
  %v76 = vadd.f32 %v23, %v65
  %v77 = vadd.f32 %v24, %v68
  %v78 = vadd.f32 %v25, %v71
  %v79 = vadd.f32 %v26, %v74
  %vm80 = vcmask 31744
  %81 = vst.msk [vmem:[#allocation2] sm:$0xff] %vm80, %v76
  %82 = vst.msk [vmem:[#allocation2 + $0x8] sm:$0xff] %vm80, %v77
  %83 = vst.msk [vmem:[#allocation2 + $0x10] sm:$0xff] %vm80, %v78
  %84 = vst.msk [vmem:[#allocation2 + $0x18] sm:$0xff] %vm80, %v79
  // Predicated region
  $region18: #{transformer_forward.61} parent=0 // pred_check
    %p85 = pneg %p14
  $region19: #{transformer_forward.61} parent=0 // pred_check_branch
    %87 = sbr.rel (%p85) target = $region21
  $region20: #{transformer_forward.61} parent=0 // pred_region
    %v88 = vld [vmem:[#allocation2] sm:$0xff]
    %v89 = vld [vmem:[#allocation2 + $0x8] sm:$0xff]
    %v90 = vld [vmem:[#allocation2 + $0x10] sm:$0xff]
    %v91 = vld [vmem:[#allocation2 + $0x18] sm:$0xff]
    %v92 = vld [vmem:[%s2] sm:$0x1]
    %v94 = vperm.slane %v92, 0
    %v96 = vadd.f32 %v88, %v94
    %v97 = vadd.f32 %v89, %v94
    %v98 = vadd.f32 %v90, %v94
    %v99 = vadd.f32 %v91, %v94
    %100 = vst.msk [vmem:[%s3] sm:$0xff] %vm80, %v96
    %101 = vst.msk [vmem:[%s3 + $0x8] sm:$0xff] %vm80, %v97
    %102 = vst.msk [vmem:[%s3 + $0x10] sm:$0xff] %vm80, %v98
    %103 = vst.msk [vmem:[%s3 + $0x18] sm:$0xff] %vm80, %v99
  $region21: #{transformer_forward.61} parent=0 // pred_fallthru
    _
  // Predicated region
  $region22: #{transformer_forward.61} parent=0 // pred_check
    _
  $region23: #{transformer_forward.61} parent=0 // pred_check_branch
    %105 = sbr.rel (0) target = $region25
  $region24: #{transformer_forward.61} parent=0 // pred_region
    _
  $region25: #{transformer_forward.61} parent=0 // pred_fallthru
    _
  // Predicated region
  $region26: #{transformer_forward.61} parent=0 // pred_check
    _
  $region27: #{transformer_forward.61} parent=0 // pred_check_branch
    %107 = sbr.rel (0) target = $region29
  $region28: #{transformer_forward.61} parent=0 // pred_region
    _
  $region29: #{transformer_forward.61} parent=0 // pred_fallthru
    _

// kernel: transformer_forward.54
$region0: #{transformer_forward.54}
  #allocation0 [shape = 'u32[]', space=smem, size = 0x4, offset = 0x4, fixed_abs, tag = 'smem constant byte address 0x4 - core index']
  #allocation1 [shape = 'u32[72,128]{1,0:T(1,128)}', space=vmem, size = 0x9000, scoped, tag = 'internal scratch']
  %s0 = inlined_call_operand.vmem [shape: f32[2,16,128], index: 0, kind: input, shape index: {}]
  %s1 = inlined_call_operand.vmem [shape: f32[2,16,256], index: 1, kind: input, shape index: {}]
  %s2 = inlined_call_operand.vmem [shape: f32[2,16,128], index: 2, kind: output, shape index: {}]
  %s3 = sld [smem:[#allocation0]]
  $region41: #{transformer_forward.54} parent=0
    _
  %s5 = ssub.s32 1, %s3
  %s6 = scalar_select 0, %s5, %s3
  loop: start=0, step=1, limit=4
  $region2: #{transformer_forward.54} parent=0 // loop_pre_header
    _
  $region3: #{transformer_forward.54} parent=0 // loop_header
    %s8 = sphi 0, %s12
    %p9 = scmp.ge.s32.totalorder %s8, 4
    %s18 = sphi 0, %s20
    %s21 = sphi 0, %s18
    %s22 = sphi 0, %s21
    %s38 = sphi 0, %s22
    %s44 = sphi 0, %s46
    %s47 = sphi 0, %s44
    %s48 = sphi 0, %s47
    %s64 = sphi 0, %s48
    %s70 = sphi 0, %s72
    %s73 = sphi 0, %s70
    %s74 = sphi 0, %s73
    %s90 = sphi 0, %s74
  $region4: #{transformer_forward.54} parent=0 // loop_header_branch
    %11 = sbr.rel (%p9) target = $region8
  $region5: #{transformer_forward.54} parent=0 // loop_body
    %s13 = ssub.s32 %s8, 1
    %s14 = ssub.s32 %s8, 2
    %s15 = sadd.s32 %s8, 1
    %s16 = ssub.s32 %s8, %s15
    %p17 = scmp.eq.s32.totalorder %s16, 0
    %s19 = sadd.s32 %s18, 1
    %s20 = scalar_select %p17, %s18, %s19
    %p23 = pneg %p17
    %p24 = scmp.eq.s32.totalorder %s8, 1
    %p25 = por %p23, %p24
    %p26 = scmp.ne.s32.totalorder %s18, %s21
    %p27 = scmp.eq.s32.totalorder %s8, 0
    %p28 = por %p26, %p27
    %p29 = scmp.ne.s32.totalorder %s18, %s21
    %p30 = scmp.eq.s32.totalorder %s13, 1
    %p31 = por %p29, %p30
    %p32 = scmp.ne.s32.totalorder %s21, %s22
    %p33 = scmp.eq.s32.totalorder %s13, 0
    %p34 = por %p32, %p33
    %p35 = scmp.ne.s32.totalorder %s21, %s22
    %p36 = scmp.eq.s32.totalorder %s14, 1
    %p37 = por %p35, %p36
    %p39 = scmp.ne.s32.totalorder %s22, %s38
    %p40 = scmp.eq.s32.totalorder %s14, 0
    %p41 = por %p39, %p40
    %s42 = ssub.s32 %s8, %s15
    %p43 = scmp.eq.s32.totalorder %s42, 0
    %s45 = sadd.s32 %s44, 1
    %s46 = scalar_select %p43, %s44, %s45
    %p49 = pneg %p43
    %p50 = scmp.eq.s32.totalorder %s8, 1
    %p51 = por %p49, %p50
    %p52 = scmp.ne.s32.totalorder %s44, %s47
    %p53 = scmp.eq.s32.totalorder %s8, 0
    %p54 = por %p52, %p53
    %p55 = scmp.ne.s32.totalorder %s44, %s47
    %p56 = scmp.eq.s32.totalorder %s13, 1
    %p57 = por %p55, %p56
    %p58 = scmp.ne.s32.totalorder %s47, %s48
    %p59 = scmp.eq.s32.totalorder %s13, 0
    %p60 = por %p58, %p59
    %p61 = scmp.ne.s32.totalorder %s47, %s48
    %p62 = scmp.eq.s32.totalorder %s14, 1
    %p63 = por %p61, %p62
    %p65 = scmp.ne.s32.totalorder %s48, %s64
    %p66 = scmp.eq.s32.totalorder %s14, 0
    %p67 = por %p65, %p66
    %s68 = ssub.s32 %s8, %s15
    %p69 = scmp.eq.s32.totalorder %s68, 0
    %s71 = sadd.s32 %s70, 1
    %s72 = scalar_select %p69, %s70, %s71
    %p75 = pneg %p69
    %p76 = scmp.eq.s32.totalorder %s8, 1
    %p77 = por %p75, %p76
    %p78 = scmp.ne.s32.totalorder %s70, %s73
    %p79 = scmp.eq.s32.totalorder %s8, 0
    %p80 = por %p78, %p79
    %p81 = scmp.ne.s32.totalorder %s70, %s73
    %p82 = scmp.eq.s32.totalorder %s13, 1
    %p83 = por %p81, %p82
    %p84 = scmp.ne.s32.totalorder %s73, %s74
    %p85 = scmp.eq.s32.totalorder %s13, 0
    %p86 = por %p84, %p85
    %p87 = scmp.ne.s32.totalorder %s73, %s74
    %p88 = scmp.eq.s32.totalorder %s14, 1
    %p89 = por %p87, %p88
    %p91 = scmp.ne.s32.totalorder %s74, %s90
    %p92 = scmp.eq.s32.totalorder %s14, 0
    %p93 = por %p91, %p92
    %p94 = scmp.le.s32.totalorder 1, %s8
    %p95 = scmp.lt.s32.totalorder %s8, 3
    %p96 = pnand %p94, %p95
    %p97 = pneg %p96
    // Predicated region
    $region9: #{transformer_forward.54} parent=5 // pred_check
      _
    $region10: #{transformer_forward.54} parent=5 // pred_check_branch
      %99 = sbr.rel (%p96) target = $region12
    $region11: #{transformer_forward.54} parent=5 // pred_region
      %s100 = ssub.s32 %s8, 1
    $region12: #{transformer_forward.54} parent=5 // pred_fallthru
      _
    %p101 = scmp.lt.s32.totalorder %s8, 2
    // Predicated region
    $region13: #{transformer_forward.54} parent=5 // pred_check
      %p102 = pneg %p101
    $region14: #{transformer_forward.54} parent=5 // pred_check_branch
      %104 = sbr.rel (%p102) target = $region16
    $region15: #{transformer_forward.54} parent=5 // pred_region
      // Predicated region
      $region17: #{transformer_forward.54} parent=15 // pred_check
        %p105 = pneg %p28
      $region18: #{transformer_forward.54} parent=15 // pred_check_branch
        %107 = sbr.rel (%p105) target = $region20
      $region19: #{transformer_forward.54} parent=15 // pred_region
        %p108 = scmp.lt.s32.totalorder %s8, 1
        %s109 = scalar_select %p108, %s8, 1
        %s110 = smul.addr %s109, 2
        %s111 = smul.addr %s110, 8
        %s112 = scalar_lea.vmem %s0, %s111
      $region20: #{transformer_forward.54} parent=15 // pred_fallthru
        _
      // Predicated region
      $region21: #{transformer_forward.54} parent=15 // pred_check
        %p113 = pneg %p54
      $region22: #{transformer_forward.54} parent=15 // pred_check_branch
        %115 = sbr.rel (%p113) target = $region24
      $region23: #{transformer_forward.54} parent=15 // pred_region
        %p116 = scmp.lt.s32.totalorder %s8, 1
        %s117 = scalar_select %p116, %s8, 1
        %s118 = smul.addr %s117, 4
        %s119 = smul.addr %s118, 8
        %s120 = scalar_lea.vmem %s1, %s119
      $region24: #{transformer_forward.54} parent=15 // pred_fallthru
        _
    $region16: #{transformer_forward.54} parent=5 // pred_fallthru
      _
    %p121 = scmp.le.s32.totalorder 1, %s8
    %p122 = scmp.lt.s32.totalorder %s8, 3
    %p123 = pnand %p121, %p122
    %p124 = pneg %p123
    // Predicated region
    $region25: #{transformer_forward.54} parent=5 // pred_check
      _
    $region26: #{transformer_forward.54} parent=5 // pred_check_branch
      %126 = sbr.rel (%p123) target = $region28
    $region27: #{transformer_forward.54} parent=5 // pred_region
      %s127 = ssub.s32 %s8, 1
      %p128 = scmp.lt.s32.totalorder %s13, 1
      %s129 = scalar_select %p128, %s13, 1
      %s130 = smul.addr %s129, 2
      %s131 = smul.addr %s130, 8
      %s132 = scalar_lea.vmem %s0, %s131
      %p133 = pneg %p34
      %p134 = pneg %p31
      %p135 = scmp.lt.s32.totalorder %s13, 1
      %s136 = scalar_select %p135, %s13, 1
      %s137 = smul.addr %s136, 4
      %s138 = smul.addr %s137, 8
      %s139 = scalar_lea.vmem %s1, %s138
      %p140 = pneg %p60
      %p141 = pneg %p57
      %p142 = pneg %p86
      %p143 = pneg %p83
      %p144 = scmp.lt.s32.totalorder %s13, 1
      %s145 = scalar_select %p144, %s13, 1
      %s146 = smul.addr %s145, 2
      %s147 = smul.addr %s146, 8
      %s148 = scalar_lea.vmem %s2, %s147
      %p149 = scmp.lt.s32.totalorder %s13, 1
      %s150 = scalar_select %p149, %s13, 1
      %s151 = smul.addr %s150, 2
      %s152 = smul.addr %s151, 8
      %s153 = scalar_lea.vmem %s0, %s152
      %p154 = scmp.lt.s32.totalorder %s13, 1
      %s155 = scalar_select %p154, %s13, 1
      %s156 = smul.addr %s155, 4
      %s157 = smul.addr %s156, 8
      %s158 = scalar_lea.vmem %s1, %s157
      %p159 = scmp.lt.s32.totalorder %s13, 1
      %s160 = scalar_select %p159, %s13, 1
      %s161 = smul.addr %s160, 2
      %s162 = smul.addr %s161, 8
      %s163 = scalar_lea.vmem %s2, %s162
      %v164 = vld [vmem:[%s153] sm:$0xff]
      %v165 = vld [vmem:[%s153 + $0x8] sm:$0xff]
      %v166 = vld [vmem:[%s158] sm:$0xff]
      %v167 = vld [vmem:[%s158 + $0x10] sm:$0xff]
      %v168 = vld [vmem:[%s158 + $0x8] sm:$0xff]
      %v169 = vld [vmem:[%s158 + $0x18] sm:$0xff]
      %v170 = vmul.f32 %v164, 0.25
      %v171 = vmul.f32 %v165, 0.25
      %vm172 = vcmask 130048
      %v174 = vsel %vm172, %v170, 0
      %v177 = vsel %vm172, %v171, 0
      %v180 = vsel %vm172, %v166, 0
      %v183 = vsel %vm172, %v167, 0
      %185 = vmatpush.xpose.msra.mxu0 0.0
      %186 = vmatpush.xpose.msra.mxu0 0.0
      %187 = vmatpush.xpose.msra.mxu0 0.0
      %188 = vmatpush.xpose.msra.mxu0 0.0
      %189 = vmatpush.xpose.msra.mxu0 0.0
      %190 = vmatpush.xpose.msra.mxu0 0.0
      %191 = vmatpush.xpose.msra.mxu0 0.0
      %192 = vmatpush.xpose.msra.mxu0 0.0
      %193 = vmatpush.xpose.msra.mxu0 0.0
      %194 = vmatpush.xpose.msra.mxu0 0.0
      %195 = vmatpush.xpose.msra.mxu0 0.0
      %196 = vmatpush.xpose.msra.mxu0 0.0
      %197 = vmatpush.xpose.msra.mxu0 0.0
      %198 = vmatpush.xpose.msra.mxu0 0.0
      %199 = vmatpush.xpose.msra.mxu0 %v183
      %200 = vmatpush.xpose.msra.mxu0 %v180
      %201 = vmatmul.f32.gmra.mxu0 %v174
      %v202 = vpop.f32.mrf.mxu0
      %v203 = vadd.f32 0.0, %v202
      %204 = vmatmul.f32.gmra.mxu0 %v177
      %v205 = vpop.f32.mrf.mxu0
      %v206 = vadd.f32 0.0, %v205
      %207 = vdwg.mxu0
      %v208 = vsel %vm172, %v203, -inf
      %209 = vmax.xlane.f32.xlu0 %v208
      %v210 = vpop.xlane.xlu0 %209
      %v211 = vsel %vm172, %v206, -inf
      %212 = vmax.xlane.f32.xlu0 %v211
      %v213 = vpop.xlane.xlu0 %212
      %v214 = vsub.f32 %v203, %v210
      %v215 = vsub.f32 %v206, %v213
      %v216 = vmul.f32 %v214, 1.442695
      %v217 = vpow.pop %v216
      %v218 = vmul.f32 %v215, 1.442695
      %v219 = vpow.pop %v218
      %v220 = vsel %vm172, %v217, 0.0
      %221 = vadd.xlane.f32.xlu0 %v220
      %v222 = vpop.xlane.xlu0 %221
      %v223 = vsel %vm172, %v219, 0.0
      %224 = vadd.xlane.f32.xlu0 %v223
      %v225 = vpop.xlane.xlu0 %224
      %v226 = vrcp.pop %v222
      %v227 = vrcp.pop %v225
      %v228 = vmul.f32 %v217, %v226
      %v229 = vmul.f32 %v219, %v227
      %v231 = vsel %vm172, %v228, 0
      %v234 = vsel %vm172, %v229, 0
      %236 = vmatpush.msra.mxu0 0.0
      %237 = vmatpush.msra.mxu0 0.0
      %238 = vmatpush.msra.mxu0 0.0
      %239 = vmatpush.msra.mxu0 0.0
      %240 = vmatpush.msra.mxu0 0.0
      %241 = vmatpush.msra.mxu0 0.0
      %242 = vmatpush.msra.mxu0 0.0
      %243 = vmatpush.msra.mxu0 0.0
      %244 = vmatpush.msra.mxu0 0.0
      %245 = vmatpush.msra.mxu0 0.0
      %246 = vmatpush.msra.mxu0 0.0
      %247 = vmatpush.msra.mxu0 0.0
      %248 = vmatpush.msra.mxu0 0.0
      %249 = vmatpush.msra.mxu0 0.0
      %250 = vmatpush.msra.mxu0 %v169
      %251 = vmatpush.msra.mxu0 %v168
      %252 = vmatmul.f32.gmra.mxu0 %v231
      %v253 = vpop.f32.mrf.mxu0
      %v254 = vadd.f32 0.0, %v253
      %255 = vmatmul.f32.gmra.mxu0 %v234
      %v256 = vpop.f32.mrf.mxu0
      %v257 = vadd.f32 0.0, %v256
      %258 = vdwg.mxu0
      %259 = vrot.lane.b32.xlu0 %v170, 112
      %v260 = vpop.permute.xlu0 %259
      %261 = vrot.lane.b32.xlu0 %v171, 112
      %v262 = vpop.permute.xlu0 %261
      %263 = vrot.lane.b32.xlu0 %v166, 112
      %v264 = vpop.permute.xlu0 %263
      %265 = vrot.lane.b32.xlu0 %v167, 112
      %v266 = vpop.permute.xlu0 %265
      %v267 = vsel %vm172, %v260, 0
      %v269 = vsel %vm172, %v262, 0
      %v271 = vsel %vm172, %v264, 0
      %v273 = vsel %vm172, %v266, 0
      %275 = vmatpush.xpose.msra.mxu0 0.0
      %276 = vmatpush.xpose.msra.mxu0 0.0
      %277 = vmatpush.xpose.msra.mxu0 0.0
      %278 = vmatpush.xpose.msra.mxu0 0.0
      %279 = vmatpush.xpose.msra.mxu0 0.0
      %280 = vmatpush.xpose.msra.mxu0 0.0
      %281 = vmatpush.xpose.msra.mxu0 0.0
      %282 = vmatpush.xpose.msra.mxu0 0.0
      %283 = vmatpush.xpose.msra.mxu0 0.0
      %284 = vmatpush.xpose.msra.mxu0 0.0
      %285 = vmatpush.xpose.msra.mxu0 0.0
      %286 = vmatpush.xpose.msra.mxu0 0.0
      %287 = vmatpush.xpose.msra.mxu0 0.0
      %288 = vmatpush.xpose.msra.mxu0 0.0
      %289 = vmatpush.xpose.msra.mxu0 %v273
      %290 = vmatpush.xpose.msra.mxu0 %v271
      %291 = vmatmul.f32.gmra.mxu0 %v267
      %v292 = vpop.f32.mrf.mxu0
      %v293 = vadd.f32 0.0, %v292
      %294 = vmatmul.f32.gmra.mxu0 %v269
      %v295 = vpop.f32.mrf.mxu0
      %v296 = vadd.f32 0.0, %v295
      %297 = vdwg.mxu0
      %v298 = vsel %vm172, %v293, -inf
      %299 = vmax.xlane.f32.xlu0 %v298
      %v300 = vpop.xlane.xlu0 %299
      %v301 = vsel %vm172, %v296, -inf
      %302 = vmax.xlane.f32.xlu0 %v301
      %v303 = vpop.xlane.xlu0 %302
      %v304 = vsub.f32 %v293, %v300
      %v305 = vsub.f32 %v296, %v303
      %v306 = vmul.f32 %v304, 1.442695
      %v307 = vpow.pop %v306
      %v308 = vmul.f32 %v305, 1.442695
      %v309 = vpow.pop %v308
      %v310 = vsel %vm172, %v307, 0.0
      %311 = vadd.xlane.f32.xlu0 %v310
      %v312 = vpop.xlane.xlu0 %311
      %v313 = vsel %vm172, %v309, 0.0
      %314 = vadd.xlane.f32.xlu0 %v313
      %v315 = vpop.xlane.xlu0 %314
      %v316 = vrcp.pop %v312
      %v317 = vrcp.pop %v315
      %v318 = vmul.f32 %v307, %v316
      %v319 = vmul.f32 %v309, %v317
      %322 = vrot.lane.b32.xlu0 %v168, 112
      %v323 = vpop.permute.xlu0 %322
      %324 = vrot.lane.b32.xlu0 %v169, 112
      %v325 = vpop.permute.xlu0 %324
      %v329 = vsel %vm172, %v318, 0
      %v332 = vsel %vm172, %v319, 0
      %334 = vmatpush.msra.mxu0 0.0
      %335 = vmatpush.msra.mxu0 0.0
      %336 = vmatpush.msra.mxu0 0.0
      %337 = vmatpush.msra.mxu0 0.0
      %338 = vmatpush.msra.mxu0 0.0
      %339 = vmatpush.msra.mxu0 0.0
      %340 = vmatpush.msra.mxu0 0.0
      %341 = vmatpush.msra.mxu0 0.0
      %342 = vmatpush.msra.mxu0 0.0
      %343 = vmatpush.msra.mxu0 0.0
      %344 = vmatpush.msra.mxu0 0.0
      %345 = vmatpush.msra.mxu0 0.0
      %346 = vmatpush.msra.mxu0 0.0
      %347 = vmatpush.msra.mxu0 0.0
      %348 = vmatpush.msra.mxu0 %v325
      %349 = vmatpush.msra.mxu0 %v323
      %350 = vmatmul.f32.gmra.mxu0 %v329
      %v351 = vpop.f32.mrf.mxu0
      %v352 = vadd.f32 0.0, %v351
      %353 = vmatmul.f32.gmra.mxu0 %v332
      %v354 = vpop.f32.mrf.mxu0
      %v355 = vadd.f32 0.0, %v354
      %356 = vdwg.mxu0
      %357 = vrot.lane.b32.xlu0 %v170, 96
      %v358 = vpop.permute.xlu0 %357
      %359 = vrot.lane.b32.xlu0 %v171, 96
      %v360 = vpop.permute.xlu0 %359
      %361 = vrot.lane.b32.xlu0 %v166, 96
      %v362 = vpop.permute.xlu0 %361
      %363 = vrot.lane.b32.xlu0 %v167, 96
      %v364 = vpop.permute.xlu0 %363
      %v365 = vsel %vm172, %v358, 0
      %v367 = vsel %vm172, %v360, 0
      %v369 = vsel %vm172, %v362, 0
      %v371 = vsel %vm172, %v364, 0
      %373 = vmatpush.xpose.msra.mxu0 0.0
      %374 = vmatpush.xpose.msra.mxu0 0.0
      %375 = vmatpush.xpose.msra.mxu0 0.0
      %376 = vmatpush.xpose.msra.mxu0 0.0
      %377 = vmatpush.xpose.msra.mxu0 0.0
      %378 = vmatpush.xpose.msra.mxu0 0.0
      %379 = vmatpush.xpose.msra.mxu0 0.0
      %380 = vmatpush.xpose.msra.mxu0 0.0
      %381 = vmatpush.xpose.msra.mxu0 0.0
      %382 = vmatpush.xpose.msra.mxu0 0.0
      %383 = vmatpush.xpose.msra.mxu0 0.0
      %384 = vmatpush.xpose.msra.mxu0 0.0
      %385 = vmatpush.xpose.msra.mxu0 0.0
      %386 = vmatpush.xpose.msra.mxu0 0.0
      %387 = vmatpush.xpose.msra.mxu0 %v371
      %388 = vmatpush.xpose.msra.mxu0 %v369
      %389 = vmatmul.f32.gmra.mxu0 %v365
      %v390 = vpop.f32.mrf.mxu0
      %v391 = vadd.f32 0.0, %v390
      %392 = vmatmul.f32.gmra.mxu0 %v367
      %v393 = vpop.f32.mrf.mxu0
      %v394 = vadd.f32 0.0, %v393
      %395 = vdwg.mxu0
      %v396 = vsel %vm172, %v391, -inf
      %397 = vmax.xlane.f32.xlu0 %v396
      %v398 = vpop.xlane.xlu0 %397
      %v399 = vsel %vm172, %v394, -inf
      %400 = vmax.xlane.f32.xlu0 %v399
      %v401 = vpop.xlane.xlu0 %400
      %v402 = vsub.f32 %v391, %v398
      %v403 = vsub.f32 %v394, %v401
      %v404 = vmul.f32 %v402, 1.442695
      %v405 = vpow.pop %v404
      %v406 = vmul.f32 %v403, 1.442695
      %v407 = vpow.pop %v406
      %v408 = vsel %vm172, %v405, 0.0
      %409 = vadd.xlane.f32.xlu0 %v408
      %v410 = vpop.xlane.xlu0 %409
      %v411 = vsel %vm172, %v407, 0.0
      %412 = vadd.xlane.f32.xlu0 %v411
      %v413 = vpop.xlane.xlu0 %412
      %v414 = vrcp.pop %v410
      %v415 = vrcp.pop %v413
      %v416 = vmul.f32 %v405, %v414
      %v417 = vmul.f32 %v407, %v415
      %418 = vrot.lane.b32.xlu0 %v168, 96
      %v419 = vpop.permute.xlu0 %418
      %420 = vrot.lane.b32.xlu0 %v169, 96
      %v421 = vpop.permute.xlu0 %420
      %v425 = vsel %vm172, %v416, 0
      %v428 = vsel %vm172, %v417, 0
      %430 = vmatpush.msra.mxu0 0.0
      %431 = vmatpush.msra.mxu0 0.0
      %432 = vmatpush.msra.mxu0 0.0
      %433 = vmatpush.msra.mxu0 0.0
      %434 = vmatpush.msra.mxu0 0.0
      %435 = vmatpush.msra.mxu0 0.0
      %436 = vmatpush.msra.mxu0 0.0
      %437 = vmatpush.msra.mxu0 0.0
      %438 = vmatpush.msra.mxu0 0.0
      %439 = vmatpush.msra.mxu0 0.0
      %440 = vmatpush.msra.mxu0 0.0
      %441 = vmatpush.msra.mxu0 0.0
      %442 = vmatpush.msra.mxu0 0.0
      %443 = vmatpush.msra.mxu0 0.0
      %444 = vmatpush.msra.mxu0 %v421
      %445 = vmatpush.msra.mxu0 %v419
      %446 = vmatmul.f32.gmra.mxu0 %v425
      %v447 = vpop.f32.mrf.mxu0
      %v448 = vadd.f32 0.0, %v447
      %449 = vmatmul.f32.gmra.mxu0 %v428
      %v450 = vpop.f32.mrf.mxu0
      %v451 = vadd.f32 0.0, %v450
      %452 = vdwg.mxu0
      %453 = vrot.lane.b32.xlu0 %v170, 80
      %v454 = vpop.permute.xlu0 %453
      %455 = vrot.lane.b32.xlu0 %v171, 80
      %v456 = vpop.permute.xlu0 %455
      %457 = vrot.lane.b32.xlu0 %v166, 80
      %v458 = vpop.permute.xlu0 %457
      %459 = vrot.lane.b32.xlu0 %v167, 80
      %v460 = vpop.permute.xlu0 %459
      %v461 = vsel %vm172, %v454, 0
      %v463 = vsel %vm172, %v456, 0
      %v465 = vsel %vm172, %v458, 0
      %v467 = vsel %vm172, %v460, 0
      %469 = vmatpush.xpose.msra.mxu0 0.0
      %470 = vmatpush.xpose.msra.mxu0 0.0
      %471 = vmatpush.xpose.msra.mxu0 0.0
      %472 = vmatpush.xpose.msra.mxu0 0.0
      %473 = vmatpush.xpose.msra.mxu0 0.0
      %474 = vmatpush.xpose.msra.mxu0 0.0
      %475 = vmatpush.xpose.msra.mxu0 0.0
      %476 = vmatpush.xpose.msra.mxu0 0.0
      %477 = vmatpush.xpose.msra.mxu0 0.0
      %478 = vmatpush.xpose.msra.mxu0 0.0
      %479 = vmatpush.xpose.msra.mxu0 0.0
      %480 = vmatpush.xpose.msra.mxu0 0.0
      %481 = vmatpush.xpose.msra.mxu0 0.0
      %482 = vmatpush.xpose.msra.mxu0 0.0
      %483 = vmatpush.xpose.msra.mxu0 %v467
      %484 = vmatpush.xpose.msra.mxu0 %v465
      %485 = vmatmul.f32.gmra.mxu0 %v461
      %v486 = vpop.f32.mrf.mxu0
      %v487 = vadd.f32 0.0, %v486
      %488 = vmatmul.f32.gmra.mxu0 %v463
      %v489 = vpop.f32.mrf.mxu0
      %v490 = vadd.f32 0.0, %v489
      %491 = vdwg.mxu0
      %v492 = vsel %vm172, %v487, -inf
      %493 = vmax.xlane.f32.xlu0 %v492
      %v494 = vpop.xlane.xlu0 %493
      %v495 = vsel %vm172, %v490, -inf
      %496 = vmax.xlane.f32.xlu0 %v495
      %v497 = vpop.xlane.xlu0 %496
      %v498 = vsub.f32 %v487, %v494
      %v499 = vsub.f32 %v490, %v497
      %v500 = vmul.f32 %v498, 1.442695
      %v501 = vpow.pop %v500
      %v502 = vmul.f32 %v499, 1.442695
      %v503 = vpow.pop %v502
      %v504 = vsel %vm172, %v501, 0.0
      %505 = vadd.xlane.f32.xlu0 %v504
      %v506 = vpop.xlane.xlu0 %505
      %v507 = vsel %vm172, %v503, 0.0
      %508 = vadd.xlane.f32.xlu0 %v507
      %v509 = vpop.xlane.xlu0 %508
      %v510 = vrcp.pop %v506
      %v511 = vrcp.pop %v509
      %v512 = vmul.f32 %v501, %v510
      %v513 = vmul.f32 %v503, %v511
      %514 = vrot.lane.b32.xlu0 %v168, 80
      %v515 = vpop.permute.xlu0 %514
      %516 = vrot.lane.b32.xlu0 %v169, 80
      %v517 = vpop.permute.xlu0 %516
      %v521 = vsel %vm172, %v512, 0
      %v524 = vsel %vm172, %v513, 0
      %526 = vmatpush.msra.mxu0 0.0
      %527 = vmatpush.msra.mxu0 0.0
      %528 = vmatpush.msra.mxu0 0.0
      %529 = vmatpush.msra.mxu0 0.0
      %530 = vmatpush.msra.mxu0 0.0
      %531 = vmatpush.msra.mxu0 0.0
      %532 = vmatpush.msra.mxu0 0.0
      %533 = vmatpush.msra.mxu0 0.0
      %534 = vmatpush.msra.mxu0 0.0
      %535 = vmatpush.msra.mxu0 0.0
      %536 = vmatpush.msra.mxu0 0.0
      %537 = vmatpush.msra.mxu0 0.0
      %538 = vmatpush.msra.mxu0 0.0
      %539 = vmatpush.msra.mxu0 0.0
      %540 = vmatpush.msra.mxu0 %v517
      %541 = vmatpush.msra.mxu0 %v515
      %542 = vmatmul.f32.gmra.mxu0 %v521
      %v543 = vpop.f32.mrf.mxu0
      %v544 = vadd.f32 0.0, %v543
      %545 = vmatmul.f32.gmra.mxu0 %v524
      %v546 = vpop.f32.mrf.mxu0
      %v547 = vadd.f32 0.0, %v546
      %548 = vdwg.mxu0
      %549 = vrot.lane.b32.xlu0 %v170, 64
      %v550 = vpop.permute.xlu0 %549
      %551 = vrot.lane.b32.xlu0 %v171, 64
      %v552 = vpop.permute.xlu0 %551
      %553 = vrot.lane.b32.xlu0 %v166, 64
      %v554 = vpop.permute.xlu0 %553
      %555 = vrot.lane.b32.xlu0 %v167, 64
      %v556 = vpop.permute.xlu0 %555
      %v557 = vsel %vm172, %v550, 0
      %v559 = vsel %vm172, %v552, 0
      %v561 = vsel %vm172, %v554, 0
      %v563 = vsel %vm172, %v556, 0
      %565 = vmatpush.xpose.msra.mxu0 0.0
      %566 = vmatpush.xpose.msra.mxu0 0.0
      %567 = vmatpush.xpose.msra.mxu0 0.0
      %568 = vmatpush.xpose.msra.mxu0 0.0
      %569 = vmatpush.xpose.msra.mxu0 0.0
      %570 = vmatpush.xpose.msra.mxu0 0.0
      %571 = vmatpush.xpose.msra.mxu0 0.0
      %572 = vmatpush.xpose.msra.mxu0 0.0
      %573 = vmatpush.xpose.msra.mxu0 0.0
      %574 = vmatpush.xpose.msra.mxu0 0.0
      %575 = vmatpush.xpose.msra.mxu0 0.0
      %576 = vmatpush.xpose.msra.mxu0 0.0
      %577 = vmatpush.xpose.msra.mxu0 0.0
      %578 = vmatpush.xpose.msra.mxu0 0.0
      %579 = vmatpush.xpose.msra.mxu0 %v563
      %580 = vmatpush.xpose.msra.mxu0 %v561
      %581 = vmatmul.f32.gmra.mxu0 %v557
      %v582 = vpop.f32.mrf.mxu0
      %v583 = vadd.f32 0.0, %v582
      %584 = vmatmul.f32.gmra.mxu0 %v559
      %v585 = vpop.f32.mrf.mxu0
      %v586 = vadd.f32 0.0, %v585
      %587 = vdwg.mxu0
      %v588 = vsel %vm172, %v583, -inf
      %589 = vmax.xlane.f32.xlu0 %v588
      %v590 = vpop.xlane.xlu0 %589
      %v591 = vsel %vm172, %v586, -inf
      %592 = vmax.xlane.f32.xlu0 %v591
      %v593 = vpop.xlane.xlu0 %592
      %v594 = vsub.f32 %v583, %v590
      %v595 = vsub.f32 %v586, %v593
      %v596 = vmul.f32 %v594, 1.442695
      %v597 = vpow.pop %v596
      %v598 = vmul.f32 %v595, 1.442695
      %v599 = vpow.pop %v598
      %v600 = vsel %vm172, %v597, 0.0
      %601 = vadd.xlane.f32.xlu0 %v600
      %v602 = vpop.xlane.xlu0 %601
      %v603 = vsel %vm172, %v599, 0.0
      %604 = vadd.xlane.f32.xlu0 %v603
      %v605 = vpop.xlane.xlu0 %604
      %v606 = vrcp.pop %v602
      %v607 = vrcp.pop %v605
      %v608 = vmul.f32 %v597, %v606
      %v609 = vmul.f32 %v599, %v607
      %610 = vrot.lane.b32.xlu0 %v168, 64
      %v611 = vpop.permute.xlu0 %610
      %612 = vrot.lane.b32.xlu0 %v169, 64
      %v613 = vpop.permute.xlu0 %612
      %v617 = vsel %vm172, %v608, 0
      %v620 = vsel %vm172, %v609, 0
      %622 = vmatpush.msra.mxu0 0.0
      %623 = vmatpush.msra.mxu0 0.0
      %624 = vmatpush.msra.mxu0 0.0
      %625 = vmatpush.msra.mxu0 0.0
      %626 = vmatpush.msra.mxu0 0.0
      %627 = vmatpush.msra.mxu0 0.0
      %628 = vmatpush.msra.mxu0 0.0
      %629 = vmatpush.msra.mxu0 0.0
      %630 = vmatpush.msra.mxu0 0.0
      %631 = vmatpush.msra.mxu0 0.0
      %632 = vmatpush.msra.mxu0 0.0
      %633 = vmatpush.msra.mxu0 0.0
      %634 = vmatpush.msra.mxu0 0.0
      %635 = vmatpush.msra.mxu0 0.0
      %636 = vmatpush.msra.mxu0 %v613
      %637 = vmatpush.msra.mxu0 %v611
      %638 = vmatmul.f32.gmra.mxu0 %v617
      %v639 = vpop.f32.mrf.mxu0
      %v640 = vadd.f32 0.0, %v639
      %641 = vmatmul.f32.gmra.mxu0 %v620
      %v642 = vpop.f32.mrf.mxu0
      %v643 = vadd.f32 0.0, %v642
      %644 = vdwg.mxu0
      %645 = vrot.lane.b32.xlu0 %v170, 48
      %v646 = vpop.permute.xlu0 %645
      %647 = vrot.lane.b32.xlu0 %v171, 48
      %v648 = vpop.permute.xlu0 %647
      %649 = vrot.lane.b32.xlu0 %v166, 48
      %v650 = vpop.permute.xlu0 %649
      %651 = vrot.lane.b32.xlu0 %v167, 48
      %v652 = vpop.permute.xlu0 %651
      %v653 = vsel %vm172, %v646, 0
      %v655 = vsel %vm172, %v648, 0
      %v657 = vsel %vm172, %v650, 0
      %v659 = vsel %vm172, %v652, 0
      %661 = vmatpush.xpose.msra.mxu0 0.0
      %662 = vmatpush.xpose.msra.mxu0 0.0
      %663 = vmatpush.xpose.msra.mxu0 0.0
      %664 = vmatpush.xpose.msra.mxu0 0.0
      %665 = vmatpush.xpose.msra.mxu0 0.0
      %666 = vmatpush.xpose.msra.mxu0 0.0
      %667 = vmatpush.xpose.msra.mxu0 0.0
      %668 = vmatpush.xpose.msra.mxu0 0.0
      %669 = vmatpush.xpose.msra.mxu0 0.0
      %670 = vmatpush.xpose.msra.mxu0 0.0
      %671 = vmatpush.xpose.msra.mxu0 0.0
      %672 = vmatpush.xpose.msra.mxu0 0.0
      %673 = vmatpush.xpose.msra.mxu0 0.0
      %674 = vmatpush.xpose.msra.mxu0 0.0
      %675 = vmatpush.xpose.msra.mxu0 %v659
      %676 = vmatpush.xpose.msra.mxu0 %v657
      %677 = vmatmul.f32.gmra.mxu0 %v653
      %v678 = vpop.f32.mrf.mxu0
      %v679 = vadd.f32 0.0, %v678
      %680 = vmatmul.f32.gmra.mxu0 %v655
      %v681 = vpop.f32.mrf.mxu0
      %v682 = vadd.f32 0.0, %v681
      %683 = vdwg.mxu0
      %v684 = vsel %vm172, %v679, -inf
      %685 = vmax.xlane.f32.xlu0 %v684
      %v686 = vpop.xlane.xlu0 %685
      %v687 = vsel %vm172, %v682, -inf
      %688 = vmax.xlane.f32.xlu0 %v687
      %v689 = vpop.xlane.xlu0 %688
      %v690 = vsub.f32 %v679, %v686
      %v691 = vsub.f32 %v682, %v689
      %v692 = vmul.f32 %v690, 1.442695
      %v693 = vpow.pop %v692
      %v694 = vmul.f32 %v691, 1.442695
      %v695 = vpow.pop %v694
      %v696 = vsel %vm172, %v693, 0.0
      %697 = vadd.xlane.f32.xlu0 %v696
      %v698 = vpop.xlane.xlu0 %697
      %v699 = vsel %vm172, %v695, 0.0
      %700 = vadd.xlane.f32.xlu0 %v699
      %v701 = vpop.xlane.xlu0 %700
      %v702 = vrcp.pop %v698
      %v703 = vrcp.pop %v701
      %v704 = vmul.f32 %v693, %v702
      %v705 = vmul.f32 %v695, %v703
      %706 = vrot.lane.b32.xlu0 %v168, 48
      %v707 = vpop.permute.xlu0 %706
      %708 = vrot.lane.b32.xlu0 %v169, 48
      %v709 = vpop.permute.xlu0 %708
      %v713 = vsel %vm172, %v704, 0
      %v716 = vsel %vm172, %v705, 0
      %718 = vmatpush.msra.mxu0 0.0
      %719 = vmatpush.msra.mxu0 0.0
      %720 = vmatpush.msra.mxu0 0.0
      %721 = vmatpush.msra.mxu0 0.0
      %722 = vmatpush.msra.mxu0 0.0
      %723 = vmatpush.msra.mxu0 0.0
      %724 = vmatpush.msra.mxu0 0.0
      %725 = vmatpush.msra.mxu0 0.0
      %726 = vmatpush.msra.mxu0 0.0
      %727 = vmatpush.msra.mxu0 0.0
      %728 = vmatpush.msra.mxu0 0.0
      %729 = vmatpush.msra.mxu0 0.0
      %730 = vmatpush.msra.mxu0 0.0
      %731 = vmatpush.msra.mxu0 0.0
      %732 = vmatpush.msra.mxu0 %v709
      %733 = vmatpush.msra.mxu0 %v707
      %734 = vmatmul.f32.gmra.mxu0 %v713
      %v735 = vpop.f32.mrf.mxu0
      %v736 = vadd.f32 0.0, %v735
      %737 = vmatmul.f32.gmra.mxu0 %v716
      %v738 = vpop.f32.mrf.mxu0
      %v739 = vadd.f32 0.0, %v738
      %740 = vdwg.mxu0
      %741 = vrot.lane.b32.xlu0 %v170, 32
      %v742 = vpop.permute.xlu0 %741
      %743 = vrot.lane.b32.xlu0 %v171, 32
      %v744 = vpop.permute.xlu0 %743
      %745 = vrot.lane.b32.xlu0 %v166, 32
      %v746 = vpop.permute.xlu0 %745
      %747 = vrot.lane.b32.xlu0 %v167, 32
      %v748 = vpop.permute.xlu0 %747
      %v749 = vsel %vm172, %v742, 0
      %v751 = vsel %vm172, %v744, 0
      %v753 = vsel %vm172, %v746, 0
      %v755 = vsel %vm172, %v748, 0
      %757 = vmatpush.xpose.msra.mxu0 0.0
      %758 = vmatpush.xpose.msra.mxu0 0.0
      %759 = vmatpush.xpose.msra.mxu0 0.0
      %760 = vmatpush.xpose.msra.mxu0 0.0
      %761 = vmatpush.xpose.msra.mxu0 0.0
      %762 = vmatpush.xpose.msra.mxu0 0.0
      %763 = vmatpush.xpose.msra.mxu0 0.0
      %764 = vmatpush.xpose.msra.mxu0 0.0
      %765 = vmatpush.xpose.msra.mxu0 0.0
      %766 = vmatpush.xpose.msra.mxu0 0.0
      %767 = vmatpush.xpose.msra.mxu0 0.0
      %768 = vmatpush.xpose.msra.mxu0 0.0
      %769 = vmatpush.xpose.msra.mxu0 0.0
      %770 = vmatpush.xpose.msra.mxu0 0.0
      %771 = vmatpush.xpose.msra.mxu0 %v755
      %772 = vmatpush.xpose.msra.mxu0 %v753
      %773 = vmatmul.f32.gmra.mxu0 %v749
      %v774 = vpop.f32.mrf.mxu0
      %v775 = vadd.f32 0.0, %v774
      %776 = vmatmul.f32.gmra.mxu0 %v751
      %v777 = vpop.f32.mrf.mxu0
      %v778 = vadd.f32 0.0, %v777
      %779 = vdwg.mxu0
      %v780 = vsel %vm172, %v775, -inf
      %781 = vmax.xlane.f32.xlu0 %v780
      %v782 = vpop.xlane.xlu0 %781
      %v783 = vsel %vm172, %v778, -inf
      %784 = vmax.xlane.f32.xlu0 %v783
      %v785 = vpop.xlane.xlu0 %784
      %v786 = vsub.f32 %v775, %v782
      %v787 = vsub.f32 %v778, %v785
      %v788 = vmul.f32 %v786, 1.442695
      %v789 = vpow.pop %v788
      %v790 = vmul.f32 %v787, 1.442695
      %v791 = vpow.pop %v790
      %v792 = vsel %vm172, %v789, 0.0
      %793 = vadd.xlane.f32.xlu0 %v792
      %v794 = vpop.xlane.xlu0 %793
      %v795 = vsel %vm172, %v791, 0.0
      %796 = vadd.xlane.f32.xlu0 %v795
      %v797 = vpop.xlane.xlu0 %796
      %v798 = vrcp.pop %v794
      %v799 = vrcp.pop %v797
      %v800 = vmul.f32 %v789, %v798
      %v801 = vmul.f32 %v791, %v799
      %802 = vrot.lane.b32.xlu0 %v168, 32
      %v803 = vpop.permute.xlu0 %802
      %804 = vrot.lane.b32.xlu0 %v169, 32
      %v805 = vpop.permute.xlu0 %804
      %v809 = vsel %vm172, %v800, 0
      %v812 = vsel %vm172, %v801, 0
      %814 = vmatpush.msra.mxu0 0.0
      %815 = vmatpush.msra.mxu0 0.0
      %816 = vmatpush.msra.mxu0 0.0
      %817 = vmatpush.msra.mxu0 0.0
      %818 = vmatpush.msra.mxu0 0.0
      %819 = vmatpush.msra.mxu0 0.0
      %820 = vmatpush.msra.mxu0 0.0
      %821 = vmatpush.msra.mxu0 0.0
      %822 = vmatpush.msra.mxu0 0.0
      %823 = vmatpush.msra.mxu0 0.0
      %824 = vmatpush.msra.mxu0 0.0
      %825 = vmatpush.msra.mxu0 0.0
      %826 = vmatpush.msra.mxu0 0.0
      %827 = vmatpush.msra.mxu0 0.0
      %828 = vmatpush.msra.mxu0 %v805
      %829 = vmatpush.msra.mxu0 %v803
      %830 = vmatmul.f32.gmra.mxu0 %v809
      %v831 = vpop.f32.mrf.mxu0
      %v832 = vadd.f32 0.0, %v831
      %833 = vmatmul.f32.gmra.mxu0 %v812
      %v834 = vpop.f32.mrf.mxu0
      %v835 = vadd.f32 0.0, %v834
      %836 = vdwg.mxu0
      %837 = vrot.lane.b32.xlu0 %v170, 16
      %v838 = vpop.permute.xlu0 %837
      %839 = vrot.lane.b32.xlu0 %v171, 16
      %v840 = vpop.permute.xlu0 %839
      %841 = vrot.lane.b32.xlu0 %v166, 16
      %v842 = vpop.permute.xlu0 %841
      %843 = vrot.lane.b32.xlu0 %v167, 16
      %v844 = vpop.permute.xlu0 %843
      %v845 = vsel %vm172, %v838, 0
      %v847 = vsel %vm172, %v840, 0
      %v849 = vsel %vm172, %v842, 0
      %v851 = vsel %vm172, %v844, 0
      %853 = vmatpush.xpose.msra.mxu0 0.0
      %854 = vmatpush.xpose.msra.mxu0 0.0
      %855 = vmatpush.xpose.msra.mxu0 0.0
      %856 = vmatpush.xpose.msra.mxu0 0.0
      %857 = vmatpush.xpose.msra.mxu0 0.0
      %858 = vmatpush.xpose.msra.mxu0 0.0
      %859 = vmatpush.xpose.msra.mxu0 0.0
      %860 = vmatpush.xpose.msra.mxu0 0.0
      %861 = vmatpush.xpose.msra.mxu0 0.0
      %862 = vmatpush.xpose.msra.mxu0 0.0
      %863 = vmatpush.xpose.msra.mxu0 0.0
      %864 = vmatpush.xpose.msra.mxu0 0.0
      %865 = vmatpush.xpose.msra.mxu0 0.0
      %866 = vmatpush.xpose.msra.mxu0 0.0
      %867 = vmatpush.xpose.msra.mxu0 %v851
      %868 = vmatpush.xpose.msra.mxu0 %v849
      %869 = vmatmul.f32.gmra.mxu0 %v845
      %v870 = vpop.f32.mrf.mxu0
      %v871 = vadd.f32 0.0, %v870
      %872 = vmatmul.f32.gmra.mxu0 %v847
      %v873 = vpop.f32.mrf.mxu0
      %v874 = vadd.f32 0.0, %v873
      %875 = vdwg.mxu0
      %v876 = vsel %vm172, %v871, -inf
      %877 = vmax.xlane.f32.xlu0 %v876
      %v878 = vpop.xlane.xlu0 %877
      %v879 = vsel %vm172, %v874, -inf
      %880 = vmax.xlane.f32.xlu0 %v879
      %v881 = vpop.xlane.xlu0 %880
      %v882 = vsub.f32 %v871, %v878
      %v883 = vsub.f32 %v874, %v881
      %v884 = vmul.f32 %v882, 1.442695
      %v885 = vpow.pop %v884
      %v886 = vmul.f32 %v883, 1.442695
      %v887 = vpow.pop %v886
      %v888 = vsel %vm172, %v885, 0.0
      %889 = vadd.xlane.f32.xlu0 %v888
      %v890 = vpop.xlane.xlu0 %889
      %v891 = vsel %vm172, %v887, 0.0
      %892 = vadd.xlane.f32.xlu0 %v891
      %v893 = vpop.xlane.xlu0 %892
      %v894 = vrcp.pop %v890
      %v895 = vrcp.pop %v893
      %v896 = vmul.f32 %v885, %v894
      %v897 = vmul.f32 %v887, %v895
      %898 = vrot.lane.b32.xlu0 %v168, 16
      %v899 = vpop.permute.xlu0 %898
      %900 = vrot.lane.b32.xlu0 %v169, 16
      %v901 = vpop.permute.xlu0 %900
      %v905 = vsel %vm172, %v896, 0
      %v908 = vsel %vm172, %v897, 0
      %910 = vmatpush.msra.mxu0 0.0
      %911 = vmatpush.msra.mxu0 0.0
      %912 = vmatpush.msra.mxu0 0.0
      %913 = vmatpush.msra.mxu0 0.0
      %914 = vmatpush.msra.mxu0 0.0
      %915 = vmatpush.msra.mxu0 0.0
      %916 = vmatpush.msra.mxu0 0.0
      %917 = vmatpush.msra.mxu0 0.0
      %918 = vmatpush.msra.mxu0 0.0
      %919 = vmatpush.msra.mxu0 0.0
      %920 = vmatpush.msra.mxu0 0.0
      %921 = vmatpush.msra.mxu0 0.0
      %922 = vmatpush.msra.mxu0 0.0
      %923 = vmatpush.msra.mxu0 0.0
      %924 = vmatpush.msra.mxu0 %v901
      %925 = vmatpush.msra.mxu0 %v899
      %926 = vmatmul.f32.gmra.mxu0 %v905
      %v927 = vpop.f32.mrf.mxu0
      %v928 = vadd.f32 0.0, %v927
      %929 = vmatmul.f32.gmra.mxu0 %v908
      %v930 = vpop.f32.mrf.mxu0
      %v931 = vadd.f32 0.0, %v930
      %932 = vdwg.mxu0
      %935 = vrot.lane.b32.xlu0 %v352, 16
      %v936 = vpop.permute.xlu0 %935
      %937 = vrot.lane.b32.xlu0 %v355, 16
      %v938 = vpop.permute.xlu0 %937
      %943 = vrot.lane.b32.xlu0 %v448, 32
      %v944 = vpop.permute.xlu0 %943
      %945 = vrot.lane.b32.xlu0 %v451, 32
      %v946 = vpop.permute.xlu0 %945
      %951 = vrot.lane.b32.xlu0 %v544, 48
      %v952 = vpop.permute.xlu0 %951
      %953 = vrot.lane.b32.xlu0 %v547, 48
      %v954 = vpop.permute.xlu0 %953
      %959 = vrot.lane.b32.xlu0 %v640, 64
      %v960 = vpop.permute.xlu0 %959
      %961 = vrot.lane.b32.xlu0 %v643, 64
      %v962 = vpop.permute.xlu0 %961
      %967 = vrot.lane.b32.xlu0 %v736, 80
      %v968 = vpop.permute.xlu0 %967
      %969 = vrot.lane.b32.xlu0 %v739, 80
      %v970 = vpop.permute.xlu0 %969
      %975 = vrot.lane.b32.xlu0 %v832, 96
      %v976 = vpop.permute.xlu0 %975
      %977 = vrot.lane.b32.xlu0 %v835, 96
      %v978 = vpop.permute.xlu0 %977
      %983 = vrot.lane.b32.xlu0 %v928, 112
      %v984 = vpop.permute.xlu0 %983
      %985 = vrot.lane.b32.xlu0 %v931, 112
      %v986 = vpop.permute.xlu0 %985
      %v989 = vsel %vm172, %v254, %v936
      %v990 = vsel %vm172, %v257, %v938
      %vm991 = vcmask 261120
      %v992 = vsel %vm991, %v989, %v944
      %v993 = vsel %vm991, %v990, %v946
      %vm994 = vcmask 392192
      %v995 = vsel %vm994, %v992, %v952
      %v996 = vsel %vm994, %v993, %v954
      %vm997 = vcmask 523264
      %v998 = vsel %vm997, %v995, %v960
      %v999 = vsel %vm997, %v996, %v962
      %vm1000 = vcmask 654336
      %v1001 = vsel %vm1000, %v998, %v968
      %v1002 = vsel %vm1000, %v999, %v970
      %vm1003 = vcmask 785408
      %v1004 = vsel %vm1003, %v1001, %v976
      %v1005 = vsel %vm1003, %v1002, %v978
      %vm1006 = vcmask 916480
      %v1007 = vsel %vm1006, %v1004, %v984
      %v1008 = vsel %vm1006, %v1005, %v986
      %1009 = vst [vmem:[%s163] sm:$0xff] %v1007
      %1010 = vst [vmem:[%s163 + $0x8] sm:$0xff] %v1008
      %p1011 = scmp.lt.s32.totalorder %s13, 1
      %s1012 = scalar_select %p1011, %s13, 1
      %s1013 = smul.addr %s1012, 2
      %s1014 = smul.addr %s1013, 8
      %s1015 = scalar_lea.vmem %s2, %s1014
      // Predicated region
      $region29: #{transformer_forward.54} parent=27 // pred_check
        %p1016 = pneg %p83
      $region30: #{transformer_forward.54} parent=27 // pred_check_branch
        %1018 = sbr.rel (%p1016) target = $region32
      $region31: #{transformer_forward.54} parent=27 // pred_region
        _
      $region32: #{transformer_forward.54} parent=27 // pred_fallthru
        _
    $region28: #{transformer_forward.54} parent=5 // pred_fallthru
      _
    %p1019 = scmp.le.s32.totalorder 2, %s8
    // Predicated region
    $region33: #{transformer_forward.54} parent=5 // pred_check
      %p1020 = pneg %p1019
    $region34: #{transformer_forward.54} parent=5 // pred_check_branch
      %1022 = sbr.rel (%p1020) target = $region36
    $region35: #{transformer_forward.54} parent=5 // pred_region
      %s1023 = ssub.s32 %s8, 2
      // Predicated region
      $region37: #{transformer_forward.54} parent=35 // pred_check
        %p1024 = pneg %p89
      $region38: #{transformer_forward.54} parent=35 // pred_check_branch
        %1026 = sbr.rel (%p1024) target = $region40
      $region39: #{transformer_forward.54} parent=35 // pred_region
        %p1027 = scmp.lt.s32.totalorder %s14, 1
        %s1028 = scalar_select %p1027, %s14, 1
        %s1029 = smul.addr %s1028, 2
        %s1030 = smul.addr %s1029, 8
        %s1031 = scalar_lea.vmem %s2, %s1030
      $region40: #{transformer_forward.54} parent=35 // pred_fallthru
        _
    $region36: #{transformer_forward.54} parent=5 // pred_fallthru
      _
  $region6: #{transformer_forward.54} parent=0 // loop_footer
    %s12 = sadd.s32 1, %s8
  $region7: #{transformer_forward.54} parent=0 // loop_footer_branch
    %7 = sbr.rel target = $region3
  $region8: #{transformer_forward.54} parent=0 // loop_exit
    _

</llo_original>
